<compile_context>
chip_gen: v5e
topology: v5e:2x2
jax: 0.10.0
libtpu: 0.0.40
codegen_flags: <defaults>
</compile_context>

<pallas_src>
import functools

import jax
import jax.numpy as jnp
from jax import lax
from jax.experimental import pallas as pl
from jax.experimental.pallas import tpu as pltpu

NEG_SLOPE = 0.01      # F.leaky_relu default
PH = 3                # x1 scratch halo rows (max dilation)
PWL, PWR = 16, 3      # x1 scratch left/right col pad (left is bf16-tile aligned)


# ----------------------------------------------------------------------------
# Fused kernel: one batch element per grid step
# ----------------------------------------------------------------------------
def _decoder_fused_kernel(xp_ref, xres_ref, w1_ref, b1_ref, wcat_ref, bcat_ref,
                          wca1_ref, wca2_ref, w6_ref, b6_ref, o_ref, x1p_ref,
                          *, H, W, neg_slope):
    """xp_ref  : (1, H+2, W+2, C)  bf16  input padded by 1 (conv1 operand)
       xres_ref: (1, H*W, C)       f32   un-padded x for the residual
       w1_ref  : (9*C, C2)         bf16  conv1 weight, im2col-flattened
       wcat_ref: (28*C2, C)        bf16  block-placed branch weights
                                         (K blocks: dil3, dil2, dil1, 1x1;
                                          col blocks: cat order [x3,x2,x4,x5])
       bcat_ref: (1, C)            f32   concat of branch biases (cat order)
       wca1/wca2: (C, C4)/(C4, C)  f32   channel-attention MLP (no bias)
       w6/b6   : (C, C2p)/(1, C2p) bf16/f32  final 1x1 conv, zero-padded to C2p
       o_ref   : (1, H*W, C2p)     f32   lane-dense output (cols >= C2 are junk)
       x1p_ref : VMEM (H+6, W+PWL+PWR, C2) bf16  persistent x1 halo scratch
    """
    C = xp_ref.shape[-1]
    C2 = w1_ref.shape[-1]
    HW = H * W

    def lrelu(v):
        return jnp.where(v >= 0.0, v, v * neg_slope)

    def im2col(img, dil, r_base, c_base):
        """Zero-padded (Hi, Wi, Ci) image, x-origin at (r_base, c_base)
           -> (H*W, 9*Ci) patch matrix (tap-major, channel-minor)."""
        Ci = img.shape[-1]
        cols = []
        for kh in range(3):
            for kw in range(3):
                r0 = r_base + (kh - 1) * dil
                c0 = c_base + (kw - 1) * dil
                cols.append(img[r0:r0 + H, c0:c0 + W, :].reshape(HW, Ci))
        return jnp.concatenate(cols, axis=-1)

    # ---- conv1 (3x3, dil=1) + leaky_relu: one im2col matmul, K = 9*C --------
    x1 = lrelu(jnp.dot(im2col(xp_ref[0], 1, 1, 1), w1_ref[...],
                       preferred_element_type=jnp.float32) + b1_ref[...])
    x1b = x1.astype(jnp.bfloat16)

    # ---- refresh the x1 halo scratch ---------------------------------------
    # Only the thin halo strips are zeroed (O(perimeter)); the interior is
    # fully overwritten below.  Per-step re-zero of the strips keeps this
    # correct even if the batch axis is sharded across megacore TensorCores.
    W2P = W + PWL + PWR
    zf = lambda shp: jnp.zeros(shp, x1p_ref.dtype)
    x1p_ref[pl.ds(0, PH), :, :] = zf((PH, W2P, C2))            # top rows
    x1p_ref[pl.ds(PH + H, PH), :, :] = zf((PH, W2P, C2))       # bottom rows
    x1p_ref[pl.ds(PH, H), pl.ds(0, PWL), :] = zf((H, PWL, C2))         # left
    x1p_ref[pl.ds(PH, H), pl.ds(PWL + W, PWR), :] = zf((H, PWR, C2))   # right
    # interior write: W offset PWL=16 is bf16-sublane-tile aligned
    x1p_ref[pl.ds(PH, H), pl.ds(PWL, W), :] = x1b.reshape(H, W, C2)
    x1p = x1p_ref[...]                                         # (H+6, W2P, C2)

    # ---- four branches as ONE MXU pass (K = 27*C2 + C2 = 28*C2) ------------
    # Column layout of wcat equals torch.cat([x3, x2, x4, x5], dim=1), so a
    # single bias add + leaky_relu on the shared result is exact.
    patches = jnp.concatenate(
        [im2col(x1p, 3, PH, PWL),     # conv3 (dil=3)
         im2col(x1p, 2, PH, PWL),     # conv2 (dil=2)
         im2col(x1p, 1, PH, PWL),     # conv4 (dil=1)
         x1b],                        # conv5 (1x1)
        axis=-1)                                               # (HW, 28*C2) bf16
    cat = lrelu(jnp.dot(patches, wcat_ref[...],
                        preferred_element_type=jnp.float32) + bcat_ref[...])

    # ---- channel attention (GAP -> fc1 -> relu -> fc2 -> sigmoid), f32 ------
    mean = jnp.sum(cat, axis=0, keepdims=True) * (1.0 / float(HW))   # (1, C)
    y = jnp.maximum(jnp.dot(mean, wca1_ref[...],
                            preferred_element_type=jnp.float32), 0.0)
    y = jax.nn.sigmoid(jnp.dot(y, wca2_ref[...],
                               preferred_element_type=jnp.float32))  # (1, C)

    # ---- residual add + final 1x1 conv (output columns padded to C2p) ------
    x6 = xres_ref[0] + cat * y                                 # (HW, C) f32
    x7 = jnp.dot(x6.astype(jnp.bfloat16), w6_ref[...],
                 preferred_element_type=jnp.float32) + b6_ref[...]   # (HW, C2p)
    o_ref[...] = x7.reshape(1, HW, o_ref.shape[-1])            # dense 128-lane store


# ----------------------------------------------------------------------------
# Decoder forward (public wrapper, NCHW in / NCHW out)
# ----------------------------------------------------------------------------
def decoder_forward(x_nchw, params):
    x = jnp.transpose(x_nchw, (0, 2, 3, 1)).astype(jnp.float32)   # -> NHWC
    N, H, W, C = x.shape
    C2, C4 = C // 2, C // 4
    C2p = ((C2 + 127) // 128) * 128       # lane-dense output width
    HW = H * W
    K2 = 9 * C2

    # -- one-time weight repacking (tiny; done per call under jit) ------------
    def flat3x3(w):                       # HWIO (3,3,Ci,Co) -> (9*Ci, Co)
        return w.reshape(9 * w.shape[2], w.shape[3])

    w1b = flat3x3(params["w1"]).astype(jnp.bfloat16)
    b1r = params["b1"].reshape(1, C2)

    # Combined branch weight: K blocks [dil3 | dil2 | dil1 | 1x1],
    # column blocks in cat order [x3, x2, x4, x5].
    wcat = jnp.zeros((28 * C2, C), jnp.float32)
    wcat = wcat.at[0 * K2:1 * K2, 0 * C4:1 * C4].set(flat3x3(params["w3"]))
    wcat = wcat.at[1 * K2:2 * K2, 1 * C4:2 * C4].set(flat3x3(params["w2"]))
    wcat = wcat.at[2 * K2:3 * K2, 2 * C4:3 * C4].set(flat3x3(params["w4"]))
    wcat = wcat.at[3 * K2:3 * K2 + C2, 3 * C4:4 * C4].set(params["w5"])
    wcatb = wcat.astype(jnp.bfloat16)
    bcat = jnp.concatenate(
        [params["b3"], params["b2"], params["b4"], params["b5"]]).reshape(1, C)

    # Final 1x1 conv, zero-padded to C2p output columns (lane-dense store).
    w6p = jnp.zeros((C, C2p), jnp.float32).at[:, :C2].set(params["w6"])
    w6b = w6p.astype(jnp.bfloat16)
    b6r = jnp.zeros((1, C2p), jnp.float32).at[:, :C2].set(
        params["b6"].reshape(1, C2))

    # Inputs: padded bf16 copy for conv1, flat f32 copy for the residual.
    xp = jnp.pad(x, ((0, 0), (1, 1), (1, 1), (0, 0))).astype(jnp.bfloat16)
    xres = x.reshape(N, HW, C)
    Hp, Wp = H + 2, W + 2

    kernel = functools.partial(_decoder_fused_kernel, H=H, W=W,
                               neg_slope=NEG_SLOPE)

    flops = 2 * N * HW * (9 * C * C2 + 28 * C2 * C + C * C2p) + 4 * N * C * C4
    bytes_accessed = (
        2 * (N * Hp * Wp * C + 9 * C * C2 + 28 * C2 * C + C * C2p)       # bf16
        + 4 * (N * HW * C + N * HW * C2p + 2 * C * C4 + C + C2 + C2p))   # f32

    out = pl.pallas_call(
        kernel,
        out_shape=jax.ShapeDtypeStruct((N, HW, C2p), jnp.float32),
        grid=(N,),
        in_specs=[
            pl.BlockSpec((1, Hp, Wp, C), lambda n: (n, 0, 0, 0)),   # xp (bf16)
            pl.BlockSpec((1, HW, C), lambda n: (n, 0, 0)),          # xres (f32)
            pl.BlockSpec((9 * C, C2), lambda n: (0, 0)),            # w1
            pl.BlockSpec((1, C2), lambda n: (0, 0)),                # b1
            pl.BlockSpec((28 * C2, C), lambda n: (0, 0)),           # wcat
            pl.BlockSpec((1, C), lambda n: (0, 0)),                 # bcat
            pl.BlockSpec((C, C4), lambda n: (0, 0)),                # wca1
            pl.BlockSpec((C4, C), lambda n: (0, 0)),                # wca2
            pl.BlockSpec((C, C2p), lambda n: (0, 0)),               # w6 (padded)
            pl.BlockSpec((1, C2p), lambda n: (0, 0)),               # b6 (padded)
        ],
        out_specs=pl.BlockSpec((1, HW, C2p), lambda n: (n, 0, 0)),
        scratch_shapes=[pltpu.VMEM((H + 2 * PH, W + PWL + PWR, C2),
                                   jnp.bfloat16)],
        compiler_params=pltpu.CompilerParams(
            dimension_semantics=("parallel",),
            vmem_limit_bytes=32 * 1024 * 1024),
        cost_estimate=pl.CostEstimate(
            flops=flops, transcendentals=N * C,
            bytes_accessed=bytes_accessed),
    )(xp, xres, w1b, b1r, wcatb, bcat,
      params["wca1"], params["wca2"], w6b, b6r)

    out = out[:, :, :C2].reshape(N, H, W, C2)
    return jnp.transpose(out, (0, 3, 1, 2))                        # -> NCHW


# ----------------------------------------------------------------------------
# Parameter init (deterministic; PyTorch OIHW weights, converted for NHWC use)
# ----------------------------------------------------------------------------
def init_params(key, in_channels):
    C = in_channels
    C2, C4 = C // 2, C // 4
    ks = jax.random.split(key, 14)

    def conv_w(k, o, i, kh, kw):
        fan_in = i * kh * kw
        return (jax.random.normal(k, (o, i, kh, kw), jnp.float32)
                * (1.0 / jnp.sqrt(fan_in)))

    def conv_b(k, o, fan_in):
        lim = 1.0 / jnp.sqrt(fan_in)
        return jax.random.uniform(k, (o,), jnp.float32, -lim, lim)

    def to_hwio(w):                      # OIHW -> HWIO
        return jnp.transpose(w, (2, 3, 1, 0))

    def to_mat(w):                       # OIHW 1x1 -> (Cin, Cout)
        return jnp.transpose(w[:, :, 0, 0], (1, 0))

    w1 = conv_w(ks[0], C2, C, 3, 3);  b1 = conv_b(ks[1], C2, C * 9)
    w2 = conv_w(ks[2], C4, C2, 3, 3); b2 = conv_b(ks[3], C4, C2 * 9)
    w3 = conv_w(ks[4], C4, C2, 3, 3); b3 = conv_b(ks[5], C4, C2 * 9)
    w4 = conv_w(ks[6], C4, C2, 3, 3); b4 = conv_b(ks[7], C4, C2 * 9)
    w5 = conv_w(ks[8], C4, C2, 1, 1); b5 = conv_b(ks[9], C4, C2)
    w6 = conv_w(ks[10], C2, C, 1, 1); b6 = conv_b(ks[11], C2, C)
    wca1 = conv_w(ks[12], C4, C, 1, 1)   # bias=False
    wca2 = conv_w(ks[13], C, C4, 1, 1)   # bias=False

    return dict(
        w1=to_hwio(w1), b1=b1, w2=to_hwio(w2), b2=b2,
        w3=to_hwio(w3), b3=b3, w4=to_hwio(w4), b4=b4,
        w5=to_mat(w5), b5=b5, w6=to_mat(w6), b6=b6,
        wca1=to_mat(wca1), wca2=to_mat(wca2),
    )


# ----------------------------------------------------------------------------
# Pure-JAX f32 reference (for correctness check)
# ----------------------------------------------------------------------------
def _ref_conv_nhwc(x, w_hwio, b, dilation):
    out = lax.conv_general_dilated(
        x, w_hwio, window_strides=(1, 1),
        padding=[(dilation, dilation), (dilation, dilation)],
        rhs_dilation=(dilation, dilation),
        dimension_numbers=("NHWC", "HWIO", "NHWC"))
    return out + b[None, None, None, :]


def decoder_reference(x_nchw, p):
    x = jnp.transpose(x_nchw, (0, 2, 3, 1)).astype(jnp.float32)
    lr = lambda v: jnp.where(v >= 0, v, v * NEG_SLOPE)
    x1 = lr(_ref_conv_nhwc(x,  p["w1"], p["b1"], 1))
    x2 = lr(_ref_conv_nhwc(x1, p["w2"], p["b2"], 2))
    x3 = lr(_ref_conv_nhwc(x1, p["w3"], p["b3"], 3))
    x4 = lr(_ref_conv_nhwc(x1, p["w4"], p["b4"], 1))
    x5 = lr(jnp.einsum("nhwc,cd->nhwd", x1, p["w5"]) + p["b5"])
    cat = jnp.concatenate([x3, x2, x4, x5], axis=-1)
    mean = jnp.mean(cat, axis=(1, 2), keepdims=True)
    y = jnp.maximum(jnp.einsum("nhwc,cd->nhwd", mean, p["wca1"]), 0.0)
    y = jax.nn.sigmoid(jnp.einsum("nhwc,cd->nhwd", y, p["wca2"]))
    x6 = x + cat * y
    x7 = jnp.einsum("nhwc,cd->nhwd", x6, p["w6"]) + p["b6"]
    return jnp.transpose(x7, (0, 3, 1, 2))


# ----------------------------------------------------------------------------
if __name__ == "__main__":
    key = jax.random.PRNGKey(0)
    k_x, k_p = jax.random.split(key)

    N, C, H, W = 2, 16, 16, 16           # in_channels must be divisible by 4
    x = jax.random.normal(k_x, (N, C, H, W), jnp.float32)
    params = init_params(k_p, C)

    out = jax.block_until_ready(jax.jit(decoder_forward)(x, params))
    assert out.shape == (N, C // 2, H, W), out.shape

    ref = jax.block_until_ready(decoder_reference(x, params))
    # bf16 MXU operands vs f32 reference: expect ~1e-2-scale errors on O(1) data.
    err = jnp.abs(out - ref)
    assert float(jnp.max(err)) < 1.5e-1, float(jnp.max(err))
    assert float(jnp.mean(err)) < 1.5e-2, float(jnp.mean(err))

    print("KERNEL_OK")
</pallas_src>

<mosaic_0001>
module attributes {stable_mosaic.version = 11 : i64} {
  func.func @_decoder_fused_kernel(%arg0: i32, %arg1: memref<1x18x18x16xbf16, #tpu.memory_space<vmem>>, %arg2: memref<1x256x16xf32, #tpu.memory_space<vmem>>, %arg3: memref<144x8xbf16, #tpu.memory_space<vmem>>, %arg4: memref<1x8xf32, #tpu.memory_space<vmem>>, %arg5: memref<224x16xbf16, #tpu.memory_space<vmem>>, %arg6: memref<1x16xf32, #tpu.memory_space<vmem>>, %arg7: memref<16x4xf32, #tpu.memory_space<vmem>>, %arg8: memref<4x16xf32, #tpu.memory_space<vmem>>, %arg9: memref<16x128xbf16, #tpu.memory_space<vmem>>, %arg10: memref<1x128xf32, #tpu.memory_space<vmem>>, %arg11: memref<1x256x128xf32, #tpu.memory_space<vmem>>, %arg12: memref<22x35x8xbf16, #tpu.memory_space<vmem>>) attributes {dimension_semantics = [#tpu.dimension_semantics<parallel>], iteration_bounds = array<i64: 2>, scalar_prefetch = 0 : i64, scratch_operands = 1 : i64, tpu.core_type = #tpu.core_type<tc>, window_params = [{transform_indices = @transform_0, window_bounds = array<i64: 1, 18, 18, 16>}, {transform_indices = @transform_1, window_bounds = array<i64: 1, 256, 16>}, {pipeline_mode = #tpu.pipeline_mode<synchronous>, transform_indices = @transform_2, window_bounds = array<i64: 144, 8>}, {pipeline_mode = #tpu.pipeline_mode<synchronous>, transform_indices = @transform_3, window_bounds = array<i64: 1, 8>}, {pipeline_mode = #tpu.pipeline_mode<synchronous>, transform_indices = @transform_4, window_bounds = array<i64: 224, 16>}, {pipeline_mode = #tpu.pipeline_mode<synchronous>, transform_indices = @transform_5, window_bounds = array<i64: 1, 16>}, {pipeline_mode = #tpu.pipeline_mode<synchronous>, transform_indices = @transform_6, window_bounds = array<i64: 16, 4>}, {pipeline_mode = #tpu.pipeline_mode<synchronous>, transform_indices = @transform_7, window_bounds = array<i64: 4, 16>}, {pipeline_mode = #tpu.pipeline_mode<synchronous>, transform_indices = @transform_8, window_bounds = array<i64: 16, 128>}, {pipeline_mode = #tpu.pipeline_mode<synchronous>, transform_indices = @transform_9, window_bounds = array<i64: 1, 128>}, {transform_indices = @transform_10, window_bounds = array<i64: 1, 256, 128>}]} {
    %c0 = arith.constant 0 : index
    %c0_0 = arith.constant 0 : index
    %c0_1 = arith.constant 0 : index
    %c0_2 = arith.constant 0 : index
    %0 = vector.load %arg1[%c0, %c0_0, %c0_1, %c0_2] : memref<1x18x18x16xbf16, #tpu.memory_space<vmem>>, vector<1x18x18x16xbf16>
    %1 = vector.shape_cast %0 : vector<1x18x18x16xbf16> to vector<18x18x16xbf16>
    %2 = vector.extract_strided_slice %1 {offsets = [0, 0, 0], sizes = [16, 16, 16], strides = [1, 1, 1]} : vector<18x18x16xbf16> to vector<16x16x16xbf16>
    %3 = vector.shape_cast %2 : vector<16x16x16xbf16> to vector<256x16xbf16>
    %4 = vector.extract_strided_slice %1 {offsets = [0, 1, 0], sizes = [16, 16, 16], strides = [1, 1, 1]} : vector<18x18x16xbf16> to vector<16x16x16xbf16>
    %5 = vector.shape_cast %4 : vector<16x16x16xbf16> to vector<256x16xbf16>
    %6 = vector.extract_strided_slice %1 {offsets = [0, 2, 0], sizes = [16, 16, 16], strides = [1, 1, 1]} : vector<18x18x16xbf16> to vector<16x16x16xbf16>
    %7 = vector.shape_cast %6 : vector<16x16x16xbf16> to vector<256x16xbf16>
    %8 = vector.extract_strided_slice %1 {offsets = [1, 0, 0], sizes = [16, 16, 16], strides = [1, 1, 1]} : vector<18x18x16xbf16> to vector<16x16x16xbf16>
    %9 = vector.shape_cast %8 : vector<16x16x16xbf16> to vector<256x16xbf16>
    %10 = vector.extract_strided_slice %1 {offsets = [1, 1, 0], sizes = [16, 16, 16], strides = [1, 1, 1]} : vector<18x18x16xbf16> to vector<16x16x16xbf16>
    %11 = vector.shape_cast %10 : vector<16x16x16xbf16> to vector<256x16xbf16>
    %12 = vector.extract_strided_slice %1 {offsets = [1, 2, 0], sizes = [16, 16, 16], strides = [1, 1, 1]} : vector<18x18x16xbf16> to vector<16x16x16xbf16>
    %13 = vector.shape_cast %12 : vector<16x16x16xbf16> to vector<256x16xbf16>
    %14 = vector.extract_strided_slice %1 {offsets = [2, 0, 0], sizes = [16, 16, 16], strides = [1, 1, 1]} : vector<18x18x16xbf16> to vector<16x16x16xbf16>
    %15 = vector.shape_cast %14 : vector<16x16x16xbf16> to vector<256x16xbf16>
    %16 = vector.extract_strided_slice %1 {offsets = [2, 1, 0], sizes = [16, 16, 16], strides = [1, 1, 1]} : vector<18x18x16xbf16> to vector<16x16x16xbf16>
    %17 = vector.shape_cast %16 : vector<16x16x16xbf16> to vector<256x16xbf16>
    %18 = vector.extract_strided_slice %1 {offsets = [2, 2, 0], sizes = [16, 16, 16], strides = [1, 1, 1]} : vector<18x18x16xbf16> to vector<16x16x16xbf16>
    %19 = vector.shape_cast %18 : vector<16x16x16xbf16> to vector<256x16xbf16>
    %20 = tpu.concatenate %3, %5, %7, %9, %11, %13, %15, %17, %19 in 1 : vector<256x16xbf16>, vector<256x16xbf16>, vector<256x16xbf16>, vector<256x16xbf16>, vector<256x16xbf16>, vector<256x16xbf16>, vector<256x16xbf16>, vector<256x16xbf16>, vector<256x16xbf16> -> vector<256x144xbf16>
    %c0_3 = arith.constant 0 : index
    %c0_4 = arith.constant 0 : index
    %21 = vector.load %arg3[%c0_3, %c0_4] : memref<144x8xbf16, #tpu.memory_space<vmem>>, vector<144x8xbf16>
    %cst = arith.constant dense<0.000000e+00> : vector<256x8xf32>
    %22 = tpu.matmul %20, %21, %cst {dimension_numbers = #tpu.dot_dimension_numbers<[1], [0], [0], [1], [0, 0, 1, 1], [], []>} : vector<256x144xbf16>, vector<144x8xbf16>, vector<256x8xf32> -> vector<256x8xf32>
    %c0_5 = arith.constant 0 : index
    %c0_6 = arith.constant 0 : index
    %23 = vector.load %arg4[%c0_5, %c0_6] : memref<1x8xf32, #tpu.memory_space<vmem>>, vector<1x8xf32>
    %24 = vector.broadcast %23 : vector<1x8xf32> to vector<256x8xf32>
    %25 = arith.addf %22, %24 : vector<256x8xf32>
    %cst_7 = arith.constant 0.000000e+00 : f32
    %26 = vector.broadcast %cst_7 : f32 to vector<256x8xf32>
    %27 = arith.cmpf oge, %25, %26 : vector<256x8xf32>
    %cst_8 = arith.constant 0.00999999977 : f32
    %28 = vector.broadcast %cst_8 : f32 to vector<256x8xf32>
    %29 = arith.mulf %25, %28 : vector<256x8xf32>
    %30 = arith.select %27, %25, %29 : vector<256x8xi1>, vector<256x8xf32>
    %31 = arith.truncf %30 : vector<256x8xf32> to vector<256x8xbf16>
    %cst_9 = arith.constant 0.000000e+00 : bf16
    %32 = vector.broadcast %cst_9 : bf16 to vector<3x35x8xbf16>
    %c0_10 = arith.constant 0 : index
    %c0_11 = arith.constant 0 : index
    %c0_12 = arith.constant 0 : index
    %33 = vector.load %arg12[%c0_10, %c0_11, %c0_12] : memref<22x35x8xbf16, #tpu.memory_space<vmem>>, vector<3x35x8xbf16>
    tpu.vector_store %arg12[%c0_10, %c0_11, %c0_12], %32 {strides = array<i32>} : memref<22x35x8xbf16, #tpu.memory_space<vmem>>, vector<3x35x8xbf16>,
    %cst_13 = arith.constant 0.000000e+00 : bf16
    %34 = vector.broadcast %cst_13 : bf16 to vector<3x35x8xbf16>
    %c19 = arith.constant 19 : index
    %c0_14 = arith.constant 0 : index
    %c0_15 = arith.constant 0 : index
    %35 = vector.load %arg12[%c19, %c0_14, %c0_15] : memref<22x35x8xbf16, #tpu.memory_space<vmem>>, vector<3x35x8xbf16>
    tpu.vector_store %arg12[%c19, %c0_14, %c0_15], %34 {strides = array<i32>} : memref<22x35x8xbf16, #tpu.memory_space<vmem>>, vector<3x35x8xbf16>,
    %cst_16 = arith.constant 0.000000e+00 : bf16
    %36 = vector.broadcast %cst_16 : bf16 to vector<16x16x8xbf16>
    %c3 = arith.constant 3 : index
    %c0_17 = arith.constant 0 : index
    %c0_18 = arith.constant 0 : index
    %37 = vector.load %arg12[%c3, %c0_17, %c0_18] : memref<22x35x8xbf16, #tpu.memory_space<vmem>>, vector<16x16x8xbf16>
    tpu.vector_store %arg12[%c3, %c0_17, %c0_18], %36 {strides = array<i32>} : memref<22x35x8xbf16, #tpu.memory_space<vmem>>, vector<16x16x8xbf16>,
    %cst_19 = arith.constant 0.000000e+00 : bf16
    %38 = vector.broadcast %cst_19 : bf16 to vector<16x3x8xbf16>
    %c3_20 = arith.constant 3 : index
    %c32 = arith.constant 32 : index
    %c0_21 = arith.constant 0 : index
    %39 = vector.load %arg12[%c3_20, %c32, %c0_21] : memref<22x35x8xbf16, #tpu.memory_space<vmem>>, vector<16x3x8xbf16>
    tpu.vector_store %arg12[%c3_20, %c32, %c0_21], %38 {strides = array<i32>} : memref<22x35x8xbf16, #tpu.memory_space<vmem>>, vector<16x3x8xbf16>,
    %40 = vector.shape_cast %31 : vector<256x8xbf16> to vector<16x16x8xbf16>
    %c3_22 = arith.constant 3 : index
    %c16 = arith.constant 16 : index
    %c0_23 = arith.constant 0 : index
    %41 = vector.load %arg12[%c3_22, %c16, %c0_23] : memref<22x35x8xbf16, #tpu.memory_space<vmem>>, vector<16x16x8xbf16>
    tpu.vector_store %arg12[%c3_22, %c16, %c0_23], %40 {strides = array<i32>} : memref<22x35x8xbf16, #tpu.memory_space<vmem>>, vector<16x16x8xbf16>,
    %c0_24 = arith.constant 0 : index
    %c0_25 = arith.constant 0 : index
    %c0_26 = arith.constant 0 : index
    %42 = vector.load %arg12[%c0_24, %c0_25, %c0_26] : memref<22x35x8xbf16, #tpu.memory_space<vmem>>, vector<22x35x8xbf16>
    %43 = vector.extract_strided_slice %42 {offsets = [0, 13, 0], sizes = [16, 16, 8], strides = [1, 1, 1]} : vector<22x35x8xbf16> to vector<16x16x8xbf16>
    %44 = vector.shape_cast %43 : vector<16x16x8xbf16> to vector<256x8xbf16>
    %45 = vector.extract_strided_slice %42 {offsets = [0, 16, 0], sizes = [16, 16, 8], strides = [1, 1, 1]} : vector<22x35x8xbf16> to vector<16x16x8xbf16>
    %46 = vector.shape_cast %45 : vector<16x16x8xbf16> to vector<256x8xbf16>
    %47 = vector.extract_strided_slice %42 {offsets = [0, 19, 0], sizes = [16, 16, 8], strides = [1, 1, 1]} : vector<22x35x8xbf16> to vector<16x16x8xbf16>
    %48 = vector.shape_cast %47 : vector<16x16x8xbf16> to vector<256x8xbf16>
    %49 = vector.extract_strided_slice %42 {offsets = [3, 13, 0], sizes = [16, 16, 8], strides = [1, 1, 1]} : vector<22x35x8xbf16> to vector<16x16x8xbf16>
    %50 = vector.shape_cast %49 : vector<16x16x8xbf16> to vector<256x8xbf16>
    %51 = vector.extract_strided_slice %42 {offsets = [3, 16, 0], sizes = [16, 16, 8], strides = [1, 1, 1]} : vector<22x35x8xbf16> to vector<16x16x8xbf16>
    %52 = vector.shape_cast %51 : vector<16x16x8xbf16> to vector<256x8xbf16>
    %53 = vector.extract_strided_slice %42 {offsets = [3, 19, 0], sizes = [16, 16, 8], strides = [1, 1, 1]} : vector<22x35x8xbf16> to vector<16x16x8xbf16>
    %54 = vector.shape_cast %53 : vector<16x16x8xbf16> to vector<256x8xbf16>
    %55 = vector.extract_strided_slice %42 {offsets = [6, 13, 0], sizes = [16, 16, 8], strides = [1, 1, 1]} : vector<22x35x8xbf16> to vector<16x16x8xbf16>
    %56 = vector.shape_cast %55 : vector<16x16x8xbf16> to vector<256x8xbf16>
    %57 = vector.extract_strided_slice %42 {offsets = [6, 16, 0], sizes = [16, 16, 8], strides = [1, 1, 1]} : vector<22x35x8xbf16> to vector<16x16x8xbf16>
    %58 = vector.shape_cast %57 : vector<16x16x8xbf16> to vector<256x8xbf16>
    %59 = vector.extract_strided_slice %42 {offsets = [6, 19, 0], sizes = [16, 16, 8], strides = [1, 1, 1]} : vector<22x35x8xbf16> to vector<16x16x8xbf16>
    %60 = vector.shape_cast %59 : vector<16x16x8xbf16> to vector<256x8xbf16>
    %61 = tpu.concatenate %44, %46, %48, %50, %52, %54, %56, %58, %60 in 1 : vector<256x8xbf16>, vector<256x8xbf16>, vector<256x8xbf16>, vector<256x8xbf16>, vector<256x8xbf16>, vector<256x8xbf16>, vector<256x8xbf16>, vector<256x8xbf16>, vector<256x8xbf16> -> vector<256x72xbf16>
    %62 = vector.extract_strided_slice %42 {offsets = [1, 14, 0], sizes = [16, 16, 8], strides = [1, 1, 1]} : vector<22x35x8xbf16> to vector<16x16x8xbf16>
    %63 = vector.shape_cast %62 : vector<16x16x8xbf16> to vector<256x8xbf16>
    %64 = vector.extract_strided_slice %42 {offsets = [1, 16, 0], sizes = [16, 16, 8], strides = [1, 1, 1]} : vector<22x35x8xbf16> to vector<16x16x8xbf16>
    %65 = vector.shape_cast %64 : vector<16x16x8xbf16> to vector<256x8xbf16>
    %66 = vector.extract_strided_slice %42 {offsets = [1, 18, 0], sizes = [16, 16, 8], strides = [1, 1, 1]} : vector<22x35x8xbf16> to vector<16x16x8xbf16>
    %67 = vector.shape_cast %66 : vector<16x16x8xbf16> to vector<256x8xbf16>
    %68 = vector.extract_strided_slice %42 {offsets = [3, 14, 0], sizes = [16, 16, 8], strides = [1, 1, 1]} : vector<22x35x8xbf16> to vector<16x16x8xbf16>
    %69 = vector.shape_cast %68 : vector<16x16x8xbf16> to vector<256x8xbf16>
    %70 = vector.extract_strided_slice %42 {offsets = [3, 16, 0], sizes = [16, 16, 8], strides = [1, 1, 1]} : vector<22x35x8xbf16> to vector<16x16x8xbf16>
    %71 = vector.shape_cast %70 : vector<16x16x8xbf16> to vector<256x8xbf16>
    %72 = vector.extract_strided_slice %42 {offsets = [3, 18, 0], sizes = [16, 16, 8], strides = [1, 1, 1]} : vector<22x35x8xbf16> to vector<16x16x8xbf16>
    %73 = vector.shape_cast %72 : vector<16x16x8xbf16> to vector<256x8xbf16>
    %74 = vector.extract_strided_slice %42 {offsets = [5, 14, 0], sizes = [16, 16, 8], strides = [1, 1, 1]} : vector<22x35x8xbf16> to vector<16x16x8xbf16>
    %75 = vector.shape_cast %74 : vector<16x16x8xbf16> to vector<256x8xbf16>
    %76 = vector.extract_strided_slice %42 {offsets = [5, 16, 0], sizes = [16, 16, 8], strides = [1, 1, 1]} : vector<22x35x8xbf16> to vector<16x16x8xbf16>
    %77 = vector.shape_cast %76 : vector<16x16x8xbf16> to vector<256x8xbf16>
    %78 = vector.extract_strided_slice %42 {offsets = [5, 18, 0], sizes = [16, 16, 8], strides = [1, 1, 1]} : vector<22x35x8xbf16> to vector<16x16x8xbf16>
    %79 = vector.shape_cast %78 : vector<16x16x8xbf16> to vector<256x8xbf16>
    %80 = tpu.concatenate %63, %65, %67, %69, %71, %73, %75, %77, %79 in 1 : vector<256x8xbf16>, vector<256x8xbf16>, vector<256x8xbf16>, vector<256x8xbf16>, vector<256x8xbf16>, vector<256x8xbf16>, vector<256x8xbf16>, vector<256x8xbf16>, vector<256x8xbf16> -> vector<256x72xbf16>
    %81 = vector.extract_strided_slice %42 {offsets = [2, 15, 0], sizes = [16, 16, 8], strides = [1, 1, 1]} : vector<22x35x8xbf16> to vector<16x16x8xbf16>
    %82 = vector.shape_cast %81 : vector<16x16x8xbf16> to vector<256x8xbf16>
    %83 = vector.extract_strided_slice %42 {offsets = [2, 16, 0], sizes = [16, 16, 8], strides = [1, 1, 1]} : vector<22x35x8xbf16> to vector<16x16x8xbf16>
    %84 = vector.shape_cast %83 : vector<16x16x8xbf16> to vector<256x8xbf16>
    %85 = vector.extract_strided_slice %42 {offsets = [2, 17, 0], sizes = [16, 16, 8], strides = [1, 1, 1]} : vector<22x35x8xbf16> to vector<16x16x8xbf16>
    %86 = vector.shape_cast %85 : vector<16x16x8xbf16> to vector<256x8xbf16>
    %87 = vector.extract_strided_slice %42 {offsets = [3, 15, 0], sizes = [16, 16, 8], strides = [1, 1, 1]} : vector<22x35x8xbf16> to vector<16x16x8xbf16>
    %88 = vector.shape_cast %87 : vector<16x16x8xbf16> to vector<256x8xbf16>
    %89 = vector.extract_strided_slice %42 {offsets = [3, 16, 0], sizes = [16, 16, 8], strides = [1, 1, 1]} : vector<22x35x8xbf16> to vector<16x16x8xbf16>
    %90 = vector.shape_cast %89 : vector<16x16x8xbf16> to vector<256x8xbf16>
    %91 = vector.extract_strided_slice %42 {offsets = [3, 17, 0], sizes = [16, 16, 8], strides = [1, 1, 1]} : vector<22x35x8xbf16> to vector<16x16x8xbf16>
    %92 = vector.shape_cast %91 : vector<16x16x8xbf16> to vector<256x8xbf16>
    %93 = vector.extract_strided_slice %42 {offsets = [4, 15, 0], sizes = [16, 16, 8], strides = [1, 1, 1]} : vector<22x35x8xbf16> to vector<16x16x8xbf16>
    %94 = vector.shape_cast %93 : vector<16x16x8xbf16> to vector<256x8xbf16>
    %95 = vector.extract_strided_slice %42 {offsets = [4, 16, 0], sizes = [16, 16, 8], strides = [1, 1, 1]} : vector<22x35x8xbf16> to vector<16x16x8xbf16>
    %96 = vector.shape_cast %95 : vector<16x16x8xbf16> to vector<256x8xbf16>
    %97 = vector.extract_strided_slice %42 {offsets = [4, 17, 0], sizes = [16, 16, 8], strides = [1, 1, 1]} : vector<22x35x8xbf16> to vector<16x16x8xbf16>
    %98 = vector.shape_cast %97 : vector<16x16x8xbf16> to vector<256x8xbf16>
    %99 = tpu.concatenate %82, %84, %86, %88, %90, %92, %94, %96, %98 in 1 : vector<256x8xbf16>, vector<256x8xbf16>, vector<256x8xbf16>, vector<256x8xbf16>, vector<256x8xbf16>, vector<256x8xbf16>, vector<256x8xbf16>, vector<256x8xbf16>, vector<256x8xbf16> -> vector<256x72xbf16>
    %100 = tpu.concatenate %61, %80, %99, %31 in 1 : vector<256x72xbf16>, vector<256x72xbf16>, vector<256x72xbf16>, vector<256x8xbf16> -> vector<256x224xbf16>
    %c0_27 = arith.constant 0 : index
    %c0_28 = arith.constant 0 : index
    %101 = vector.load %arg5[%c0_27, %c0_28] : memref<224x16xbf16, #tpu.memory_space<vmem>>, vector<224x16xbf16>
    %cst_29 = arith.constant dense<0.000000e+00> : vector<256x16xf32>
    %102 = tpu.matmul %100, %101, %cst_29 {dimension_numbers = #tpu.dot_dimension_numbers<[1], [0], [0], [1], [0, 0, 1, 1], [], []>} : vector<256x224xbf16>, vector<224x16xbf16>, vector<256x16xf32> -> vector<256x16xf32>
    %c0_30 = arith.constant 0 : index
    %c0_31 = arith.constant 0 : index
    %103 = vector.load %arg6[%c0_30, %c0_31] : memref<1x16xf32, #tpu.memory_space<vmem>>, vector<1x16xf32>
    %104 = vector.broadcast %103 : vector<1x16xf32> to vector<256x16xf32>
    %105 = arith.addf %102, %104 : vector<256x16xf32>
    %cst_32 = arith.constant 0.000000e+00 : f32
    %106 = vector.broadcast %cst_32 : f32 to vector<256x16xf32>
    %107 = arith.cmpf oge, %105, %106 : vector<256x16xf32>
    %cst_33 = arith.constant 0.00999999977 : f32
    %108 = vector.broadcast %cst_33 : f32 to vector<256x16xf32>
    %109 = arith.mulf %105, %108 : vector<256x16xf32>
    %110 = arith.select %107, %105, %109 : vector<256x16xi1>, vector<256x16xf32>
    %cst_34 = arith.constant dense<0.000000e+00> : vector<16xf32>
    %111 = vector.multi_reduction <add>, %110, %cst_34 [0] : vector<256x16xf32> to vector<16xf32>
    %112 = vector.shape_cast %111 : vector<16xf32> to vector<1x16xf32>
    %cst_35 = arith.constant 3.906250e-03 : f32
    %113 = vector.broadcast %cst_35 : f32 to vector<1x16xf32>
    %114 = arith.mulf %112, %113 : vector<1x16xf32>
    %c0_36 = arith.constant 0 : index
    %c0_37 = arith.constant 0 : index
    %115 = vector.load %arg7[%c0_36, %c0_37] : memref<16x4xf32, #tpu.memory_space<vmem>>, vector<16x4xf32>
    %cst_38 = arith.constant dense<0.000000e+00> : vector<1x4xf32>
    %116 = tpu.matmul %114, %115, %cst_38 {dimension_numbers = #tpu.dot_dimension_numbers<[1], [0], [0], [1], [0, 0, 1, 1], [], []>} : vector<1x16xf32>, vector<16x4xf32>, vector<1x4xf32> -> vector<1x4xf32>
    %cst_39 = arith.constant 0.000000e+00 : f32
    %117 = vector.broadcast %cst_39 : f32 to vector<1x4xf32>
    %118 = arith.maximumf %116, %117 : vector<1x4xf32>
    %c0_40 = arith.constant 0 : index
    %c0_41 = arith.constant 0 : index
    %119 = vector.load %arg8[%c0_40, %c0_41] : memref<4x16xf32, #tpu.memory_space<vmem>>, vector<4x16xf32>
    %cst_42 = arith.constant dense<0.000000e+00> : vector<1x16xf32>
    %120 = tpu.matmul %118, %119, %cst_42 {dimension_numbers = #tpu.dot_dimension_numbers<[1], [0], [0], [1], [0, 0, 1, 1], [], []>} : vector<1x4xf32>, vector<4x16xf32>, vector<1x16xf32> -> vector<1x16xf32>
    %121 = arith.negf %120 : vector<1x16xf32>
    %122 = math.exp %121 : vector<1x16xf32>
    %cst_43 = arith.constant 1.000000e+00 : f32
    %123 = vector.broadcast %cst_43 : f32 to vector<1x16xf32>
    %124 = arith.addf %123, %122 : vector<1x16xf32>
    %125 = arith.divf %123, %124 : vector<1x16xf32>
    %c0_44 = arith.constant 0 : index
    %c0_45 = arith.constant 0 : index
    %c0_46 = arith.constant 0 : index
    %126 = vector.load %arg2[%c0_44, %c0_45, %c0_46] : memref<1x256x16xf32, #tpu.memory_space<vmem>>, vector<1x256x16xf32>
    %127 = vector.shape_cast %126 : vector<1x256x16xf32> to vector<256x16xf32>
    %128 = vector.broadcast %125 : vector<1x16xf32> to vector<256x16xf32>
    %129 = arith.mulf %110, %128 : vector<256x16xf32>
    %130 = arith.addf %127, %129 : vector<256x16xf32>
    %131 = arith.truncf %130 : vector<256x16xf32> to vector<256x16xbf16>
    %c0_47 = arith.constant 0 : index
    %c0_48 = arith.constant 0 : index
    %132 = vector.load %arg9[%c0_47, %c0_48] : memref<16x128xbf16, #tpu.memory_space<vmem>>, vector<16x128xbf16>
    %cst_49 = arith.constant dense<0.000000e+00> : vector<256x128xf32>
    %133 = tpu.matmul %131, %132, %cst_49 {dimension_numbers = #tpu.dot_dimension_numbers<[1], [0], [0], [1], [0, 0, 1, 1], [], []>} : vector<256x16xbf16>, vector<16x128xbf16>, vector<256x128xf32> -> vector<256x128xf32>
    %c0_50 = arith.constant 0 : index
    %c0_51 = arith.constant 0 : index
    %134 = vector.load %arg10[%c0_50, %c0_51] : memref<1x128xf32, #tpu.memory_space<vmem>>, vector<1x128xf32>
    %135 = vector.broadcast %134 : vector<1x128xf32> to vector<256x128xf32>
    %136 = arith.addf %133, %135 : vector<256x128xf32>
    %137 = vector.shape_cast %136 : vector<256x128xf32> to vector<1x256x128xf32>
    %c0_52 = arith.constant 0 : index
    %c0_53 = arith.constant 0 : index
    %c0_54 = arith.constant 0 : index
    %138 = vector.load %arg11[%c0_52, %c0_53, %c0_54] : memref<1x256x128xf32, #tpu.memory_space<vmem>>, vector<1x256x128xf32>
    tpu.vector_store %arg11[%c0_52, %c0_53, %c0_54], %137 {strides = array<i32>} : memref<1x256x128xf32, #tpu.memory_space<vmem>>, vector<1x256x128xf32>,
    return
  }
  func.func @transform_0(%arg0: i32) -> (i32, i32, i32, i32) {
    %c0_i32 = arith.constant 0 : i32
    %c0_i32_0 = arith.constant 0 : i32
    %c0_i32_1 = arith.constant 0 : i32
    %c0_i32_2 = arith.constant 0 : i32
    return %arg0, %c0_i32, %c0_i32_0, %c0_i32_1 : i32, i32, i32, i32
  }
  func.func @transform_1(%arg0: i32) -> (i32, i32, i32) {
    %c0_i32 = arith.constant 0 : i32
    %c0_i32_0 = arith.constant 0 : i32
    %c0_i32_1 = arith.constant 0 : i32
    return %arg0, %c0_i32, %c0_i32_0 : i32, i32, i32
  }
  func.func @transform_2(%arg0: i32) -> (i32, i32) {
    %c0_i32 = arith.constant 0 : i32
    %c0_i32_0 = arith.constant 0 : i32
    %c0_i32_1 = arith.constant 0 : i32
    return %c0_i32, %c0_i32_0 : i32, i32
  }
  func.func @transform_3(%arg0: i32) -> (i32, i32) {
    %c0_i32 = arith.constant 0 : i32
    %c0_i32_0 = arith.constant 0 : i32
    %c0_i32_1 = arith.constant 0 : i32
    return %c0_i32, %c0_i32_0 : i32, i32
  }
  func.func @transform_4(%arg0: i32) -> (i32, i32) {
    %c0_i32 = arith.constant 0 : i32
    %c0_i32_0 = arith.constant 0 : i32
    %c0_i32_1 = arith.constant 0 : i32
    return %c0_i32, %c0_i32_0 : i32, i32
  }
  func.func @transform_5(%arg0: i32) -> (i32, i32) {
    %c0_i32 = arith.constant 0 : i32
    %c0_i32_0 = arith.constant 0 : i32
    %c0_i32_1 = arith.constant 0 : i32
    return %c0_i32, %c0_i32_0 : i32, i32
  }
  func.func @transform_6(%arg0: i32) -> (i32, i32) {
    %c0_i32 = arith.constant 0 : i32
    %c0_i32_0 = arith.constant 0 : i32
    %c0_i32_1 = arith.constant 0 : i32
    return %c0_i32, %c0_i32_0 : i32, i32
  }
  func.func @transform_7(%arg0: i32) -> (i32, i32) {
    %c0_i32 = arith.constant 0 : i32
    %c0_i32_0 = arith.constant 0 : i32
    %c0_i32_1 = arith.constant 0 : i32
    return %c0_i32, %c0_i32_0 : i32, i32
  }
  func.func @transform_8(%arg0: i32) -> (i32, i32) {
    %c0_i32 = arith.constant 0 : i32
    %c0_i32_0 = arith.constant 0 : i32
    %c0_i32_1 = arith.constant 0 : i32
    return %c0_i32, %c0_i32_0 : i32, i32
  }
  func.func @transform_9(%arg0: i32) -> (i32, i32) {
    %c0_i32 = arith.constant 0 : i32
    %c0_i32_0 = arith.constant 0 : i32
    %c0_i32_1 = arith.constant 0 : i32
    return %c0_i32, %c0_i32_0 : i32, i32
  }
  func.func @transform_10(%arg0: i32) -> (i32, i32, i32) {
    %c0_i32 = arith.constant 0 : i32
    %c0_i32_0 = arith.constant 0 : i32
    %c0_i32_1 = arith.constant 0 : i32
    return %arg0, %c0_i32, %c0_i32_0 : i32, i32, i32
  }
}

</mosaic_0001>

<llo_original>
// kernel: decoder_forward.1
$region0: #{decoder_forward.1}
  #allocation0 [shape = 'u32[]', space=smem, size = 0x4, offset = 0x4, fixed_abs, tag = 'smem constant byte address 0x4 - core index']
  #allocation1 [shape = 'u32[72,128]{1,0:T(1,128)}', space=vmem, size = 0x9000, scoped, tag = 'internal scratch']
  #allocation2 [shape = 'bf16[22,35,8]{2,1,0:T(8,128)(2,1)}', space=vmem, size = 0x37000, scoped, tag = 'scratch operand']
  %s0 = inlined_call_operand.vmem [shape: bf16[2,18,18,16], index: 0, kind: input, shape index: {}]
  %s1 = inlined_call_operand.vmem [shape: f32[2,256,16], index: 1, kind: input, shape index: {}]
  %s2 = inlined_call_operand.vmem [shape: bf16[144,8], index: 2, kind: input, shape index: {}]
  %s3 = inlined_call_operand.vmem [shape: f32[1,8], index: 3, kind: input, shape index: {}]
  %s4 = inlined_call_operand.vmem [shape: bf16[224,16], index: 4, kind: input, shape index: {}]
  %s5 = inlined_call_operand.vmem [shape: f32[1,16], index: 5, kind: input, shape index: {}]
  %s6 = inlined_call_operand.vmem [shape: f32[16,4], index: 6, kind: input, shape index: {}]
  %s7 = inlined_call_operand.vmem [shape: f32[4,16], index: 7, kind: input, shape index: {}]
  %s8 = inlined_call_operand.vmem [shape: bf16[16,128], index: 8, kind: input, shape index: {}]
  %s9 = inlined_call_operand.vmem [shape: f32[1,128], index: 9, kind: input, shape index: {}]
  %s10 = inlined_call_operand.vmem [shape: f32[2,256,128], index: 10, kind: output, shape index: {}]
  %s11 = sld [smem:[#allocation0]]
  $region73: #{decoder_forward.1} parent=0
    _
  %s13 = ssub.s32 1, %s11
  %s14 = scalar_select 0, %s13, %s11
  loop: start=0, step=1, limit=4
  $region2: #{decoder_forward.1} parent=0 // loop_pre_header
    _
  $region3: #{decoder_forward.1} parent=0 // loop_header
    %s16 = sphi 0, %s20
    %p17 = scmp.ge.s32.totalorder %s16, 4
    %s26 = sphi 0, %s28
    %s29 = sphi 0, %s26
    %s30 = sphi 0, %s29
    %s46 = sphi 0, %s30
    %s52 = sphi 0, %s54
    %s55 = sphi 0, %s52
    %s56 = sphi 0, %s55
    %s72 = sphi 0, %s56
    %s76 = sphi 0, %s76
    %s78 = sphi 0, %s76
    %s79 = sphi 0, %s78
    %s93 = sphi 0, %s79
    %s97 = sphi 0, %s97
    %s99 = sphi 0, %s97
    %s100 = sphi 0, %s99
    %s114 = sphi 0, %s100
    %s118 = sphi 0, %s118
    %s120 = sphi 0, %s118
    %s121 = sphi 0, %s120
    %s135 = sphi 0, %s121
    %s139 = sphi 0, %s139
    %s141 = sphi 0, %s139
    %s142 = sphi 0, %s141
    %s156 = sphi 0, %s142
    %s160 = sphi 0, %s160
    %s162 = sphi 0, %s160
    %s163 = sphi 0, %s162
    %s177 = sphi 0, %s163
    %s181 = sphi 0, %s181
    %s183 = sphi 0, %s181
    %s184 = sphi 0, %s183
    %s198 = sphi 0, %s184
    %s202 = sphi 0, %s202
    %s204 = sphi 0, %s202
    %s205 = sphi 0, %s204
    %s219 = sphi 0, %s205
    %s223 = sphi 0, %s223
    %s225 = sphi 0, %s223
    %s226 = sphi 0, %s225
    %s240 = sphi 0, %s226
    %s246 = sphi 0, %s248
    %s249 = sphi 0, %s246
    %s250 = sphi 0, %s249
    %s266 = sphi 0, %s250
  $region4: #{decoder_forward.1} parent=0 // loop_header_branch
    %19 = sbr.rel (%p17) target = $region8
  $region5: #{decoder_forward.1} parent=0 // loop_body
    %s21 = ssub.s32 %s16, 1
    %s22 = ssub.s32 %s16, 2
    %s23 = sadd.s32 %s16, 1
    %s24 = ssub.s32 %s16, %s23
    %p25 = scmp.eq.s32.totalorder %s24, 0
    %s27 = sadd.s32 %s26, 1
    %s28 = scalar_select %p25, %s26, %s27
    %p31 = pneg %p25
    %p32 = scmp.eq.s32.totalorder %s16, 1
    %p33 = por %p31, %p32
    %p34 = scmp.ne.s32.totalorder %s26, %s29
    %p35 = scmp.eq.s32.totalorder %s16, 0
    %p36 = por %p34, %p35
    %p37 = scmp.ne.s32.totalorder %s26, %s29
    %p38 = scmp.eq.s32.totalorder %s21, 1
    %p39 = por %p37, %p38
    %p40 = scmp.ne.s32.totalorder %s29, %s30
    %p41 = scmp.eq.s32.totalorder %s21, 0
    %p42 = por %p40, %p41
    %p43 = scmp.ne.s32.totalorder %s29, %s30
    %p44 = scmp.eq.s32.totalorder %s22, 1
    %p45 = por %p43, %p44
    %p47 = scmp.ne.s32.totalorder %s30, %s46
    %p48 = scmp.eq.s32.totalorder %s22, 0
    %p49 = por %p47, %p48
    %s50 = ssub.s32 %s16, %s23
    %p51 = scmp.eq.s32.totalorder %s50, 0
    %s53 = sadd.s32 %s52, 1
    %s54 = scalar_select %p51, %s52, %s53
    %p57 = pneg %p51
    %p58 = scmp.eq.s32.totalorder %s16, 1
    %p59 = por %p57, %p58
    %p60 = scmp.ne.s32.totalorder %s52, %s55
    %p61 = scmp.eq.s32.totalorder %s16, 0
    %p62 = por %p60, %p61
    %p63 = scmp.ne.s32.totalorder %s52, %s55
    %p64 = scmp.eq.s32.totalorder %s21, 1
    %p65 = por %p63, %p64
    %p66 = scmp.ne.s32.totalorder %s55, %s56
    %p67 = scmp.eq.s32.totalorder %s21, 0
    %p68 = por %p66, %p67
    %p69 = scmp.ne.s32.totalorder %s55, %s56
    %p70 = scmp.eq.s32.totalorder %s22, 1
    %p71 = por %p69, %p70
    %p73 = scmp.ne.s32.totalorder %s56, %s72
    %p74 = scmp.eq.s32.totalorder %s22, 0
    %p75 = por %p73, %p74
    %s77 = sadd.s32 %s76, 1
    %p80 = scmp.eq.s32.totalorder %s16, 1
    %p81 = scmp.ne.s32.totalorder %s76, %s78
    %p82 = scmp.eq.s32.totalorder %s16, 0
    %p83 = por %p81, %p82
    %p84 = scmp.ne.s32.totalorder %s76, %s78
    %p85 = scmp.eq.s32.totalorder %s21, 1
    %p86 = por %p84, %p85
    %p87 = scmp.ne.s32.totalorder %s78, %s79
    %p88 = scmp.eq.s32.totalorder %s21, 0
    %p89 = por %p87, %p88
    %p90 = scmp.ne.s32.totalorder %s78, %s79
    %p91 = scmp.eq.s32.totalorder %s22, 1
    %p92 = por %p90, %p91
    %p94 = scmp.ne.s32.totalorder %s79, %s93
    %p95 = scmp.eq.s32.totalorder %s22, 0
    %p96 = por %p94, %p95
    %s98 = sadd.s32 %s97, 1
    %p101 = scmp.eq.s32.totalorder %s16, 1
    %p102 = scmp.ne.s32.totalorder %s97, %s99
    %p103 = scmp.eq.s32.totalorder %s16, 0
    %p104 = por %p102, %p103
    %p105 = scmp.ne.s32.totalorder %s97, %s99
    %p106 = scmp.eq.s32.totalorder %s21, 1
    %p107 = por %p105, %p106
    %p108 = scmp.ne.s32.totalorder %s99, %s100
    %p109 = scmp.eq.s32.totalorder %s21, 0
    %p110 = por %p108, %p109
    %p111 = scmp.ne.s32.totalorder %s99, %s100
    %p112 = scmp.eq.s32.totalorder %s22, 1
    %p113 = por %p111, %p112
    %p115 = scmp.ne.s32.totalorder %s100, %s114
    %p116 = scmp.eq.s32.totalorder %s22, 0
    %p117 = por %p115, %p116
    %s119 = sadd.s32 %s118, 1
    %p122 = scmp.eq.s32.totalorder %s16, 1
    %p123 = scmp.ne.s32.totalorder %s118, %s120
    %p124 = scmp.eq.s32.totalorder %s16, 0
    %p125 = por %p123, %p124
    %p126 = scmp.ne.s32.totalorder %s118, %s120
    %p127 = scmp.eq.s32.totalorder %s21, 1
    %p128 = por %p126, %p127
    %p129 = scmp.ne.s32.totalorder %s120, %s121
    %p130 = scmp.eq.s32.totalorder %s21, 0
    %p131 = por %p129, %p130
    %p132 = scmp.ne.s32.totalorder %s120, %s121
    %p133 = scmp.eq.s32.totalorder %s22, 1
    %p134 = por %p132, %p133
    %p136 = scmp.ne.s32.totalorder %s121, %s135
    %p137 = scmp.eq.s32.totalorder %s22, 0
    %p138 = por %p136, %p137
    %s140 = sadd.s32 %s139, 1
    %p143 = scmp.eq.s32.totalorder %s16, 1
    %p144 = scmp.ne.s32.totalorder %s139, %s141
    %p145 = scmp.eq.s32.totalorder %s16, 0
    %p146 = por %p144, %p145
    %p147 = scmp.ne.s32.totalorder %s139, %s141
    %p148 = scmp.eq.s32.totalorder %s21, 1
    %p149 = por %p147, %p148
    %p150 = scmp.ne.s32.totalorder %s141, %s142
    %p151 = scmp.eq.s32.totalorder %s21, 0
    %p152 = por %p150, %p151
    %p153 = scmp.ne.s32.totalorder %s141, %s142
    %p154 = scmp.eq.s32.totalorder %s22, 1
    %p155 = por %p153, %p154
    %p157 = scmp.ne.s32.totalorder %s142, %s156
    %p158 = scmp.eq.s32.totalorder %s22, 0
    %p159 = por %p157, %p158
    %s161 = sadd.s32 %s160, 1
    %p164 = scmp.eq.s32.totalorder %s16, 1
    %p165 = scmp.ne.s32.totalorder %s160, %s162
    %p166 = scmp.eq.s32.totalorder %s16, 0
    %p167 = por %p165, %p166
    %p168 = scmp.ne.s32.totalorder %s160, %s162
    %p169 = scmp.eq.s32.totalorder %s21, 1
    %p170 = por %p168, %p169
    %p171 = scmp.ne.s32.totalorder %s162, %s163
    %p172 = scmp.eq.s32.totalorder %s21, 0
    %p173 = por %p171, %p172
    %p174 = scmp.ne.s32.totalorder %s162, %s163
    %p175 = scmp.eq.s32.totalorder %s22, 1
    %p176 = por %p174, %p175
    %p178 = scmp.ne.s32.totalorder %s163, %s177
    %p179 = scmp.eq.s32.totalorder %s22, 0
    %p180 = por %p178, %p179
    %s182 = sadd.s32 %s181, 1
    %p185 = scmp.eq.s32.totalorder %s16, 1
    %p186 = scmp.ne.s32.totalorder %s181, %s183
    %p187 = scmp.eq.s32.totalorder %s16, 0
    %p188 = por %p186, %p187
    %p189 = scmp.ne.s32.totalorder %s181, %s183
    %p190 = scmp.eq.s32.totalorder %s21, 1
    %p191 = por %p189, %p190
    %p192 = scmp.ne.s32.totalorder %s183, %s184
    %p193 = scmp.eq.s32.totalorder %s21, 0
    %p194 = por %p192, %p193
    %p195 = scmp.ne.s32.totalorder %s183, %s184
    %p196 = scmp.eq.s32.totalorder %s22, 1
    %p197 = por %p195, %p196
    %p199 = scmp.ne.s32.totalorder %s184, %s198
    %p200 = scmp.eq.s32.totalorder %s22, 0
    %p201 = por %p199, %p200
    %s203 = sadd.s32 %s202, 1
    %p206 = scmp.eq.s32.totalorder %s16, 1
    %p207 = scmp.ne.s32.totalorder %s202, %s204
    %p208 = scmp.eq.s32.totalorder %s16, 0
    %p209 = por %p207, %p208
    %p210 = scmp.ne.s32.totalorder %s202, %s204
    %p211 = scmp.eq.s32.totalorder %s21, 1
    %p212 = por %p210, %p211
    %p213 = scmp.ne.s32.totalorder %s204, %s205
    %p214 = scmp.eq.s32.totalorder %s21, 0
    %p215 = por %p213, %p214
    %p216 = scmp.ne.s32.totalorder %s204, %s205
    %p217 = scmp.eq.s32.totalorder %s22, 1
    %p218 = por %p216, %p217
    %p220 = scmp.ne.s32.totalorder %s205, %s219
    %p221 = scmp.eq.s32.totalorder %s22, 0
    %p222 = por %p220, %p221
    %s224 = sadd.s32 %s223, 1
    %p227 = scmp.eq.s32.totalorder %s16, 1
    %p228 = scmp.ne.s32.totalorder %s223, %s225
    %p229 = scmp.eq.s32.totalorder %s16, 0
    %p230 = por %p228, %p229
    %p231 = scmp.ne.s32.totalorder %s223, %s225
    %p232 = scmp.eq.s32.totalorder %s21, 1
    %p233 = por %p231, %p232
    %p234 = scmp.ne.s32.totalorder %s225, %s226
    %p235 = scmp.eq.s32.totalorder %s21, 0
    %p236 = por %p234, %p235
    %p237 = scmp.ne.s32.totalorder %s225, %s226
    %p238 = scmp.eq.s32.totalorder %s22, 1
    %p239 = por %p237, %p238
    %p241 = scmp.ne.s32.totalorder %s226, %s240
    %p242 = scmp.eq.s32.totalorder %s22, 0
    %p243 = por %p241, %p242
    %s244 = ssub.s32 %s16, %s23
    %p245 = scmp.eq.s32.totalorder %s244, 0
    %s247 = sadd.s32 %s246, 1
    %s248 = scalar_select %p245, %s246, %s247
    %p251 = pneg %p245
    %p252 = scmp.eq.s32.totalorder %s16, 1
    %p253 = por %p251, %p252
    %p254 = scmp.ne.s32.totalorder %s246, %s249
    %p255 = scmp.eq.s32.totalorder %s16, 0
    %p256 = por %p254, %p255
    %p257 = scmp.ne.s32.totalorder %s246, %s249
    %p258 = scmp.eq.s32.totalorder %s21, 1
    %p259 = por %p257, %p258
    %p260 = scmp.ne.s32.totalorder %s249, %s250
    %p261 = scmp.eq.s32.totalorder %s21, 0
    %p262 = por %p260, %p261
    %p263 = scmp.ne.s32.totalorder %s249, %s250
    %p264 = scmp.eq.s32.totalorder %s22, 1
    %p265 = por %p263, %p264
    %p267 = scmp.ne.s32.totalorder %s250, %s266
    %p268 = scmp.eq.s32.totalorder %s22, 0
    %p269 = por %p267, %p268
    %p270 = scmp.le.s32.totalorder 1, %s16
    %p271 = scmp.lt.s32.totalorder %s16, 3
    %p272 = pnand %p270, %p271
    %p273 = pneg %p272
    // Predicated region
    $region9: #{decoder_forward.1} parent=5 // pred_check
      _
    $region10: #{decoder_forward.1} parent=5 // pred_check_branch
      %275 = sbr.rel (%p272) target = $region12
    $region11: #{decoder_forward.1} parent=5 // pred_region
      %s276 = ssub.s32 %s16, 1
      // Predicated region
      $region13: #{decoder_forward.1} parent=11 // pred_check
        %p277 = pneg %p89
      $region14: #{decoder_forward.1} parent=11 // pred_check_branch
        %279 = sbr.rel (%p277) target = $region16
      $region15: #{decoder_forward.1} parent=11 // pred_region
        _
      $region16: #{decoder_forward.1} parent=11 // pred_fallthru
        _
      // Predicated region
      $region17: #{decoder_forward.1} parent=11 // pred_check
        %p280 = pneg %p110
      $region18: #{decoder_forward.1} parent=11 // pred_check_branch
        %282 = sbr.rel (%p280) target = $region20
      $region19: #{decoder_forward.1} parent=11 // pred_region
        _
      $region20: #{decoder_forward.1} parent=11 // pred_fallthru
        _
      // Predicated region
      $region21: #{decoder_forward.1} parent=11 // pred_check
        %p283 = pneg %p131
      $region22: #{decoder_forward.1} parent=11 // pred_check_branch
        %285 = sbr.rel (%p283) target = $region24
      $region23: #{decoder_forward.1} parent=11 // pred_region
        _
      $region24: #{decoder_forward.1} parent=11 // pred_fallthru
        _
      // Predicated region
      $region25: #{decoder_forward.1} parent=11 // pred_check
        %p286 = pneg %p152
      $region26: #{decoder_forward.1} parent=11 // pred_check_branch
        %288 = sbr.rel (%p286) target = $region28
      $region27: #{decoder_forward.1} parent=11 // pred_region
        _
      $region28: #{decoder_forward.1} parent=11 // pred_fallthru
        _
      // Predicated region
      $region29: #{decoder_forward.1} parent=11 // pred_check
        %p289 = pneg %p173
      $region30: #{decoder_forward.1} parent=11 // pred_check_branch
        %291 = sbr.rel (%p289) target = $region32
      $region31: #{decoder_forward.1} parent=11 // pred_region
        _
      $region32: #{decoder_forward.1} parent=11 // pred_fallthru
        _
      // Predicated region
      $region33: #{decoder_forward.1} parent=11 // pred_check
        %p292 = pneg %p194
      $region34: #{decoder_forward.1} parent=11 // pred_check_branch
        %294 = sbr.rel (%p292) target = $region36
      $region35: #{decoder_forward.1} parent=11 // pred_region
        _
      $region36: #{decoder_forward.1} parent=11 // pred_fallthru
        _
      // Predicated region
      $region37: #{decoder_forward.1} parent=11 // pred_check
        %p295 = pneg %p215
      $region38: #{decoder_forward.1} parent=11 // pred_check_branch
        %297 = sbr.rel (%p295) target = $region40
      $region39: #{decoder_forward.1} parent=11 // pred_region
        _
      $region40: #{decoder_forward.1} parent=11 // pred_fallthru
        _
      // Predicated region
      $region41: #{decoder_forward.1} parent=11 // pred_check
        %p298 = pneg %p236
      $region42: #{decoder_forward.1} parent=11 // pred_check_branch
        %300 = sbr.rel (%p298) target = $region44
      $region43: #{decoder_forward.1} parent=11 // pred_region
        _
      $region44: #{decoder_forward.1} parent=11 // pred_fallthru
        _
    $region12: #{decoder_forward.1} parent=5 // pred_fallthru
      _
    %p301 = scmp.lt.s32.totalorder %s16, 2
    // Predicated region
    $region45: #{decoder_forward.1} parent=5 // pred_check
      %p302 = pneg %p301
    $region46: #{decoder_forward.1} parent=5 // pred_check_branch
      %304 = sbr.rel (%p302) target = $region48
    $region47: #{decoder_forward.1} parent=5 // pred_region
      // Predicated region
      $region49: #{decoder_forward.1} parent=47 // pred_check
        %p305 = pneg %p36
      $region50: #{decoder_forward.1} parent=47 // pred_check_branch
        %307 = sbr.rel (%p305) target = $region52
      $region51: #{decoder_forward.1} parent=47 // pred_region
        %p308 = scmp.lt.s32.totalorder %s16, 1
        %s309 = scalar_select %p308, %s16, 1
        %s310 = smul.addr %s309, 54
        %s311 = smul.addr %s310, 4
        %s312 = scalar_lea.vmem %s0, %s311
      $region52: #{decoder_forward.1} parent=47 // pred_fallthru
        _
      // Predicated region
      $region53: #{decoder_forward.1} parent=47 // pred_check
        %p313 = pneg %p62
      $region54: #{decoder_forward.1} parent=47 // pred_check_branch
        %315 = sbr.rel (%p313) target = $region56
      $region55: #{decoder_forward.1} parent=47 // pred_region
        %p316 = scmp.lt.s32.totalorder %s16, 1
        %s317 = scalar_select %p316, %s16, 1
        %s318 = smul.addr %s317, 32
        %s319 = smul.addr %s318, 8
        %s320 = scalar_lea.vmem %s1, %s319
      $region56: #{decoder_forward.1} parent=47 // pred_fallthru
        _
    $region48: #{decoder_forward.1} parent=5 // pred_fallthru
      _
    %p321 = scmp.le.s32.totalorder 1, %s16
    %p322 = scmp.lt.s32.totalorder %s16, 3
    %p323 = pnand %p321, %p322
    %p324 = pneg %p323
    // Predicated region
    $region57: #{decoder_forward.1} parent=5 // pred_check
      _
    $region58: #{decoder_forward.1} parent=5 // pred_check_branch
      %326 = sbr.rel (%p323) target = $region60
    $region59: #{decoder_forward.1} parent=5 // pred_region
      %s327 = ssub.s32 %s16, 1
      %p328 = scmp.lt.s32.totalorder %s21, 1
      %s329 = scalar_select %p328, %s21, 1
      %s330 = smul.addr %s329, 54
      %s331 = smul.addr %s330, 4
      %s332 = scalar_lea.vmem %s0, %s331
      %p333 = pneg %p42
      %p334 = pneg %p39
      %p335 = scmp.lt.s32.totalorder %s21, 1
      %s336 = scalar_select %p335, %s21, 1
      %s337 = smul.addr %s336, 32
      %s338 = smul.addr %s337, 8
      %s339 = scalar_lea.vmem %s1, %s338
      %p340 = pneg %p68
      %p341 = pneg %p65
      %p342 = pneg %p89
      %p343 = pneg %p86
      %p344 = pneg %p110
      %p345 = pneg %p107
      %p346 = pneg %p131
      %p347 = pneg %p128
      %p348 = pneg %p152
      %p349 = pneg %p149
      %p350 = pneg %p173
      %p351 = pneg %p170
      %p352 = pneg %p194
      %p353 = pneg %p191
      %p354 = pneg %p215
      %p355 = pneg %p212
      %p356 = pneg %p236
      %p357 = pneg %p233
      %p358 = pneg %p262
      %p359 = pneg %p259
      %p360 = scmp.lt.s32.totalorder %s21, 1
      %s361 = scalar_select %p360, %s21, 1
      %s362 = smul.addr %s361, 32
      %s363 = smul.addr %s362, 8
      %s364 = scalar_lea.vmem %s10, %s363
      %p365 = scmp.lt.s32.totalorder %s21, 1
      %s366 = scalar_select %p365, %s21, 1
      %s367 = smul.addr %s366, 54
      %s368 = smul.addr %s367, 4
      %s369 = scalar_lea.vmem %s0, %s368
      %p370 = scmp.lt.s32.totalorder %s21, 1
      %s371 = scalar_select %p370, %s21, 1
      %s372 = smul.addr %s371, 32
      %s373 = smul.addr %s372, 8
      %s374 = scalar_lea.vmem %s1, %s373
      %p375 = scmp.lt.s32.totalorder %s21, 1
      %s376 = scalar_select %p375, %s21, 1
      %s377 = smul.addr %s376, 32
      %s378 = smul.addr %s377, 8
      %s379 = scalar_lea.vmem %s10, %s378
      %v381 = vld [vmem:[%s369] sm:$0xf]
      %v382 = vld [vmem:[%s369 + $0x4] sm:$0xf]
      %v383 = vld [vmem:[%s369 + $0x8] sm:$0x1]
      %v384 = vld [vmem:[%s369 + $0xc] sm:$0xf]
      %v385 = vld [vmem:[%s369 + $0x10] sm:$0xf]
      %v386 = vld [vmem:[%s369 + $0x14] sm:$0x1]
      %v387 = vld [vmem:[%s369 + $0x18] sm:$0xf]
      %v388 = vld [vmem:[%s369 + $0x1c] sm:$0xf]
      %v389 = vld [vmem:[%s369 + $0x20] sm:$0x1]
      %v390 = vld [vmem:[%s369 + $0x24] sm:$0xf]
      %v391 = vld [vmem:[%s369 + $0x28] sm:$0xf]
      %v392 = vld [vmem:[%s369 + $0x2c] sm:$0x1]
      %v393 = vld [vmem:[%s369 + $0x30] sm:$0xf]
      %v394 = vld [vmem:[%s369 + $0x34] sm:$0xf]
      %v395 = vld [vmem:[%s369 + $0x38] sm:$0x1]
      %v396 = vld [vmem:[%s369 + $0x3c] sm:$0xf]
      %v397 = vld [vmem:[%s369 + $0x40] sm:$0xf]
      %v398 = vld [vmem:[%s369 + $0x44] sm:$0x1]
      %v399 = vld [vmem:[%s369 + $0x48] sm:$0xf]
      %v400 = vld [vmem:[%s369 + $0x4c] sm:$0xf]
      %v401 = vld [vmem:[%s369 + $0x50] sm:$0x1]
      %v402 = vld [vmem:[%s369 + $0x54] sm:$0xf]
      %v403 = vld [vmem:[%s369 + $0x58] sm:$0xf]
      %v404 = vld [vmem:[%s369 + $0x5c] sm:$0x1]
      %v405 = vld [vmem:[%s369 + $0x60] sm:$0xf]
      %v406 = vld [vmem:[%s369 + $0x64] sm:$0xf]
      %v407 = vld [vmem:[%s369 + $0x68] sm:$0x1]
      %v408 = vld [vmem:[%s369 + $0x6c] sm:$0xf]
      %v409 = vld [vmem:[%s369 + $0x70] sm:$0xf]
      %v410 = vld [vmem:[%s369 + $0x74] sm:$0x1]
      %v411 = vld [vmem:[%s369 + $0x78] sm:$0xf]
      %v412 = vld [vmem:[%s369 + $0x7c] sm:$0xf]
      %v413 = vld [vmem:[%s369 + $0x80] sm:$0x1]
      %v414 = vld [vmem:[%s369 + $0x84] sm:$0xf]
      %v415 = vld [vmem:[%s369 + $0x88] sm:$0xf]
      %v416 = vld [vmem:[%s369 + $0x8c] sm:$0x1]
      %v417 = vld [vmem:[%s369 + $0x90] sm:$0xf]
      %v418 = vld [vmem:[%s369 + $0x94] sm:$0xf]
      %v419 = vld [vmem:[%s369 + $0x98] sm:$0x1]
      %v420 = vld [vmem:[%s369 + $0x9c] sm:$0xf]
      %v421 = vld [vmem:[%s369 + $0xa0] sm:$0xf]
      %v422 = vld [vmem:[%s369 + $0xa4] sm:$0x1]
      %v423 = vld [vmem:[%s369 + $0xa8] sm:$0xf]
      %v424 = vld [vmem:[%s369 + $0xac] sm:$0xf]
      %v425 = vld [vmem:[%s369 + $0xb0] sm:$0x1]
      %v426 = vld [vmem:[%s369 + $0xb4] sm:$0xf]
      %v427 = vld [vmem:[%s369 + $0xb8] sm:$0xf]
      %v428 = vld [vmem:[%s369 + $0xbc] sm:$0x1]
      %v429 = vld [vmem:[%s369 + $0xc0] sm:$0xf]
      %v430 = vld [vmem:[%s369 + $0xc4] sm:$0xf]
      %v431 = vld [vmem:[%s369 + $0xc8] sm:$0x1]
      %v432 = vld [vmem:[%s369 + $0xcc] sm:$0xf]
      %v433 = vld [vmem:[%s369 + $0xd0] sm:$0xf]
      %v434 = vld [vmem:[%s369 + $0xd4] sm:$0x1]
      %vm435 = vsmask.f32 3328
      %vm436 = vsmask.f32 7440
      %vm437 = vmor %vm435, %vm436
      %v439 = vshrl.u32 %v381, 16
      %v441 = vrot.slane %v439, 4
      %v442 = vshll.u32 %v381, 16
      %v444 = vrot.slane %v442, 5
      %v445 = vor.u32 %v441, %v444
      %v446 = vrot.slane %v445, 4
      %v448 = vshll.u32 %v382, 16
      %v450 = vrot.slane %v448, 5
      %v451 = vsel %vm437, %v446, %v450
      %v452 = vshrl.u32 %v382, 16
      %v454 = vrot.slane %v452, 4
      %v455 = vor.u32 %v454, %v450
      %v456 = vrot.slane %v455, 4
      %v458 = vshll.u32 %v383, 16
      %v460 = vrot.slane %v458, 5
      %v461 = vsel %vm437, %v456, %v460
      %v463 = vshrl.u32 %v384, 16
      %v465 = vrot.slane %v463, 4
      %v466 = vshll.u32 %v384, 16
      %v468 = vrot.slane %v466, 5
      %v469 = vor.u32 %v465, %v468
      %v470 = vrot.slane %v469, 4
      %v472 = vshll.u32 %v385, 16
      %v474 = vrot.slane %v472, 5
      %v475 = vsel %vm437, %v470, %v474
      %v476 = vshrl.u32 %v385, 16
      %v478 = vrot.slane %v476, 4
      %v479 = vor.u32 %v478, %v474
      %v480 = vrot.slane %v479, 4
      %v482 = vshll.u32 %v386, 16
      %v484 = vrot.slane %v482, 5
      %v485 = vsel %vm437, %v480, %v484
      %v487 = vshrl.u32 %v387, 16
      %v489 = vrot.slane %v487, 4
      %v490 = vshll.u32 %v387, 16
      %v492 = vrot.slane %v490, 5
      %v493 = vor.u32 %v489, %v492
      %v494 = vrot.slane %v493, 4
      %v496 = vshll.u32 %v388, 16
      %v498 = vrot.slane %v496, 5
      %v499 = vsel %vm437, %v494, %v498
      %v500 = vshrl.u32 %v388, 16
      %v502 = vrot.slane %v500, 4
      %v503 = vor.u32 %v502, %v498
      %v504 = vrot.slane %v503, 4
      %v506 = vshll.u32 %v389, 16
      %v508 = vrot.slane %v506, 5
      %v509 = vsel %vm437, %v504, %v508
      %v511 = vshrl.u32 %v390, 16
      %v513 = vrot.slane %v511, 4
      %v514 = vshll.u32 %v390, 16
      %v516 = vrot.slane %v514, 5
      %v517 = vor.u32 %v513, %v516
      %v518 = vrot.slane %v517, 4
      %v520 = vshll.u32 %v391, 16
      %v522 = vrot.slane %v520, 5
      %v523 = vsel %vm437, %v518, %v522
      %v524 = vshrl.u32 %v391, 16
      %v526 = vrot.slane %v524, 4
      %v527 = vor.u32 %v526, %v522
      %v528 = vrot.slane %v527, 4
      %v530 = vshll.u32 %v392, 16
      %v532 = vrot.slane %v530, 5
      %v533 = vsel %vm437, %v528, %v532
      %v535 = vshrl.u32 %v393, 16
      %v537 = vrot.slane %v535, 4
      %v538 = vshll.u32 %v393, 16
      %v540 = vrot.slane %v538, 5
      %v541 = vor.u32 %v537, %v540
      %v542 = vrot.slane %v541, 4
      %v544 = vshll.u32 %v394, 16
      %v546 = vrot.slane %v544, 5
      %v547 = vsel %vm437, %v542, %v546
      %v548 = vshrl.u32 %v394, 16
      %v550 = vrot.slane %v548, 4
      %v551 = vor.u32 %v550, %v546
      %v552 = vrot.slane %v551, 4
      %v554 = vshll.u32 %v395, 16
      %v556 = vrot.slane %v554, 5
      %v557 = vsel %vm437, %v552, %v556
      %v559 = vshrl.u32 %v396, 16
      %v561 = vrot.slane %v559, 4
      %v562 = vshll.u32 %v396, 16
      %v564 = vrot.slane %v562, 5
      %v565 = vor.u32 %v561, %v564
      %v566 = vrot.slane %v565, 4
      %v568 = vshll.u32 %v397, 16
      %v570 = vrot.slane %v568, 5
      %v571 = vsel %vm437, %v566, %v570
      %v572 = vshrl.u32 %v397, 16
      %v574 = vrot.slane %v572, 4
      %v575 = vor.u32 %v574, %v570
      %v576 = vrot.slane %v575, 4
      %v578 = vshll.u32 %v398, 16
      %v580 = vrot.slane %v578, 5
      %v581 = vsel %vm437, %v576, %v580
      %v583 = vshrl.u32 %v399, 16
      %v585 = vrot.slane %v583, 4
      %v586 = vshll.u32 %v399, 16
      %v588 = vrot.slane %v586, 5
      %v589 = vor.u32 %v585, %v588
      %v590 = vrot.slane %v589, 4
      %v592 = vshll.u32 %v400, 16
      %v594 = vrot.slane %v592, 5
      %v595 = vsel %vm437, %v590, %v594
      %v596 = vshrl.u32 %v400, 16
      %v598 = vrot.slane %v596, 4
      %v599 = vor.u32 %v598, %v594
      %v600 = vrot.slane %v599, 4
      %v602 = vshll.u32 %v401, 16
      %v604 = vrot.slane %v602, 5
      %v605 = vsel %vm437, %v600, %v604
      %v607 = vshrl.u32 %v402, 16
      %v609 = vrot.slane %v607, 4
      %v610 = vshll.u32 %v402, 16
      %v612 = vrot.slane %v610, 5
      %v613 = vor.u32 %v609, %v612
      %v614 = vrot.slane %v613, 4
      %v616 = vshll.u32 %v403, 16
      %v618 = vrot.slane %v616, 5
      %v619 = vsel %vm437, %v614, %v618
      %v620 = vshrl.u32 %v403, 16
      %v622 = vrot.slane %v620, 4
      %v623 = vor.u32 %v622, %v618
      %v624 = vrot.slane %v623, 4
      %v626 = vshll.u32 %v404, 16
      %v628 = vrot.slane %v626, 5
      %v629 = vsel %vm437, %v624, %v628
      %v631 = vshrl.u32 %v405, 16
      %v633 = vrot.slane %v631, 4
      %v634 = vshll.u32 %v405, 16
      %v636 = vrot.slane %v634, 5
      %v637 = vor.u32 %v633, %v636
      %v638 = vrot.slane %v637, 4
      %v640 = vshll.u32 %v406, 16
      %v642 = vrot.slane %v640, 5
      %v643 = vsel %vm437, %v638, %v642
      %v644 = vshrl.u32 %v406, 16
      %v646 = vrot.slane %v644, 4
      %v647 = vor.u32 %v646, %v642
      %v648 = vrot.slane %v647, 4
      %v650 = vshll.u32 %v407, 16
      %v652 = vrot.slane %v650, 5
      %v653 = vsel %vm437, %v648, %v652
      %v655 = vshrl.u32 %v408, 16
      %v657 = vrot.slane %v655, 4
      %v658 = vshll.u32 %v408, 16
      %v660 = vrot.slane %v658, 5
      %v661 = vor.u32 %v657, %v660
      %v662 = vrot.slane %v661, 4
      %v664 = vshll.u32 %v409, 16
      %v666 = vrot.slane %v664, 5
      %v667 = vsel %vm437, %v662, %v666
      %v668 = vshrl.u32 %v409, 16
      %v670 = vrot.slane %v668, 4
      %v671 = vor.u32 %v670, %v666
      %v672 = vrot.slane %v671, 4
      %v674 = vshll.u32 %v410, 16
      %v676 = vrot.slane %v674, 5
      %v677 = vsel %vm437, %v672, %v676
      %v679 = vshrl.u32 %v411, 16
      %v681 = vrot.slane %v679, 4
      %v682 = vshll.u32 %v411, 16
      %v684 = vrot.slane %v682, 5
      %v685 = vor.u32 %v681, %v684
      %v686 = vrot.slane %v685, 4
      %v688 = vshll.u32 %v412, 16
      %v690 = vrot.slane %v688, 5
      %v691 = vsel %vm437, %v686, %v690
      %v692 = vshrl.u32 %v412, 16
      %v694 = vrot.slane %v692, 4
      %v695 = vor.u32 %v694, %v690
      %v696 = vrot.slane %v695, 4
      %v698 = vshll.u32 %v413, 16
      %v700 = vrot.slane %v698, 5
      %v701 = vsel %vm437, %v696, %v700
      %v703 = vshrl.u32 %v414, 16
      %v705 = vrot.slane %v703, 4
      %v706 = vshll.u32 %v414, 16
      %v708 = vrot.slane %v706, 5
      %v709 = vor.u32 %v705, %v708
      %v710 = vrot.slane %v709, 4
      %v712 = vshll.u32 %v415, 16
      %v714 = vrot.slane %v712, 5
      %v715 = vsel %vm437, %v710, %v714
      %v716 = vshrl.u32 %v415, 16
      %v718 = vrot.slane %v716, 4
      %v719 = vor.u32 %v718, %v714
      %v720 = vrot.slane %v719, 4
      %v722 = vshll.u32 %v416, 16
      %v724 = vrot.slane %v722, 5
      %v725 = vsel %vm437, %v720, %v724
      %v727 = vshrl.u32 %v417, 16
      %v729 = vrot.slane %v727, 4
      %v730 = vshll.u32 %v417, 16
      %v732 = vrot.slane %v730, 5
      %v733 = vor.u32 %v729, %v732
      %v734 = vrot.slane %v733, 4
      %v736 = vshll.u32 %v418, 16
      %v738 = vrot.slane %v736, 5
      %v739 = vsel %vm437, %v734, %v738
      %v740 = vshrl.u32 %v418, 16
      %v742 = vrot.slane %v740, 4
      %v743 = vor.u32 %v742, %v738
      %v744 = vrot.slane %v743, 4
      %v746 = vshll.u32 %v419, 16
      %v748 = vrot.slane %v746, 5
      %v749 = vsel %vm437, %v744, %v748
      %v751 = vshrl.u32 %v420, 16
      %v753 = vrot.slane %v751, 4
      %v754 = vshll.u32 %v420, 16
      %v756 = vrot.slane %v754, 5
      %v757 = vor.u32 %v753, %v756
      %v758 = vrot.slane %v757, 4
      %v760 = vshll.u32 %v421, 16
      %v762 = vrot.slane %v760, 5
      %v763 = vsel %vm437, %v758, %v762
      %v764 = vshrl.u32 %v421, 16
      %v766 = vrot.slane %v764, 4
      %v767 = vor.u32 %v766, %v762
      %v768 = vrot.slane %v767, 4
      %v770 = vshll.u32 %v422, 16
      %v772 = vrot.slane %v770, 5
      %v773 = vsel %vm437, %v768, %v772
      %v775 = vshrl.u32 %v423, 16
      %v777 = vrot.slane %v775, 4
      %v778 = vshll.u32 %v423, 16
      %v780 = vrot.slane %v778, 5
      %v781 = vor.u32 %v777, %v780
      %v782 = vrot.slane %v781, 4
      %v784 = vshll.u32 %v424, 16
      %v786 = vrot.slane %v784, 5
      %v787 = vsel %vm437, %v782, %v786
      %v788 = vshrl.u32 %v424, 16
      %v790 = vrot.slane %v788, 4
      %v791 = vor.u32 %v790, %v786
      %v792 = vrot.slane %v791, 4
      %v794 = vshll.u32 %v425, 16
      %v796 = vrot.slane %v794, 5
      %v797 = vsel %vm437, %v792, %v796
      %v799 = vshrl.u32 %v426, 16
      %v801 = vrot.slane %v799, 4
      %v802 = vshll.u32 %v426, 16
      %v804 = vrot.slane %v802, 5
      %v805 = vor.u32 %v801, %v804
      %v806 = vrot.slane %v805, 4
      %v808 = vshll.u32 %v427, 16
      %v810 = vrot.slane %v808, 5
      %v811 = vsel %vm437, %v806, %v810
      %v812 = vshrl.u32 %v427, 16
      %v814 = vrot.slane %v812, 4
      %v815 = vor.u32 %v814, %v810
      %v816 = vrot.slane %v815, 4
      %v818 = vshll.u32 %v428, 16
      %v820 = vrot.slane %v818, 5
      %v821 = vsel %vm437, %v816, %v820
      %vm870 = vcmask 1042432
      %vm871 = vcmask 1046532
      %vm872 = vmor %vm870, %vm871
      %v873 = vrot.slane %v381, 5
      %v874 = vrot.slane %v873, 4
      %v875 = vrot.slane %v382, 5
      %v876 = vsel %vm872, %v874, %v875
      %v877 = vrot.slane %v875, 4
      %v878 = vrot.slane %v383, 5
      %v879 = vsel %vm872, %v877, %v878
      %v880 = vrot.slane %v384, 5
      %v881 = vrot.slane %v880, 4
      %v882 = vrot.slane %v385, 5
      %v883 = vsel %vm872, %v881, %v882
      %v884 = vrot.slane %v882, 4
      %v885 = vrot.slane %v386, 5
      %v886 = vsel %vm872, %v884, %v885
      %v887 = vrot.slane %v387, 5
      %v888 = vrot.slane %v887, 4
      %v889 = vrot.slane %v388, 5
      %v890 = vsel %vm872, %v888, %v889
      %v891 = vrot.slane %v889, 4
      %v892 = vrot.slane %v389, 5
      %v893 = vsel %vm872, %v891, %v892
      %v894 = vrot.slane %v390, 5
      %v895 = vrot.slane %v894, 4
      %v896 = vrot.slane %v391, 5
      %v897 = vsel %vm872, %v895, %v896
      %v898 = vrot.slane %v896, 4
      %v899 = vrot.slane %v392, 5
      %v900 = vsel %vm872, %v898, %v899
      %v901 = vrot.slane %v393, 5
      %v902 = vrot.slane %v901, 4
      %v903 = vrot.slane %v394, 5
      %v904 = vsel %vm872, %v902, %v903
      %v905 = vrot.slane %v903, 4
      %v906 = vrot.slane %v395, 5
      %v907 = vsel %vm872, %v905, %v906
      %v908 = vrot.slane %v396, 5
      %v909 = vrot.slane %v908, 4
      %v910 = vrot.slane %v397, 5
      %v911 = vsel %vm872, %v909, %v910
      %v912 = vrot.slane %v910, 4
      %v913 = vrot.slane %v398, 5
      %v914 = vsel %vm872, %v912, %v913
      %v915 = vrot.slane %v399, 5
      %v916 = vrot.slane %v915, 4
      %v917 = vrot.slane %v400, 5
      %v918 = vsel %vm872, %v916, %v917
      %v919 = vrot.slane %v917, 4
      %v920 = vrot.slane %v401, 5
      %v921 = vsel %vm872, %v919, %v920
      %v922 = vrot.slane %v402, 5
      %v923 = vrot.slane %v922, 4
      %v924 = vrot.slane %v403, 5
      %v925 = vsel %vm872, %v923, %v924
      %v926 = vrot.slane %v924, 4
      %v927 = vrot.slane %v404, 5
      %v928 = vsel %vm872, %v926, %v927
      %v929 = vrot.slane %v405, 5
      %v930 = vrot.slane %v929, 4
      %v931 = vrot.slane %v406, 5
      %v932 = vsel %vm872, %v930, %v931
      %v933 = vrot.slane %v931, 4
      %v934 = vrot.slane %v407, 5
      %v935 = vsel %vm872, %v933, %v934
      %v936 = vrot.slane %v408, 5
      %v937 = vrot.slane %v936, 4
      %v938 = vrot.slane %v409, 5
      %v939 = vsel %vm872, %v937, %v938
      %v940 = vrot.slane %v938, 4
      %v941 = vrot.slane %v410, 5
      %v942 = vsel %vm872, %v940, %v941
      %v943 = vrot.slane %v411, 5
      %v944 = vrot.slane %v943, 4
      %v945 = vrot.slane %v412, 5
      %v946 = vsel %vm872, %v944, %v945
      %v947 = vrot.slane %v945, 4
      %v948 = vrot.slane %v413, 5
      %v949 = vsel %vm872, %v947, %v948
      %v950 = vrot.slane %v414, 5
      %v951 = vrot.slane %v950, 4
      %v952 = vrot.slane %v415, 5
      %v953 = vsel %vm872, %v951, %v952
      %v954 = vrot.slane %v952, 4
      %v955 = vrot.slane %v416, 5
      %v956 = vsel %vm872, %v954, %v955
      %v957 = vrot.slane %v417, 5
      %v958 = vrot.slane %v957, 4
      %v959 = vrot.slane %v418, 5
      %v960 = vsel %vm872, %v958, %v959
      %v961 = vrot.slane %v959, 4
      %v962 = vrot.slane %v419, 5
      %v963 = vsel %vm872, %v961, %v962
      %v964 = vrot.slane %v420, 5
      %v965 = vrot.slane %v964, 4
      %v966 = vrot.slane %v421, 5
      %v967 = vsel %vm872, %v965, %v966
      %v968 = vrot.slane %v966, 4
      %v969 = vrot.slane %v422, 5
      %v970 = vsel %vm872, %v968, %v969
      %v971 = vrot.slane %v423, 5
      %v972 = vrot.slane %v971, 4
      %v973 = vrot.slane %v424, 5
      %v974 = vsel %vm872, %v972, %v973
      %v975 = vrot.slane %v973, 4
      %v976 = vrot.slane %v425, 5
      %v977 = vsel %vm872, %v975, %v976
      %v978 = vrot.slane %v426, 5
      %v979 = vrot.slane %v978, 4
      %v980 = vrot.slane %v427, 5
      %v981 = vsel %vm872, %v979, %v980
      %v982 = vrot.slane %v980, 4
      %v983 = vrot.slane %v428, 5
      %v984 = vsel %vm872, %v982, %v983
      %v986 = vshrl.u32 %v429, 16
      %v988 = vrot.slane %v986, 4
      %v989 = vshll.u32 %v429, 16
      %v991 = vrot.slane %v989, 5
      %v992 = vor.u32 %v988, %v991
      %v993 = vrot.slane %v992, 4
      %v995 = vshll.u32 %v430, 16
      %v997 = vrot.slane %v995, 5
      %v998 = vsel %vm437, %v993, %v997
      %v999 = vshrl.u32 %v430, 16
      %v1001 = vrot.slane %v999, 4
      %v1002 = vor.u32 %v1001, %v997
      %v1003 = vrot.slane %v1002, 4
      %v1005 = vshll.u32 %v431, 16
      %v1007 = vrot.slane %v1005, 5
      %v1008 = vsel %vm437, %v1003, %v1007
      %v1012 = vrot.slane %v429, 5
      %v1013 = vrot.slane %v1012, 4
      %v1014 = vrot.slane %v430, 5
      %v1015 = vsel %vm872, %v1013, %v1014
      %v1016 = vrot.slane %v1014, 4
      %v1017 = vrot.slane %v431, 5
      %v1018 = vsel %vm872, %v1016, %v1017
      %v1020 = vshrl.u32 %v432, 16
      %v1022 = vrot.slane %v1020, 4
      %v1023 = vshll.u32 %v432, 16
      %v1025 = vrot.slane %v1023, 5
      %v1026 = vor.u32 %v1022, %v1025
      %v1027 = vrot.slane %v1026, 4
      %v1029 = vshll.u32 %v433, 16
      %v1031 = vrot.slane %v1029, 5
      %v1032 = vsel %vm437, %v1027, %v1031
      %v1033 = vshrl.u32 %v433, 16
      %v1035 = vrot.slane %v1033, 4
      %v1036 = vor.u32 %v1035, %v1031
      %v1037 = vrot.slane %v1036, 4
      %v1039 = vshll.u32 %v434, 16
      %v1041 = vrot.slane %v1039, 5
      %v1042 = vsel %vm437, %v1037, %v1041
      %v1046 = vrot.slane %v432, 5
      %v1047 = vrot.slane %v1046, 4
      %v1048 = vrot.slane %v433, 5
      %v1049 = vsel %vm872, %v1047, %v1048
      %v1050 = vrot.slane %v1048, 4
      %v1051 = vrot.slane %v434, 5
      %v1052 = vsel %vm872, %v1050, %v1051
      %v1053 = vunpack.c.l.b16 %v381
      %v1054 = vunpack.c.l.b16 %v382
      %v1055 = vunpack.c.l.b16 %v384
      %v1056 = vunpack.c.l.b16 %v385
      %v1057 = vunpack.c.l.b16 %v387
      %v1058 = vunpack.c.l.b16 %v388
      %v1059 = vunpack.c.l.b16 %v390
      %v1060 = vunpack.c.l.b16 %v391
      %v1061 = vunpack.c.l.b16 %v393
      %v1062 = vunpack.c.l.b16 %v394
      %v1063 = vunpack.c.l.b16 %v396
      %v1064 = vunpack.c.l.b16 %v397
      %v1065 = vunpack.c.l.b16 %v399
      %v1066 = vunpack.c.l.b16 %v400
      %v1067 = vunpack.c.l.b16 %v402
      %v1068 = vunpack.c.l.b16 %v403
      %v1069 = vunpack.c.l.b16 %v405
      %v1070 = vunpack.c.l.b16 %v406
      %v1071 = vunpack.c.l.b16 %v408
      %v1072 = vunpack.c.l.b16 %v409
      %v1073 = vunpack.c.l.b16 %v411
      %v1074 = vunpack.c.l.b16 %v412
      %v1075 = vunpack.c.l.b16 %v414
      %v1076 = vunpack.c.l.b16 %v415
      %v1077 = vunpack.c.l.b16 %v417
      %v1078 = vunpack.c.l.b16 %v418
      %v1079 = vunpack.c.l.b16 %v420
      %v1080 = vunpack.c.l.b16 %v421
      %v1081 = vunpack.c.l.b16 %v423
      %v1082 = vunpack.c.l.b16 %v424
      %v1083 = vunpack.c.l.b16 %v426
      %v1084 = vunpack.c.l.b16 %v427
      %v1085 = vpack.c.b16 %v1054, %v1053
      %v1086 = vpack.c.b16 %v1056, %v1055
      %v1087 = vpack.c.b16 %v1058, %v1057
      %v1088 = vpack.c.b16 %v1060, %v1059
      %v1089 = vpack.c.b16 %v1062, %v1061
      %v1090 = vpack.c.b16 %v1064, %v1063
      %v1091 = vpack.c.b16 %v1066, %v1065
      %v1092 = vpack.c.b16 %v1068, %v1067
      %v1093 = vpack.c.b16 %v1070, %v1069
      %v1094 = vpack.c.b16 %v1072, %v1071
      %v1095 = vpack.c.b16 %v1074, %v1073
      %v1096 = vpack.c.b16 %v1076, %v1075
      %v1097 = vpack.c.b16 %v1078, %v1077
      %v1098 = vpack.c.b16 %v1080, %v1079
      %v1099 = vpack.c.b16 %v1082, %v1081
      %v1100 = vpack.c.b16 %v1084, %v1083
      %v1101 = vunpack.c.l.b16 %v451
      %v1102 = vunpack.c.l.b16 %v461
      %v1103 = vunpack.c.l.b16 %v475
      %v1104 = vunpack.c.l.b16 %v485
      %v1105 = vunpack.c.l.b16 %v499
      %v1106 = vunpack.c.l.b16 %v509
      %v1107 = vunpack.c.l.b16 %v523
      %v1108 = vunpack.c.l.b16 %v533
      %v1109 = vunpack.c.l.b16 %v547
      %v1110 = vunpack.c.l.b16 %v557
      %v1111 = vunpack.c.l.b16 %v571
      %v1112 = vunpack.c.l.b16 %v581
      %v1113 = vunpack.c.l.b16 %v595
      %v1114 = vunpack.c.l.b16 %v605
      %v1115 = vunpack.c.l.b16 %v619
      %v1116 = vunpack.c.l.b16 %v629
      %v1117 = vunpack.c.l.b16 %v643
      %v1118 = vunpack.c.l.b16 %v653
      %v1119 = vunpack.c.l.b16 %v667
      %v1120 = vunpack.c.l.b16 %v677
      %v1121 = vunpack.c.l.b16 %v691
      %v1122 = vunpack.c.l.b16 %v701
      %v1123 = vunpack.c.l.b16 %v715
      %v1124 = vunpack.c.l.b16 %v725
      %v1125 = vunpack.c.l.b16 %v739
      %v1126 = vunpack.c.l.b16 %v749
      %v1127 = vunpack.c.l.b16 %v763
      %v1128 = vunpack.c.l.b16 %v773
      %v1129 = vunpack.c.l.b16 %v787
      %v1130 = vunpack.c.l.b16 %v797
      %v1131 = vunpack.c.l.b16 %v811
      %v1132 = vunpack.c.l.b16 %v821
      %v1133 = vpack.c.b16 %v1102, %v1101
      %v1134 = vpack.c.b16 %v1104, %v1103
      %v1135 = vpack.c.b16 %v1106, %v1105
      %v1136 = vpack.c.b16 %v1108, %v1107
      %v1137 = vpack.c.b16 %v1110, %v1109
      %v1138 = vpack.c.b16 %v1112, %v1111
      %v1139 = vpack.c.b16 %v1114, %v1113
      %v1140 = vpack.c.b16 %v1116, %v1115
      %v1141 = vpack.c.b16 %v1118, %v1117
      %v1142 = vpack.c.b16 %v1120, %v1119
      %v1143 = vpack.c.b16 %v1122, %v1121
      %v1144 = vpack.c.b16 %v1124, %v1123
      %v1145 = vpack.c.b16 %v1126, %v1125
      %v1146 = vpack.c.b16 %v1128, %v1127
      %v1147 = vpack.c.b16 %v1130, %v1129
      %v1148 = vpack.c.b16 %v1132, %v1131
      %1149 = vrot.lane.b32.xlu0 %v1133, 16
      %v1150 = vpop.permute.xlu0 %1149
      %1151 = vrot.lane.b32.xlu0 %v1134, 16
      %v1152 = vpop.permute.xlu0 %1151
      %1153 = vrot.lane.b32.xlu0 %v1135, 16
      %v1154 = vpop.permute.xlu0 %1153
      %1155 = vrot.lane.b32.xlu0 %v1136, 16
      %v1156 = vpop.permute.xlu0 %1155
      %1157 = vrot.lane.b32.xlu0 %v1137, 16
      %v1158 = vpop.permute.xlu0 %1157
      %1159 = vrot.lane.b32.xlu0 %v1138, 16
      %v1160 = vpop.permute.xlu0 %1159
      %1161 = vrot.lane.b32.xlu0 %v1139, 16
      %v1162 = vpop.permute.xlu0 %1161
      %1163 = vrot.lane.b32.xlu0 %v1140, 16
      %v1164 = vpop.permute.xlu0 %1163
      %1165 = vrot.lane.b32.xlu0 %v1141, 16
      %v1166 = vpop.permute.xlu0 %1165
      %1167 = vrot.lane.b32.xlu0 %v1142, 16
      %v1168 = vpop.permute.xlu0 %1167
      %1169 = vrot.lane.b32.xlu0 %v1143, 16
      %v1170 = vpop.permute.xlu0 %1169
      %1171 = vrot.lane.b32.xlu0 %v1144, 16
      %v1172 = vpop.permute.xlu0 %1171
      %1173 = vrot.lane.b32.xlu0 %v1145, 16
      %v1174 = vpop.permute.xlu0 %1173
      %1175 = vrot.lane.b32.xlu0 %v1146, 16
      %v1176 = vpop.permute.xlu0 %1175
      %1177 = vrot.lane.b32.xlu0 %v1147, 16
      %v1178 = vpop.permute.xlu0 %1177
      %1179 = vrot.lane.b32.xlu0 %v1148, 16
      %v1180 = vpop.permute.xlu0 %1179
      %v1181 = vunpack.c.l.b16 %v876
      %v1182 = vunpack.c.l.b16 %v879
      %v1183 = vunpack.c.l.b16 %v883
      %v1184 = vunpack.c.l.b16 %v886
      %v1185 = vunpack.c.l.b16 %v890
      %v1186 = vunpack.c.l.b16 %v893
      %v1187 = vunpack.c.l.b16 %v897
      %v1188 = vunpack.c.l.b16 %v900
      %v1189 = vunpack.c.l.b16 %v904
      %v1190 = vunpack.c.l.b16 %v907
      %v1191 = vunpack.c.l.b16 %v911
      %v1192 = vunpack.c.l.b16 %v914
      %v1193 = vunpack.c.l.b16 %v918
      %v1194 = vunpack.c.l.b16 %v921
      %v1195 = vunpack.c.l.b16 %v925
      %v1196 = vunpack.c.l.b16 %v928
      %v1197 = vunpack.c.l.b16 %v932
      %v1198 = vunpack.c.l.b16 %v935
      %v1199 = vunpack.c.l.b16 %v939
      %v1200 = vunpack.c.l.b16 %v942
      %v1201 = vunpack.c.l.b16 %v946
      %v1202 = vunpack.c.l.b16 %v949
      %v1203 = vunpack.c.l.b16 %v953
      %v1204 = vunpack.c.l.b16 %v956
      %v1205 = vunpack.c.l.b16 %v960
      %v1206 = vunpack.c.l.b16 %v963
      %v1207 = vunpack.c.l.b16 %v967
      %v1208 = vunpack.c.l.b16 %v970
      %v1209 = vunpack.c.l.b16 %v974
      %v1210 = vunpack.c.l.b16 %v977
      %v1211 = vunpack.c.l.b16 %v981
      %v1212 = vunpack.c.l.b16 %v984
      %v1213 = vpack.c.b16 %v1182, %v1181
      %v1214 = vpack.c.b16 %v1184, %v1183
      %v1215 = vpack.c.b16 %v1186, %v1185
      %v1216 = vpack.c.b16 %v1188, %v1187
      %v1217 = vpack.c.b16 %v1190, %v1189
      %v1218 = vpack.c.b16 %v1192, %v1191
      %v1219 = vpack.c.b16 %v1194, %v1193
      %v1220 = vpack.c.b16 %v1196, %v1195
      %v1221 = vpack.c.b16 %v1198, %v1197
      %v1222 = vpack.c.b16 %v1200, %v1199
      %v1223 = vpack.c.b16 %v1202, %v1201
      %v1224 = vpack.c.b16 %v1204, %v1203
      %v1225 = vpack.c.b16 %v1206, %v1205
      %v1226 = vpack.c.b16 %v1208, %v1207
      %v1227 = vpack.c.b16 %v1210, %v1209
      %v1228 = vpack.c.b16 %v1212, %v1211
      %1229 = vrot.lane.b32.xlu0 %v1213, 32
      %v1230 = vpop.permute.xlu0 %1229
      %1231 = vrot.lane.b32.xlu0 %v1214, 32
      %v1232 = vpop.permute.xlu0 %1231
      %1233 = vrot.lane.b32.xlu0 %v1215, 32
      %v1234 = vpop.permute.xlu0 %1233
      %1235 = vrot.lane.b32.xlu0 %v1216, 32
      %v1236 = vpop.permute.xlu0 %1235
      %1237 = vrot.lane.b32.xlu0 %v1217, 32
      %v1238 = vpop.permute.xlu0 %1237
      %1239 = vrot.lane.b32.xlu0 %v1218, 32
      %v1240 = vpop.permute.xlu0 %1239
      %1241 = vrot.lane.b32.xlu0 %v1219, 32
      %v1242 = vpop.permute.xlu0 %1241
      %1243 = vrot.lane.b32.xlu0 %v1220, 32
      %v1244 = vpop.permute.xlu0 %1243
      %1245 = vrot.lane.b32.xlu0 %v1221, 32
      %v1246 = vpop.permute.xlu0 %1245
      %1247 = vrot.lane.b32.xlu0 %v1222, 32
      %v1248 = vpop.permute.xlu0 %1247
      %1249 = vrot.lane.b32.xlu0 %v1223, 32
      %v1250 = vpop.permute.xlu0 %1249
      %1251 = vrot.lane.b32.xlu0 %v1224, 32
      %v1252 = vpop.permute.xlu0 %1251
      %1253 = vrot.lane.b32.xlu0 %v1225, 32
      %v1254 = vpop.permute.xlu0 %1253
      %1255 = vrot.lane.b32.xlu0 %v1226, 32
      %v1256 = vpop.permute.xlu0 %1255
      %1257 = vrot.lane.b32.xlu0 %v1227, 32
      %v1258 = vpop.permute.xlu0 %1257
      %1259 = vrot.lane.b32.xlu0 %v1228, 32
      %v1260 = vpop.permute.xlu0 %1259
      %v1261 = vunpack.c.l.b16 %v429
      %v1262 = vunpack.c.l.b16 %v430
      %v1263 = vpack.c.b16 %v1262, %v1261
      %1264 = vrot.lane.b32.xlu0 %v1086, 48
      %v1265 = vpop.permute.xlu0 %1264
      %1266 = vrot.lane.b32.xlu0 %v1087, 48
      %v1267 = vpop.permute.xlu0 %1266
      %1268 = vrot.lane.b32.xlu0 %v1088, 48
      %v1269 = vpop.permute.xlu0 %1268
      %1270 = vrot.lane.b32.xlu0 %v1089, 48
      %v1271 = vpop.permute.xlu0 %1270
      %1272 = vrot.lane.b32.xlu0 %v1090, 48
      %v1273 = vpop.permute.xlu0 %1272
      %1274 = vrot.lane.b32.xlu0 %v1091, 48
      %v1275 = vpop.permute.xlu0 %1274
      %1276 = vrot.lane.b32.xlu0 %v1092, 48
      %v1277 = vpop.permute.xlu0 %1276
      %1278 = vrot.lane.b32.xlu0 %v1093, 48
      %v1279 = vpop.permute.xlu0 %1278
      %1280 = vrot.lane.b32.xlu0 %v1094, 48
      %v1281 = vpop.permute.xlu0 %1280
      %1282 = vrot.lane.b32.xlu0 %v1095, 48
      %v1283 = vpop.permute.xlu0 %1282
      %1284 = vrot.lane.b32.xlu0 %v1096, 48
      %v1285 = vpop.permute.xlu0 %1284
      %1286 = vrot.lane.b32.xlu0 %v1097, 48
      %v1287 = vpop.permute.xlu0 %1286
      %1288 = vrot.lane.b32.xlu0 %v1098, 48
      %v1289 = vpop.permute.xlu0 %1288
      %1290 = vrot.lane.b32.xlu0 %v1099, 48
      %v1291 = vpop.permute.xlu0 %1290
      %1292 = vrot.lane.b32.xlu0 %v1100, 48
      %v1293 = vpop.permute.xlu0 %1292
      %1294 = vrot.lane.b32.xlu0 %v1263, 48
      %v1295 = vpop.permute.xlu0 %1294
      %v1296 = vunpack.c.l.b16 %v998
      %v1297 = vunpack.c.l.b16 %v1008
      %v1298 = vpack.c.b16 %v1297, %v1296
      %1299 = vrot.lane.b32.xlu0 %v1134, 64
      %v1300 = vpop.permute.xlu0 %1299
      %1301 = vrot.lane.b32.xlu0 %v1135, 64
      %v1302 = vpop.permute.xlu0 %1301
      %1303 = vrot.lane.b32.xlu0 %v1136, 64
      %v1304 = vpop.permute.xlu0 %1303
      %1305 = vrot.lane.b32.xlu0 %v1137, 64
      %v1306 = vpop.permute.xlu0 %1305
      %1307 = vrot.lane.b32.xlu0 %v1138, 64
      %v1308 = vpop.permute.xlu0 %1307
      %1309 = vrot.lane.b32.xlu0 %v1139, 64
      %v1310 = vpop.permute.xlu0 %1309
      %1311 = vrot.lane.b32.xlu0 %v1140, 64
      %v1312 = vpop.permute.xlu0 %1311
      %1313 = vrot.lane.b32.xlu0 %v1141, 64
      %v1314 = vpop.permute.xlu0 %1313
      %1315 = vrot.lane.b32.xlu0 %v1142, 64
      %v1316 = vpop.permute.xlu0 %1315
      %1317 = vrot.lane.b32.xlu0 %v1143, 64
      %v1318 = vpop.permute.xlu0 %1317
      %1319 = vrot.lane.b32.xlu0 %v1144, 64
      %v1320 = vpop.permute.xlu0 %1319
      %1321 = vrot.lane.b32.xlu0 %v1145, 64
      %v1322 = vpop.permute.xlu0 %1321
      %1323 = vrot.lane.b32.xlu0 %v1146, 64
      %v1324 = vpop.permute.xlu0 %1323
      %1325 = vrot.lane.b32.xlu0 %v1147, 64
      %v1326 = vpop.permute.xlu0 %1325
      %1327 = vrot.lane.b32.xlu0 %v1148, 64
      %v1328 = vpop.permute.xlu0 %1327
      %1329 = vrot.lane.b32.xlu0 %v1298, 64
      %v1330 = vpop.permute.xlu0 %1329
      %v1331 = vunpack.c.l.b16 %v1015
      %v1332 = vunpack.c.l.b16 %v1018
      %v1333 = vpack.c.b16 %v1332, %v1331
      %1334 = vrot.lane.b32.xlu0 %v1214, 80
      %v1335 = vpop.permute.xlu0 %1334
      %1336 = vrot.lane.b32.xlu0 %v1215, 80
      %v1337 = vpop.permute.xlu0 %1336
      %1338 = vrot.lane.b32.xlu0 %v1216, 80
      %v1339 = vpop.permute.xlu0 %1338
      %1340 = vrot.lane.b32.xlu0 %v1217, 80
      %v1341 = vpop.permute.xlu0 %1340
      %1342 = vrot.lane.b32.xlu0 %v1218, 80
      %v1343 = vpop.permute.xlu0 %1342
      %1344 = vrot.lane.b32.xlu0 %v1219, 80
      %v1345 = vpop.permute.xlu0 %1344
      %1346 = vrot.lane.b32.xlu0 %v1220, 80
      %v1347 = vpop.permute.xlu0 %1346
      %1348 = vrot.lane.b32.xlu0 %v1221, 80
      %v1349 = vpop.permute.xlu0 %1348
      %1350 = vrot.lane.b32.xlu0 %v1222, 80
      %v1351 = vpop.permute.xlu0 %1350
      %1352 = vrot.lane.b32.xlu0 %v1223, 80
      %v1353 = vpop.permute.xlu0 %1352
      %1354 = vrot.lane.b32.xlu0 %v1224, 80
      %v1355 = vpop.permute.xlu0 %1354
      %1356 = vrot.lane.b32.xlu0 %v1225, 80
      %v1357 = vpop.permute.xlu0 %1356
      %1358 = vrot.lane.b32.xlu0 %v1226, 80
      %v1359 = vpop.permute.xlu0 %1358
      %1360 = vrot.lane.b32.xlu0 %v1227, 80
      %v1361 = vpop.permute.xlu0 %1360
      %1362 = vrot.lane.b32.xlu0 %v1228, 80
      %v1363 = vpop.permute.xlu0 %1362
      %1364 = vrot.lane.b32.xlu0 %v1333, 80
      %v1365 = vpop.permute.xlu0 %1364
      %v1366 = vunpack.c.l.b16 %v432
      %v1367 = vunpack.c.l.b16 %v433
      %v1368 = vpack.c.b16 %v1367, %v1366
      %1369 = vrot.lane.b32.xlu0 %v1087, 96
      %v1370 = vpop.permute.xlu0 %1369
      %1371 = vrot.lane.b32.xlu0 %v1088, 96
      %v1372 = vpop.permute.xlu0 %1371
      %1373 = vrot.lane.b32.xlu0 %v1089, 96
      %v1374 = vpop.permute.xlu0 %1373
      %1375 = vrot.lane.b32.xlu0 %v1090, 96
      %v1376 = vpop.permute.xlu0 %1375
      %1377 = vrot.lane.b32.xlu0 %v1091, 96
      %v1378 = vpop.permute.xlu0 %1377
      %1379 = vrot.lane.b32.xlu0 %v1092, 96
      %v1380 = vpop.permute.xlu0 %1379
      %1381 = vrot.lane.b32.xlu0 %v1093, 96
      %v1382 = vpop.permute.xlu0 %1381
      %1383 = vrot.lane.b32.xlu0 %v1094, 96
      %v1384 = vpop.permute.xlu0 %1383
      %1385 = vrot.lane.b32.xlu0 %v1095, 96
      %v1386 = vpop.permute.xlu0 %1385
      %1387 = vrot.lane.b32.xlu0 %v1096, 96
      %v1388 = vpop.permute.xlu0 %1387
      %1389 = vrot.lane.b32.xlu0 %v1097, 96
      %v1390 = vpop.permute.xlu0 %1389
      %1391 = vrot.lane.b32.xlu0 %v1098, 96
      %v1392 = vpop.permute.xlu0 %1391
      %1393 = vrot.lane.b32.xlu0 %v1099, 96
      %v1394 = vpop.permute.xlu0 %1393
      %1395 = vrot.lane.b32.xlu0 %v1100, 96
      %v1396 = vpop.permute.xlu0 %1395
      %1397 = vrot.lane.b32.xlu0 %v1263, 96
      %v1398 = vpop.permute.xlu0 %1397
      %1399 = vrot.lane.b32.xlu0 %v1368, 96
      %v1400 = vpop.permute.xlu0 %1399
      %v1401 = vunpack.c.l.b16 %v1032
      %v1402 = vunpack.c.l.b16 %v1042
      %v1403 = vpack.c.b16 %v1402, %v1401
      %1404 = vrot.lane.b32.xlu0 %v1135, 112
      %v1405 = vpop.permute.xlu0 %1404
      %1406 = vrot.lane.b32.xlu0 %v1136, 112
      %v1407 = vpop.permute.xlu0 %1406
      %1408 = vrot.lane.b32.xlu0 %v1137, 112
      %v1409 = vpop.permute.xlu0 %1408
      %1410 = vrot.lane.b32.xlu0 %v1138, 112
      %v1411 = vpop.permute.xlu0 %1410
      %1412 = vrot.lane.b32.xlu0 %v1139, 112
      %v1413 = vpop.permute.xlu0 %1412
      %1414 = vrot.lane.b32.xlu0 %v1140, 112
      %v1415 = vpop.permute.xlu0 %1414
      %1416 = vrot.lane.b32.xlu0 %v1141, 112
      %v1417 = vpop.permute.xlu0 %1416
      %1418 = vrot.lane.b32.xlu0 %v1142, 112
      %v1419 = vpop.permute.xlu0 %1418
      %1420 = vrot.lane.b32.xlu0 %v1143, 112
      %v1421 = vpop.permute.xlu0 %1420
      %1422 = vrot.lane.b32.xlu0 %v1144, 112
      %v1423 = vpop.permute.xlu0 %1422
      %1424 = vrot.lane.b32.xlu0 %v1145, 112
      %v1425 = vpop.permute.xlu0 %1424
      %1426 = vrot.lane.b32.xlu0 %v1146, 112
      %v1427 = vpop.permute.xlu0 %1426
      %1428 = vrot.lane.b32.xlu0 %v1147, 112
      %v1429 = vpop.permute.xlu0 %1428
      %1430 = vrot.lane.b32.xlu0 %v1148, 112
      %v1431 = vpop.permute.xlu0 %1430
      %1432 = vrot.lane.b32.xlu0 %v1298, 112
      %v1433 = vpop.permute.xlu0 %1432
      %1434 = vrot.lane.b32.xlu0 %v1403, 112
      %v1435 = vpop.permute.xlu0 %1434
      %v1436 = vunpack.c.l.b16 %v1049
      %v1437 = vunpack.c.l.b16 %v1052
      %v1438 = vpack.c.b16 %v1437, %v1436
      %vm1439 = vcmask 130048
      %v1442 = vsel %vm1439, %v1085, %v1150
      %v1445 = vsel %vm1439, %v1086, %v1152
      %v1448 = vsel %vm1439, %v1087, %v1154
      %v1451 = vsel %vm1439, %v1088, %v1156
      %v1454 = vsel %vm1439, %v1089, %v1158
      %v1457 = vsel %vm1439, %v1090, %v1160
      %v1460 = vsel %vm1439, %v1091, %v1162
      %v1463 = vsel %vm1439, %v1092, %v1164
      %v1466 = vsel %vm1439, %v1093, %v1166
      %v1469 = vsel %vm1439, %v1094, %v1168
      %v1472 = vsel %vm1439, %v1095, %v1170
      %v1475 = vsel %vm1439, %v1096, %v1172
      %v1478 = vsel %vm1439, %v1097, %v1174
      %v1481 = vsel %vm1439, %v1098, %v1176
      %v1484 = vsel %vm1439, %v1099, %v1178
      %v1487 = vsel %vm1439, %v1100, %v1180
      %vm1488 = vcmask 261120
      %v1490 = vsel %vm1488, %v1442, %v1230
      %v1492 = vsel %vm1488, %v1445, %v1232
      %v1494 = vsel %vm1488, %v1448, %v1234
      %v1496 = vsel %vm1488, %v1451, %v1236
      %v1498 = vsel %vm1488, %v1454, %v1238
      %v1500 = vsel %vm1488, %v1457, %v1240
      %v1502 = vsel %vm1488, %v1460, %v1242
      %v1504 = vsel %vm1488, %v1463, %v1244
      %v1506 = vsel %vm1488, %v1466, %v1246
      %v1508 = vsel %vm1488, %v1469, %v1248
      %v1510 = vsel %vm1488, %v1472, %v1250
      %v1512 = vsel %vm1488, %v1475, %v1252
      %v1514 = vsel %vm1488, %v1478, %v1254
      %v1516 = vsel %vm1488, %v1481, %v1256
      %v1518 = vsel %vm1488, %v1484, %v1258
      %v1520 = vsel %vm1488, %v1487, %v1260
      %vm1521 = vcmask 392192
      %v1523 = vsel %vm1521, %v1490, %v1265
      %v1525 = vsel %vm1521, %v1492, %v1267
      %v1527 = vsel %vm1521, %v1494, %v1269
      %v1529 = vsel %vm1521, %v1496, %v1271
      %v1531 = vsel %vm1521, %v1498, %v1273
      %v1533 = vsel %vm1521, %v1500, %v1275
      %v1535 = vsel %vm1521, %v1502, %v1277
      %v1537 = vsel %vm1521, %v1504, %v1279
      %v1539 = vsel %vm1521, %v1506, %v1281
      %v1541 = vsel %vm1521, %v1508, %v1283
      %v1543 = vsel %vm1521, %v1510, %v1285
      %v1545 = vsel %vm1521, %v1512, %v1287
      %v1547 = vsel %vm1521, %v1514, %v1289
      %v1549 = vsel %vm1521, %v1516, %v1291
      %v1551 = vsel %vm1521, %v1518, %v1293
      %v1553 = vsel %vm1521, %v1520, %v1295
      %vm1554 = vcmask 523264
      %v1556 = vsel %vm1554, %v1523, %v1300
      %v1558 = vsel %vm1554, %v1525, %v1302
      %v1560 = vsel %vm1554, %v1527, %v1304
      %v1562 = vsel %vm1554, %v1529, %v1306
      %v1564 = vsel %vm1554, %v1531, %v1308
      %v1566 = vsel %vm1554, %v1533, %v1310
      %v1568 = vsel %vm1554, %v1535, %v1312
      %v1570 = vsel %vm1554, %v1537, %v1314
      %v1572 = vsel %vm1554, %v1539, %v1316
      %v1574 = vsel %vm1554, %v1541, %v1318
      %v1576 = vsel %vm1554, %v1543, %v1320
      %v1578 = vsel %vm1554, %v1545, %v1322
      %v1580 = vsel %vm1554, %v1547, %v1324
      %v1582 = vsel %vm1554, %v1549, %v1326
      %v1584 = vsel %vm1554, %v1551, %v1328
      %v1586 = vsel %vm1554, %v1553, %v1330
      %vm1587 = vcmask 654336
      %v1589 = vsel %vm1587, %v1556, %v1335
      %v1591 = vsel %vm1587, %v1558, %v1337
      %v1593 = vsel %vm1587, %v1560, %v1339
      %v1595 = vsel %vm1587, %v1562, %v1341
      %v1597 = vsel %vm1587, %v1564, %v1343
      %v1599 = vsel %vm1587, %v1566, %v1345
      %v1601 = vsel %vm1587, %v1568, %v1347
      %v1603 = vsel %vm1587, %v1570, %v1349
      %v1605 = vsel %vm1587, %v1572, %v1351
      %v1607 = vsel %vm1587, %v1574, %v1353
      %v1609 = vsel %vm1587, %v1576, %v1355
      %v1611 = vsel %vm1587, %v1578, %v1357
      %v1613 = vsel %vm1587, %v1580, %v1359
      %v1615 = vsel %vm1587, %v1582, %v1361
      %v1617 = vsel %vm1587, %v1584, %v1363
      %v1619 = vsel %vm1587, %v1586, %v1365
      %vm1620 = vcmask 785408
      %v1622 = vsel %vm1620, %v1589, %v1370
      %v1624 = vsel %vm1620, %v1591, %v1372
      %v1626 = vsel %vm1620, %v1593, %v1374
      %v1628 = vsel %vm1620, %v1595, %v1376
      %v1630 = vsel %vm1620, %v1597, %v1378
      %v1632 = vsel %vm1620, %v1599, %v1380
      %v1634 = vsel %vm1620, %v1601, %v1382
      %v1636 = vsel %vm1620, %v1603, %v1384
      %v1638 = vsel %vm1620, %v1605, %v1386
      %v1640 = vsel %vm1620, %v1607, %v1388
      %v1642 = vsel %vm1620, %v1609, %v1390
      %v1644 = vsel %vm1620, %v1611, %v1392
      %v1646 = vsel %vm1620, %v1613, %v1394
      %v1648 = vsel %vm1620, %v1615, %v1396
      %v1650 = vsel %vm1620, %v1617, %v1398
      %v1652 = vsel %vm1620, %v1619, %v1400
      %vm1653 = vcmask 916480
      %v1655 = vsel %vm1653, %v1622, %v1405
      %v1658 = vsel %vm1653, %v1624, %v1407
      %v1661 = vsel %vm1653, %v1626, %v1409
      %v1664 = vsel %vm1653, %v1628, %v1411
      %v1667 = vsel %vm1653, %v1630, %v1413
      %v1670 = vsel %vm1653, %v1632, %v1415
      %v1673 = vsel %vm1653, %v1634, %v1417
      %v1676 = vsel %vm1653, %v1636, %v1419
      %v1679 = vsel %vm1653, %v1638, %v1421
      %v1682 = vsel %vm1653, %v1640, %v1423
      %v1685 = vsel %vm1653, %v1642, %v1425
      %v1688 = vsel %vm1653, %v1644, %v1427
      %v1691 = vsel %vm1653, %v1646, %v1429
      %v1694 = vsel %vm1653, %v1648, %v1431
      %v1697 = vsel %vm1653, %v1650, %v1433
      %v1700 = vsel %vm1653, %v1652, %v1435
      %v1702 = vld [vmem:[%s2] sm:$0xf]
      %v1703 = vld [vmem:[%s2 + $0x4] sm:$0xf]
      %v1704 = vld [vmem:[%s2 + $0x8] sm:$0xf]
      %v1705 = vld [vmem:[%s2 + $0xc] sm:$0xf]
      %v1706 = vld [vmem:[%s2 + $0x10] sm:$0xf]
      %v1707 = vld [vmem:[%s2 + $0x14] sm:$0xf]
      %v1708 = vld [vmem:[%s2 + $0x18] sm:$0xf]
      %v1709 = vld [vmem:[%s2 + $0x1c] sm:$0xf]
      %v1710 = vld [vmem:[%s2 + $0x20] sm:$0xf]
      %v1711 = vld [vmem:[%s2 + $0x24] sm:$0xf]
      %v1712 = vld [vmem:[%s2 + $0x28] sm:$0xf]
      %v1713 = vld [vmem:[%s2 + $0x2c] sm:$0xf]
      %v1714 = vld [vmem:[%s2 + $0x30] sm:$0xf]
      %v1715 = vld [vmem:[%s2 + $0x34] sm:$0xf]
      %v1716 = vld [vmem:[%s2 + $0x38] sm:$0xf]
      %v1717 = vld [vmem:[%s2 + $0x3c] sm:$0xf]
      %v1718 = vld [vmem:[%s2 + $0x40] sm:$0xf]
      %v1719 = vld [vmem:[%s2 + $0x44] sm:$0xf]
      %v1720 = vld [vmem:[%s3] sm:$0x1]
      %v1722 = vperm.slane %v1720, 0
      %v1742 = vunpack.c.l.b16 %v1702
      %v1743 = vunpack.c.l.b16 %v1703
      %v1744 = vunpack.c.l.b16 %v1704
      %v1745 = vunpack.c.l.b16 %v1705
      %v1746 = vunpack.c.l.b16 %v1706
      %v1747 = vunpack.c.l.b16 %v1707
      %v1748 = vunpack.c.l.b16 %v1708
      %v1749 = vunpack.c.l.b16 %v1709
      %v1750 = vunpack.c.l.b16 %v1710
      %v1751 = vunpack.c.l.b16 %v1711
      %v1752 = vunpack.c.l.b16 %v1712
      %v1753 = vunpack.c.l.b16 %v1713
      %v1754 = vunpack.c.l.b16 %v1714
      %v1755 = vunpack.c.l.b16 %v1715
      %v1756 = vunpack.c.l.b16 %v1716
      %v1757 = vunpack.c.l.b16 %v1717
      %v1758 = vunpack.c.l.b16 %v1718
      %v1759 = vunpack.c.l.b16 %v1719
      %v1760 = vpack.c.b16 %v1743, %v1742
      %v1761 = vpack.c.b16 %v1745, %v1744
      %v1762 = vpack.c.b16 %v1747, %v1746
      %v1763 = vpack.c.b16 %v1749, %v1748
      %v1764 = vpack.c.b16 %v1751, %v1750
      %v1765 = vpack.c.b16 %v1753, %v1752
      %v1766 = vpack.c.b16 %v1755, %v1754
      %v1767 = vpack.c.b16 %v1757, %v1756
      %v1768 = vpack.c.b16 %v1759, %v1758
      %v1779 = vsel %vm1439, %v1215, 0
      %v1782 = vsel %vm1439, %v1216, 0
      %v1785 = vsel %vm1439, %v1217, 0
      %v1788 = vsel %vm1439, %v1218, 0
      %v1791 = vsel %vm1439, %v1219, 0
      %v1794 = vsel %vm1439, %v1220, 0
      %v1797 = vsel %vm1439, %v1221, 0
      %v1800 = vsel %vm1439, %v1222, 0
      %v1803 = vsel %vm1439, %v1223, 0
      %v1806 = vsel %vm1439, %v1224, 0
      %v1809 = vsel %vm1439, %v1225, 0
      %v1812 = vsel %vm1439, %v1226, 0
      %v1815 = vsel %vm1439, %v1227, 0
      %v1818 = vsel %vm1439, %v1228, 0
      %v1821 = vsel %vm1439, %v1333, 0
      %v1824 = vsel %vm1439, %v1438, 0
      %1826 = vmatpush.bf16.msra.mxu0 %v1767
      %1827 = vmatpush.bf16.msra.mxu0 %v1766
      %1828 = vmatpush.bf16.msra.mxu0 %v1765
      %1829 = vmatpush.bf16.msra.mxu0 %v1764
      %1830 = vmatpush.bf16.msra.mxu0 %v1763
      %1831 = vmatpush.bf16.msra.mxu0 %v1762
      %1832 = vmatpush.bf16.msra.mxu0 %v1761
      %1833 = vmatpush.bf16.msra.mxu0 %v1760
      %1834 = vmatmul.bf16.gmra.mxu0 %v1655
      %v1835 = vpop.f32.mrf.mxu0
      %v1836 = vadd.f32 %v1722, %v1835
      %v1837 = vpop.f32.mrf.mxu0
      %v1838 = vadd.f32 %v1722, %v1837
      %1839 = vmatmul.bf16.gmra.mxu0 %v1658
      %v1840 = vpop.f32.mrf.mxu0
      %v1841 = vadd.f32 %v1722, %v1840
      %v1842 = vpop.f32.mrf.mxu0
      %v1843 = vadd.f32 %v1722, %v1842
      %1844 = vmatmul.bf16.gmra.mxu0 %v1661
      %v1845 = vpop.f32.mrf.mxu0
      %v1846 = vadd.f32 %v1722, %v1845
      %v1847 = vpop.f32.mrf.mxu0
      %v1848 = vadd.f32 %v1722, %v1847
      %1849 = vmatmul.bf16.gmra.mxu0 %v1664
      %v1850 = vpop.f32.mrf.mxu0
      %v1851 = vadd.f32 %v1722, %v1850
      %v1852 = vpop.f32.mrf.mxu0
      %v1853 = vadd.f32 %v1722, %v1852
      %1854 = vmatmul.bf16.gmra.mxu0 %v1667
      %v1855 = vpop.f32.mrf.mxu0
      %v1856 = vadd.f32 %v1722, %v1855
      %v1857 = vpop.f32.mrf.mxu0
      %v1858 = vadd.f32 %v1722, %v1857
      %1859 = vmatmul.bf16.gmra.mxu0 %v1670
      %v1860 = vpop.f32.mrf.mxu0
      %v1861 = vadd.f32 %v1722, %v1860
      %v1862 = vpop.f32.mrf.mxu0
      %v1863 = vadd.f32 %v1722, %v1862
      %1864 = vmatmul.bf16.gmra.mxu0 %v1673
      %v1865 = vpop.f32.mrf.mxu0
      %v1866 = vadd.f32 %v1722, %v1865
      %v1867 = vpop.f32.mrf.mxu0
      %v1868 = vadd.f32 %v1722, %v1867
      %1869 = vmatmul.bf16.gmra.mxu0 %v1676
      %v1870 = vpop.f32.mrf.mxu0
      %v1871 = vadd.f32 %v1722, %v1870
      %v1872 = vpop.f32.mrf.mxu0
      %v1873 = vadd.f32 %v1722, %v1872
      %1874 = vmatmul.bf16.gmra.mxu0 %v1679
      %v1875 = vpop.f32.mrf.mxu0
      %v1876 = vadd.f32 %v1722, %v1875
      %v1877 = vpop.f32.mrf.mxu0
      %v1878 = vadd.f32 %v1722, %v1877
      %1879 = vmatmul.bf16.gmra.mxu0 %v1682
      %v1880 = vpop.f32.mrf.mxu0
      %v1881 = vadd.f32 %v1722, %v1880
      %v1882 = vpop.f32.mrf.mxu0
      %v1883 = vadd.f32 %v1722, %v1882
      %1884 = vmatmul.bf16.gmra.mxu0 %v1685
      %v1885 = vpop.f32.mrf.mxu0
      %v1886 = vadd.f32 %v1722, %v1885
      %v1887 = vpop.f32.mrf.mxu0
      %v1888 = vadd.f32 %v1722, %v1887
      %1889 = vmatmul.bf16.gmra.mxu0 %v1688
      %v1890 = vpop.f32.mrf.mxu0
      %v1891 = vadd.f32 %v1722, %v1890
      %v1892 = vpop.f32.mrf.mxu0
      %v1893 = vadd.f32 %v1722, %v1892
      %1894 = vmatmul.bf16.gmra.mxu0 %v1691
      %v1895 = vpop.f32.mrf.mxu0
      %v1896 = vadd.f32 %v1722, %v1895
      %v1897 = vpop.f32.mrf.mxu0
      %v1898 = vadd.f32 %v1722, %v1897
      %1899 = vmatmul.bf16.gmra.mxu0 %v1694
      %v1900 = vpop.f32.mrf.mxu0
      %v1901 = vadd.f32 %v1722, %v1900
      %v1902 = vpop.f32.mrf.mxu0
      %v1903 = vadd.f32 %v1722, %v1902
      %1904 = vmatmul.bf16.gmra.mxu0 %v1697
      %v1905 = vpop.f32.mrf.mxu0
      %v1906 = vadd.f32 %v1722, %v1905
      %v1907 = vpop.f32.mrf.mxu0
      %v1908 = vadd.f32 %v1722, %v1907
      %1909 = vmatmul.bf16.gmra.mxu0 %v1700
      %v1910 = vpop.f32.mrf.mxu0
      %v1911 = vadd.f32 %v1722, %v1910
      %v1912 = vpop.f32.mrf.mxu0
      %v1913 = vadd.f32 %v1722, %v1912
      %1914 = vdwg.mxu0
      %1915 = vmatpush.bf16.msra.mxu0 0
      %1916 = vmatpush.bf16.msra.mxu0 0
      %1917 = vmatpush.bf16.msra.mxu0 0
      %1918 = vmatpush.bf16.msra.mxu0 0
      %1919 = vmatpush.bf16.msra.mxu0 0
      %1920 = vmatpush.bf16.msra.mxu0 0
      %1921 = vmatpush.bf16.msra.mxu0 0
      %1922 = vmatpush.bf16.msra.mxu0 %v1768
      %1923 = vmatmul.bf16.gmra.mxu0 %v1779
      %v1924 = vpop.f32.mrf.mxu0
      %v1925 = vadd.f32 %v1836, %v1924
      %v1926 = vpop.f32.mrf.mxu0
      %v1927 = vadd.f32 %v1838, %v1926
      %1928 = vmatmul.bf16.gmra.mxu0 %v1782
      %v1929 = vpop.f32.mrf.mxu0
      %v1930 = vadd.f32 %v1841, %v1929
      %v1931 = vpop.f32.mrf.mxu0
      %v1932 = vadd.f32 %v1843, %v1931
      %1933 = vmatmul.bf16.gmra.mxu0 %v1785
      %v1934 = vpop.f32.mrf.mxu0
      %v1935 = vadd.f32 %v1846, %v1934
      %v1936 = vpop.f32.mrf.mxu0
      %v1937 = vadd.f32 %v1848, %v1936
      %1938 = vmatmul.bf16.gmra.mxu0 %v1788
      %v1939 = vpop.f32.mrf.mxu0
      %v1940 = vadd.f32 %v1851, %v1939
      %v1941 = vpop.f32.mrf.mxu0
      %v1942 = vadd.f32 %v1853, %v1941
      %1943 = vmatmul.bf16.gmra.mxu0 %v1791
      %v1944 = vpop.f32.mrf.mxu0
      %v1945 = vadd.f32 %v1856, %v1944
      %v1946 = vpop.f32.mrf.mxu0
      %v1947 = vadd.f32 %v1858, %v1946
      %1948 = vmatmul.bf16.gmra.mxu0 %v1794
      %v1949 = vpop.f32.mrf.mxu0
      %v1950 = vadd.f32 %v1861, %v1949
      %v1951 = vpop.f32.mrf.mxu0
      %v1952 = vadd.f32 %v1863, %v1951
      %1953 = vmatmul.bf16.gmra.mxu0 %v1797
      %v1954 = vpop.f32.mrf.mxu0
      %v1955 = vadd.f32 %v1866, %v1954
      %v1956 = vpop.f32.mrf.mxu0
      %v1957 = vadd.f32 %v1868, %v1956
      %1958 = vmatmul.bf16.gmra.mxu0 %v1800
      %v1959 = vpop.f32.mrf.mxu0
      %v1960 = vadd.f32 %v1871, %v1959
      %v1961 = vpop.f32.mrf.mxu0
      %v1962 = vadd.f32 %v1873, %v1961
      %1963 = vmatmul.bf16.gmra.mxu0 %v1803
      %v1964 = vpop.f32.mrf.mxu0
      %v1965 = vadd.f32 %v1876, %v1964
      %v1966 = vpop.f32.mrf.mxu0
      %v1967 = vadd.f32 %v1878, %v1966
      %1968 = vmatmul.bf16.gmra.mxu0 %v1806
      %v1969 = vpop.f32.mrf.mxu0
      %v1970 = vadd.f32 %v1881, %v1969
      %v1971 = vpop.f32.mrf.mxu0
      %v1972 = vadd.f32 %v1883, %v1971
      %1973 = vmatmul.bf16.gmra.mxu0 %v1809
      %v1974 = vpop.f32.mrf.mxu0
      %v1975 = vadd.f32 %v1886, %v1974
      %v1976 = vpop.f32.mrf.mxu0
      %v1977 = vadd.f32 %v1888, %v1976
      %1978 = vmatmul.bf16.gmra.mxu0 %v1812
      %v1979 = vpop.f32.mrf.mxu0
      %v1980 = vadd.f32 %v1891, %v1979
      %v1981 = vpop.f32.mrf.mxu0
      %v1982 = vadd.f32 %v1893, %v1981
      %1983 = vmatmul.bf16.gmra.mxu0 %v1815
      %v1984 = vpop.f32.mrf.mxu0
      %v1985 = vadd.f32 %v1896, %v1984
      %v1986 = vpop.f32.mrf.mxu0
      %v1987 = vadd.f32 %v1898, %v1986
      %1988 = vmatmul.bf16.gmra.mxu0 %v1818
      %v1989 = vpop.f32.mrf.mxu0
      %v1990 = vadd.f32 %v1901, %v1989
      %v1991 = vpop.f32.mrf.mxu0
      %v1992 = vadd.f32 %v1903, %v1991
      %1993 = vmatmul.bf16.gmra.mxu0 %v1821
      %v1994 = vpop.f32.mrf.mxu0
      %v1995 = vadd.f32 %v1906, %v1994
      %v1996 = vpop.f32.mrf.mxu0
      %v1997 = vadd.f32 %v1908, %v1996
      %1998 = vmatmul.bf16.gmra.mxu0 %v1824
      %v1999 = vpop.f32.mrf.mxu0
      %v2000 = vadd.f32 %v1911, %v1999
      %v2001 = vpop.f32.mrf.mxu0
      %v2002 = vadd.f32 %v1913, %v2001
      %2003 = vdwg.mxu0
      %vm2004 = vcmp.ge.f32.partialorder %v1925, 0.0
      %vm2005 = vcmp.ge.f32.partialorder %v1927, 0.0
      %vm2006 = vcmp.ge.f32.partialorder %v1930, 0.0
      %vm2007 = vcmp.ge.f32.partialorder %v1932, 0.0
      %vm2008 = vcmp.ge.f32.partialorder %v1935, 0.0
      %vm2009 = vcmp.ge.f32.partialorder %v1937, 0.0
      %vm2010 = vcmp.ge.f32.partialorder %v1940, 0.0
      %vm2011 = vcmp.ge.f32.partialorder %v1942, 0.0
      %vm2012 = vcmp.ge.f32.partialorder %v1945, 0.0
      %vm2013 = vcmp.ge.f32.partialorder %v1947, 0.0
      %vm2014 = vcmp.ge.f32.partialorder %v1950, 0.0
      %vm2015 = vcmp.ge.f32.partialorder %v1952, 0.0
      %vm2016 = vcmp.ge.f32.partialorder %v1955, 0.0
      %vm2017 = vcmp.ge.f32.partialorder %v1957, 0.0
      %vm2018 = vcmp.ge.f32.partialorder %v1960, 0.0
      %vm2019 = vcmp.ge.f32.partialorder %v1962, 0.0
      %vm2020 = vcmp.ge.f32.partialorder %v1965, 0.0
      %vm2021 = vcmp.ge.f32.partialorder %v1967, 0.0
      %vm2022 = vcmp.ge.f32.partialorder %v1970, 0.0
      %vm2023 = vcmp.ge.f32.partialorder %v1972, 0.0
      %vm2024 = vcmp.ge.f32.partialorder %v1975, 0.0
      %vm2025 = vcmp.ge.f32.partialorder %v1977, 0.0
      %vm2026 = vcmp.ge.f32.partialorder %v1980, 0.0
      %vm2027 = vcmp.ge.f32.partialorder %v1982, 0.0
      %vm2028 = vcmp.ge.f32.partialorder %v1985, 0.0
      %vm2029 = vcmp.ge.f32.partialorder %v1987, 0.0
      %vm2030 = vcmp.ge.f32.partialorder %v1990, 0.0
      %vm2031 = vcmp.ge.f32.partialorder %v1992, 0.0
      %vm2032 = vcmp.ge.f32.partialorder %v1995, 0.0
      %vm2033 = vcmp.ge.f32.partialorder %v1997, 0.0
      %vm2034 = vcmp.ge.f32.partialorder %v2000, 0.0
      %vm2035 = vcmp.ge.f32.partialorder %v2002, 0.0
      %v2036 = vmul.f32 %v1925, 0.01
      %v2037 = vmul.f32 %v1927, 0.01
      %v2038 = vmul.f32 %v1930, 0.01
      %v2039 = vmul.f32 %v1932, 0.01
      %v2040 = vmul.f32 %v1935, 0.01
      %v2041 = vmul.f32 %v1937, 0.01
      %v2042 = vmul.f32 %v1940, 0.01
      %v2043 = vmul.f32 %v1942, 0.01
      %v2044 = vmul.f32 %v1945, 0.01
      %v2045 = vmul.f32 %v1947, 0.01
      %v2046 = vmul.f32 %v1950, 0.01
      %v2047 = vmul.f32 %v1952, 0.01
      %v2048 = vmul.f32 %v1955, 0.01
      %v2049 = vmul.f32 %v1957, 0.01
      %v2050 = vmul.f32 %v1960, 0.01
      %v2051 = vmul.f32 %v1962, 0.01
      %v2052 = vmul.f32 %v1965, 0.01
      %v2053 = vmul.f32 %v1967, 0.01
      %v2054 = vmul.f32 %v1970, 0.01
      %v2055 = vmul.f32 %v1972, 0.01
      %v2056 = vmul.f32 %v1975, 0.01
      %v2057 = vmul.f32 %v1977, 0.01
      %v2058 = vmul.f32 %v1980, 0.01
      %v2059 = vmul.f32 %v1982, 0.01
      %v2060 = vmul.f32 %v1985, 0.01
      %v2061 = vmul.f32 %v1987, 0.01
      %v2062 = vmul.f32 %v1990, 0.01
      %v2063 = vmul.f32 %v1992, 0.01
      %v2064 = vmul.f32 %v1995, 0.01
      %v2065 = vmul.f32 %v1997, 0.01
      %v2066 = vmul.f32 %v2000, 0.01
      %v2067 = vmul.f32 %v2002, 0.01
      %v2068 = vsel %vm2004, %v1925, %v2036
      %v2069 = vsel %vm2005, %v1927, %v2037
      %v2070 = vsel %vm2006, %v1930, %v2038
      %v2071 = vsel %vm2007, %v1932, %v2039
      %v2072 = vsel %vm2008, %v1935, %v2040
      %v2073 = vsel %vm2009, %v1937, %v2041
      %v2074 = vsel %vm2010, %v1940, %v2042
      %v2075 = vsel %vm2011, %v1942, %v2043
      %v2076 = vsel %vm2012, %v1945, %v2044
      %v2077 = vsel %vm2013, %v1947, %v2045
      %v2078 = vsel %vm2014, %v1950, %v2046
      %v2079 = vsel %vm2015, %v1952, %v2047
      %v2080 = vsel %vm2016, %v1955, %v2048
      %v2081 = vsel %vm2017, %v1957, %v2049
      %v2082 = vsel %vm2018, %v1960, %v2050
      %v2083 = vsel %vm2019, %v1962, %v2051
      %v2084 = vsel %vm2020, %v1965, %v2052
      %v2085 = vsel %vm2021, %v1967, %v2053
      %v2086 = vsel %vm2022, %v1970, %v2054
      %v2087 = vsel %vm2023, %v1972, %v2055
      %v2088 = vsel %vm2024, %v1975, %v2056
      %v2089 = vsel %vm2025, %v1977, %v2057
      %v2090 = vsel %vm2026, %v1980, %v2058
      %v2091 = vsel %vm2027, %v1982, %v2059
      %v2092 = vsel %vm2028, %v1985, %v2060
      %v2093 = vsel %vm2029, %v1987, %v2061
      %v2094 = vsel %vm2030, %v1990, %v2062
      %v2095 = vsel %vm2031, %v1992, %v2063
      %v2096 = vsel %vm2032, %v1995, %v2064
      %v2097 = vsel %vm2033, %v1997, %v2065
      %v2098 = vsel %vm2034, %v2000, %v2066
      %v2099 = vsel %vm2035, %v2002, %v2067
      %v2100 = vpack.c.bf16 %v2068, %v2068
      %v2101 = vpack.c.bf16 %v2069, %v2069
      %v2102 = vpack.c.bf16 %v2070, %v2070
      %v2103 = vpack.c.bf16 %v2071, %v2071
      %v2104 = vpack.c.bf16 %v2072, %v2072
      %v2105 = vpack.c.bf16 %v2073, %v2073
      %v2106 = vpack.c.bf16 %v2074, %v2074
      %v2107 = vpack.c.bf16 %v2075, %v2075
      %v2108 = vpack.c.bf16 %v2076, %v2076
      %v2109 = vpack.c.bf16 %v2077, %v2077
      %v2110 = vpack.c.bf16 %v2078, %v2078
      %v2111 = vpack.c.bf16 %v2079, %v2079
      %v2112 = vpack.c.bf16 %v2080, %v2080
      %v2113 = vpack.c.bf16 %v2081, %v2081
      %v2114 = vpack.c.bf16 %v2082, %v2082
      %v2115 = vpack.c.bf16 %v2083, %v2083
      %v2116 = vpack.c.bf16 %v2084, %v2084
      %v2117 = vpack.c.bf16 %v2085, %v2085
      %v2118 = vpack.c.bf16 %v2086, %v2086
      %v2119 = vpack.c.bf16 %v2087, %v2087
      %v2120 = vpack.c.bf16 %v2088, %v2088
      %v2121 = vpack.c.bf16 %v2089, %v2089
      %v2122 = vpack.c.bf16 %v2090, %v2090
      %v2123 = vpack.c.bf16 %v2091, %v2091
      %v2124 = vpack.c.bf16 %v2092, %v2092
      %v2125 = vpack.c.bf16 %v2093, %v2093
      %v2126 = vpack.c.bf16 %v2094, %v2094
      %v2127 = vpack.c.bf16 %v2095, %v2095
      %v2128 = vpack.c.bf16 %v2096, %v2096
      %v2129 = vpack.c.bf16 %v2097, %v2097
      %v2130 = vpack.c.bf16 %v2098, %v2098
      %v2131 = vpack.c.bf16 %v2099, %v2099
      %vm2132 = vcmask 60416
      %2133 = vst.msk [vmem:[#allocation2] sm:$0xf] %vm2132, 0
      %2134 = vst.msk [vmem:[#allocation2 + $0x4] sm:$0xf] %vm2132, 0
      %2135 = vst.msk [vmem:[#allocation2 + $0x8] sm:$0xf] %vm2132, 0
      %2136 = vst.msk [vmem:[#allocation2 + $0xc] sm:$0xf] %vm2132, 0
      %vm2137 = vcmask 58368
      %vm2138 = vsmask.f32 1280
      %vm2139 = vmand %vm2137, %vm2138
      %v2140 = vld [vmem:[#allocation2 + $0x10] sm:$0x3]
      %v2141 = vsel %vm2139, 0, %v2140
      %2142 = vst [vmem:[#allocation2 + $0x10] sm:$0x3] %v2141
      %2143 = vst.msk [vmem:[#allocation2 + $0x14] sm:$0xf] %vm2132, 0
      %2144 = vst.msk [vmem:[#allocation2 + $0x18] sm:$0xf] %vm2132, 0
      %2145 = vst.msk [vmem:[#allocation2 + $0x1c] sm:$0xf] %vm2132, 0
      %2146 = vst.msk [vmem:[#allocation2 + $0x20] sm:$0xf] %vm2132, 0
      %v2147 = vld [vmem:[#allocation2 + $0x24] sm:$0x3]
      %v2148 = vsel %vm2139, 0, %v2147
      %2149 = vst [vmem:[#allocation2 + $0x24] sm:$0x3] %v2148
      %2150 = vst.msk [vmem:[#allocation2 + $0x28] sm:$0xf] %vm2132, 0
      %2151 = vst.msk [vmem:[#allocation2 + $0x2c] sm:$0xf] %vm2132, 0
      %2152 = vst.msk [vmem:[#allocation2 + $0x30] sm:$0xf] %vm2132, 0
      %2153 = vst.msk [vmem:[#allocation2 + $0x34] sm:$0xf] %vm2132, 0
      %v2154 = vld [vmem:[#allocation2 + $0x38] sm:$0x3]
      %v2155 = vsel %vm2139, 0, %v2154
      %2156 = vst [vmem:[#allocation2 + $0x38] sm:$0x3] %v2155
      %s2157 = scalar_lea.vmem [#allocation2], 380
      %2158 = vst.msk [vmem:[%s2157] sm:$0xf] %vm2132, 0
      %2159 = vst.msk [vmem:[%s2157 + $0x4] sm:$0xf] %vm2132, 0
      %2160 = vst.msk [vmem:[%s2157 + $0x8] sm:$0xf] %vm2132, 0
      %2161 = vst.msk [vmem:[%s2157 + $0xc] sm:$0xf] %vm2132, 0
      %v2162 = vld [vmem:[%s2157 + $0x10] sm:$0x3]
      %v2163 = vsel %vm2139, 0, %v2162
      %2164 = vst [vmem:[%s2157 + $0x10] sm:$0x3] %v2163
      %2165 = vst.msk [vmem:[%s2157 + $0x14] sm:$0xf] %vm2132, 0
      %2166 = vst.msk [vmem:[%s2157 + $0x18] sm:$0xf] %vm2132, 0
      %2167 = vst.msk [vmem:[%s2157 + $0x1c] sm:$0xf] %vm2132, 0
      %2168 = vst.msk [vmem:[%s2157 + $0x20] sm:$0xf] %vm2132, 0
      %v2169 = vld [vmem:[%s2157 + $0x24] sm:$0x3]
      %v2170 = vsel %vm2139, 0, %v2169
      %2171 = vst [vmem:[%s2157 + $0x24] sm:$0x3] %v2170
      %2172 = vst.msk [vmem:[%s2157 + $0x28] sm:$0xf] %vm2132, 0
      %2173 = vst.msk [vmem:[%s2157 + $0x2c] sm:$0xf] %vm2132, 0
      %2174 = vst.msk [vmem:[%s2157 + $0x30] sm:$0xf] %vm2132, 0
      %2175 = vst.msk [vmem:[%s2157 + $0x34] sm:$0xf] %vm2132, 0
      %v2176 = vld [vmem:[%s2157 + $0x38] sm:$0x3]
      %v2177 = vsel %vm2139, 0, %v2176
      %2178 = vst [vmem:[%s2157 + $0x38] sm:$0x3] %v2177
      %s2179 = scalar_lea.vmem [#allocation2], 60
      %2180 = vst.msk [vmem:[%s2179] sm:$0xf] %vm2132, 0
      %2181 = vst.msk [vmem:[%s2179 + $0x4] sm:$0xf] %vm2132, 0
      %2182 = vst.msk [vmem:[%s2179 + $0x14] sm:$0xf] %vm2132, 0
      %2183 = vst.msk [vmem:[%s2179 + $0x18] sm:$0xf] %vm2132, 0
      %2184 = vst.msk [vmem:[%s2179 + $0x28] sm:$0xf] %vm2132, 0
      %2185 = vst.msk [vmem:[%s2179 + $0x2c] sm:$0xf] %vm2132, 0
      %2186 = vst.msk [vmem:[%s2179 + $0x3c] sm:$0xf] %vm2132, 0
      %2187 = vst.msk [vmem:[%s2179 + $0x40] sm:$0xf] %vm2132, 0
      %2188 = vst.msk [vmem:[%s2179 + $0x50] sm:$0xf] %vm2132, 0
      %2189 = vst.msk [vmem:[%s2179 + $0x54] sm:$0xf] %vm2132, 0
      %2190 = vst.msk [vmem:[%s2179 + $0x64] sm:$0xf] %vm2132, 0
      %2191 = vst.msk [vmem:[%s2179 + $0x68] sm:$0xf] %vm2132, 0
      %2192 = vst.msk [vmem:[%s2179 + $0x78] sm:$0xf] %vm2132, 0
      %2193 = vst.msk [vmem:[%s2179 + $0x7c] sm:$0xf] %vm2132, 0
      %2194 = vst.msk [vmem:[%s2179 + $0x8c] sm:$0xf] %vm2132, 0
      %2195 = vst.msk [vmem:[%s2179 + $0x90] sm:$0xf] %vm2132, 0
      %2196 = vst.msk [vmem:[%s2179 + $0xa0] sm:$0xf] %vm2132, 0
      %2197 = vst.msk [vmem:[%s2179 + $0xa4] sm:$0xf] %vm2132, 0
      %2198 = vst.msk [vmem:[%s2179 + $0xb4] sm:$0xf] %vm2132, 0
      %2199 = vst.msk [vmem:[%s2179 + $0xb8] sm:$0xf] %vm2132, 0
      %2200 = vst.msk [vmem:[%s2179 + $0xc8] sm:$0xf] %vm2132, 0
      %2201 = vst.msk [vmem:[%s2179 + $0xcc] sm:$0xf] %vm2132, 0
      %2202 = vst.msk [vmem:[%s2179 + $0xdc] sm:$0xf] %vm2132, 0
      %2203 = vst.msk [vmem:[%s2179 + $0xe0] sm:$0xf] %vm2132, 0
      %2204 = vst.msk [vmem:[%s2179 + $0xf0] sm:$0xf] %vm2132, 0
      %2205 = vst.msk [vmem:[%s2179 + $0xf4] sm:$0xf] %vm2132, 0
      %2206 = vst.msk [vmem:[%s2179 + $0x104] sm:$0xf] %vm2132, 0
      %2207 = vst.msk [vmem:[%s2179 + $0x108] sm:$0xf] %vm2132, 0
      %2208 = vst.msk [vmem:[%s2179 + $0x118] sm:$0xf] %vm2132, 0
      %2209 = vst.msk [vmem:[%s2179 + $0x11c] sm:$0xf] %vm2132, 0
      %2210 = vst.msk [vmem:[%s2179 + $0x12c] sm:$0xf] %vm2132, 0
      %2211 = vst.msk [vmem:[%s2179 + $0x130] sm:$0xf] %vm2132, 0
      %v2212 = vld [vmem:[%s2179 + $0x10] sm:$0x3]
      %v2213 = vsel %vm2139, 0, %v2212
      %2214 = vst [vmem:[%s2179 + $0x10] sm:$0x3] %v2213
      %v2215 = vld [vmem:[%s2179 + $0x24] sm:$0x3]
      %v2216 = vsel %vm2139, 0, %v2215
      %2217 = vst [vmem:[%s2179 + $0x24] sm:$0x3] %v2216
      %v2218 = vld [vmem:[%s2179 + $0x38] sm:$0x3]
      %v2219 = vsel %vm2139, 0, %v2218
      %2220 = vst [vmem:[%s2179 + $0x38] sm:$0x3] %v2219
      %v2221 = vld [vmem:[%s2179 + $0x4c] sm:$0x3]
      %v2222 = vsel %vm2139, 0, %v2221
      %2223 = vst [vmem:[%s2179 + $0x4c] sm:$0x3] %v2222
      %v2224 = vld [vmem:[%s2179 + $0x60] sm:$0x3]
      %v2225 = vsel %vm2139, 0, %v2224
      %2226 = vst [vmem:[%s2179 + $0x60] sm:$0x3] %v2225
      %v2227 = vld [vmem:[%s2179 + $0x74] sm:$0x3]
      %v2228 = vsel %vm2139, 0, %v2227
      %2229 = vst [vmem:[%s2179 + $0x74] sm:$0x3] %v2228
      %v2230 = vld [vmem:[%s2179 + $0x88] sm:$0x3]
      %v2231 = vsel %vm2139, 0, %v2230
      %2232 = vst [vmem:[%s2179 + $0x88] sm:$0x3] %v2231
      %v2233 = vld [vmem:[%s2179 + $0x9c] sm:$0x3]
      %v2234 = vsel %vm2139, 0, %v2233
      %2235 = vst [vmem:[%s2179 + $0x9c] sm:$0x3] %v2234
      %v2236 = vld [vmem:[%s2179 + $0xb0] sm:$0x3]
      %v2237 = vsel %vm2139, 0, %v2236
      %2238 = vst [vmem:[%s2179 + $0xb0] sm:$0x3] %v2237
      %v2239 = vld [vmem:[%s2179 + $0xc4] sm:$0x3]
      %v2240 = vsel %vm2139, 0, %v2239
      %2241 = vst [vmem:[%s2179 + $0xc4] sm:$0x3] %v2240
      %v2242 = vld [vmem:[%s2179 + $0xd8] sm:$0x3]
      %v2243 = vsel %vm2139, 0, %v2242
      %2244 = vst [vmem:[%s2179 + $0xd8] sm:$0x3] %v2243
      %v2245 = vld [vmem:[%s2179 + $0xec] sm:$0x3]
      %v2246 = vsel %vm2139, 0, %v2245
      %2247 = vst [vmem:[%s2179 + $0xec] sm:$0x3] %v2246
      %v2248 = vld [vmem:[%s2179 + $0x100] sm:$0x3]
      %v2249 = vsel %vm2139, 0, %v2248
      %2250 = vst [vmem:[%s2179 + $0x100] sm:$0x3] %v2249
      %v2251 = vld [vmem:[%s2179 + $0x114] sm:$0x3]
      %v2252 = vsel %vm2139, 0, %v2251
      %2253 = vst [vmem:[%s2179 + $0x114] sm:$0x3] %v2252
      %v2254 = vld [vmem:[%s2179 + $0x128] sm:$0x3]
      %v2255 = vsel %vm2139, 0, %v2254
      %2256 = vst [vmem:[%s2179 + $0x128] sm:$0x3] %v2255
      %v2257 = vld [vmem:[%s2179 + $0x13c] sm:$0x3]
      %v2258 = vsel %vm2139, 0, %v2257
      %2259 = vst [vmem:[%s2179 + $0x13c] sm:$0x3] %v2258
      %2260 = vst.msk [vmem:[%s2179 + $0x8] sm:$0xf] %vm2132, %v2100
      %2261 = vst.msk [vmem:[%s2179 + $0xc] sm:$0xf] %vm2132, %v2101
      %2262 = vst.msk [vmem:[%s2179 + $0x1c] sm:$0xf] %vm2132, %v2102
      %2263 = vst.msk [vmem:[%s2179 + $0x20] sm:$0xf] %vm2132, %v2103
      %2264 = vst.msk [vmem:[%s2179 + $0x30] sm:$0xf] %vm2132, %v2104
      %2265 = vst.msk [vmem:[%s2179 + $0x34] sm:$0xf] %vm2132, %v2105
      %2266 = vst.msk [vmem:[%s2179 + $0x44] sm:$0xf] %vm2132, %v2106
      %2267 = vst.msk [vmem:[%s2179 + $0x48] sm:$0xf] %vm2132, %v2107
      %2268 = vst.msk [vmem:[%s2179 + $0x58] sm:$0xf] %vm2132, %v2108
      %2269 = vst.msk [vmem:[%s2179 + $0x5c] sm:$0xf] %vm2132, %v2109
      %2270 = vst.msk [vmem:[%s2179 + $0x6c] sm:$0xf] %vm2132, %v2110
      %2271 = vst.msk [vmem:[%s2179 + $0x70] sm:$0xf] %vm2132, %v2111
      %2272 = vst.msk [vmem:[%s2179 + $0x80] sm:$0xf] %vm2132, %v2112
      %2273 = vst.msk [vmem:[%s2179 + $0x84] sm:$0xf] %vm2132, %v2113
      %2274 = vst.msk [vmem:[%s2179 + $0x94] sm:$0xf] %vm2132, %v2114
      %2275 = vst.msk [vmem:[%s2179 + $0x98] sm:$0xf] %vm2132, %v2115
      %2276 = vst.msk [vmem:[%s2179 + $0xa8] sm:$0xf] %vm2132, %v2116
      %2277 = vst.msk [vmem:[%s2179 + $0xac] sm:$0xf] %vm2132, %v2117
      %2278 = vst.msk [vmem:[%s2179 + $0xbc] sm:$0xf] %vm2132, %v2118
      %2279 = vst.msk [vmem:[%s2179 + $0xc0] sm:$0xf] %vm2132, %v2119
      %2280 = vst.msk [vmem:[%s2179 + $0xd0] sm:$0xf] %vm2132, %v2120
      %2281 = vst.msk [vmem:[%s2179 + $0xd4] sm:$0xf] %vm2132, %v2121
      %2282 = vst.msk [vmem:[%s2179 + $0xe4] sm:$0xf] %vm2132, %v2122
      %2283 = vst.msk [vmem:[%s2179 + $0xe8] sm:$0xf] %vm2132, %v2123
      %2284 = vst.msk [vmem:[%s2179 + $0xf8] sm:$0xf] %vm2132, %v2124
      %2285 = vst.msk [vmem:[%s2179 + $0xfc] sm:$0xf] %vm2132, %v2125
      %2286 = vst.msk [vmem:[%s2179 + $0x10c] sm:$0xf] %vm2132, %v2126
      %2287 = vst.msk [vmem:[%s2179 + $0x110] sm:$0xf] %vm2132, %v2127
      %2288 = vst.msk [vmem:[%s2179 + $0x120] sm:$0xf] %vm2132, %v2128
      %2289 = vst.msk [vmem:[%s2179 + $0x124] sm:$0xf] %vm2132, %v2129
      %2290 = vst.msk [vmem:[%s2179 + $0x134] sm:$0xf] %vm2132, %v2130
      %2291 = vst.msk [vmem:[%s2179 + $0x138] sm:$0xf] %vm2132, %v2131
      %v2292 = vld [vmem:[#allocation2 + $0x4] sm:$0xf]
      %v2293 = vld [vmem:[#allocation2 + $0x8] sm:$0xf]
      %v2294 = vld [vmem:[#allocation2 + $0xc] sm:$0xf]
      %v2295 = vld [vmem:[#allocation2 + $0x10] sm:$0x3]
      %v2296 = vld [vmem:[#allocation2 + $0x18] sm:$0xf]
      %v2297 = vld [vmem:[#allocation2 + $0x1c] sm:$0xf]
      %v2298 = vld [vmem:[#allocation2 + $0x20] sm:$0xf]
      %v2299 = vld [vmem:[#allocation2 + $0x24] sm:$0x3]
      %v2300 = vld [vmem:[#allocation2 + $0x2c] sm:$0xf]
      %v2301 = vld [vmem:[#allocation2 + $0x30] sm:$0xf]
      %v2302 = vld [vmem:[#allocation2 + $0x34] sm:$0xf]
      %v2303 = vld [vmem:[#allocation2 + $0x38] sm:$0x3]
      %v2304 = vld [vmem:[#allocation2 + $0x40] sm:$0xf]
      %v2305 = vld [vmem:[#allocation2 + $0x44] sm:$0xf]
      %v2306 = vld [vmem:[#allocation2 + $0x48] sm:$0xf]
      %v2307 = vld [vmem:[#allocation2 + $0x4c] sm:$0x3]
      %v2308 = vld [vmem:[#allocation2 + $0x54] sm:$0xf]
      %v2309 = vld [vmem:[#allocation2 + $0x58] sm:$0xf]
      %v2310 = vld [vmem:[#allocation2 + $0x5c] sm:$0xf]
      %v2311 = vld [vmem:[#allocation2 + $0x60] sm:$0x3]
      %v2312 = vld [vmem:[#allocation2 + $0x68] sm:$0xf]
      %v2313 = vld [vmem:[#allocation2 + $0x6c] sm:$0xf]
      %v2314 = vld [vmem:[#allocation2 + $0x70] sm:$0xf]
      %v2315 = vld [vmem:[#allocation2 + $0x74] sm:$0x3]
      %v2316 = vld [vmem:[#allocation2 + $0x7c] sm:$0xf]
      %v2317 = vld [vmem:[#allocation2 + $0x80] sm:$0xf]
      %v2318 = vld [vmem:[#allocation2 + $0x84] sm:$0xf]
      %v2319 = vld [vmem:[#allocation2 + $0x88] sm:$0x3]
      %v2320 = vld [vmem:[#allocation2 + $0x90] sm:$0xf]
      %v2321 = vld [vmem:[#allocation2 + $0x94] sm:$0xf]
      %v2322 = vld [vmem:[#allocation2 + $0x98] sm:$0xf]
      %v2323 = vld [vmem:[#allocation2 + $0x9c] sm:$0x3]
      %v2324 = vld [vmem:[#allocation2 + $0xa4] sm:$0xf]
      %v2325 = vld [vmem:[#allocation2 + $0xa8] sm:$0xf]
      %v2326 = vld [vmem:[#allocation2 + $0xac] sm:$0xf]
      %v2327 = vld [vmem:[#allocation2 + $0xb0] sm:$0x3]
      %v2328 = vld [vmem:[#allocation2 + $0xb8] sm:$0xf]
      %v2329 = vld [vmem:[#allocation2 + $0xbc] sm:$0xf]
      %v2330 = vld [vmem:[#allocation2 + $0xc0] sm:$0xf]
      %v2331 = vld [vmem:[#allocation2 + $0xc4] sm:$0x3]
      %v2332 = vld [vmem:[#allocation2 + $0xcc] sm:$0xf]
      %v2333 = vld [vmem:[#allocation2 + $0xd0] sm:$0xf]
      %v2334 = vld [vmem:[#allocation2 + $0xd4] sm:$0xf]
      %v2335 = vld [vmem:[#allocation2 + $0xd8] sm:$0x3]
      %v2336 = vld [vmem:[#allocation2 + $0xe0] sm:$0xf]
      %v2337 = vld [vmem:[#allocation2 + $0xe4] sm:$0xf]
      %v2338 = vld [vmem:[#allocation2 + $0xe8] sm:$0xf]
      %v2339 = vld [vmem:[#allocation2 + $0xec] sm:$0x3]
      %v2340 = vld [vmem:[#allocation2 + $0xf4] sm:$0xf]
      %v2341 = vld [vmem:[#allocation2 + $0xf8] sm:$0xf]
      %v2342 = vld [vmem:[#allocation2 + $0xfc] sm:$0xf]
      %v2343 = vld [vmem:[#allocation2 + $0x100] sm:$0x3]
      %v2344 = vld [vmem:[#allocation2 + $0x108] sm:$0xf]
      %v2345 = vld [vmem:[#allocation2 + $0x10c] sm:$0xf]
      %v2346 = vld [vmem:[#allocation2 + $0x110] sm:$0xf]
      %v2347 = vld [vmem:[#allocation2 + $0x114] sm:$0x3]
      %v2348 = vld [vmem:[#allocation2 + $0x11c] sm:$0xf]
      %v2349 = vld [vmem:[#allocation2 + $0x120] sm:$0xf]
      %v2350 = vld [vmem:[#allocation2 + $0x124] sm:$0xf]
      %v2351 = vld [vmem:[#allocation2 + $0x128] sm:$0x3]
      %v2352 = vld [vmem:[#allocation2 + $0x130] sm:$0xf]
      %v2353 = vld [vmem:[#allocation2 + $0x134] sm:$0xf]
      %v2354 = vld [vmem:[#allocation2 + $0x138] sm:$0xf]
      %v2355 = vld [vmem:[#allocation2 + $0x13c] sm:$0x3]
      %v2356 = vld [vmem:[#allocation2 + $0x144] sm:$0xf]
      %v2357 = vld [vmem:[#allocation2 + $0x148] sm:$0xf]
      %v2358 = vld [vmem:[#allocation2 + $0x14c] sm:$0xf]
      %v2359 = vld [vmem:[#allocation2 + $0x150] sm:$0x3]
      %v2360 = vld [vmem:[#allocation2 + $0x158] sm:$0xf]
      %v2361 = vld [vmem:[#allocation2 + $0x15c] sm:$0xf]
      %v2362 = vld [vmem:[#allocation2 + $0x160] sm:$0xf]
      %v2363 = vld [vmem:[#allocation2 + $0x164] sm:$0x3]
      %v2364 = vld [vmem:[#allocation2 + $0x16c] sm:$0xf]
      %v2365 = vld [vmem:[#allocation2 + $0x170] sm:$0xf]
      %v2366 = vld [vmem:[#allocation2 + $0x174] sm:$0xf]
      %v2367 = vld [vmem:[#allocation2 + $0x178] sm:$0x3]
      %v2368 = vld [vmem:[#allocation2 + $0x180] sm:$0xf]
      %v2369 = vld [vmem:[#allocation2 + $0x184] sm:$0xf]
      %v2370 = vld [vmem:[#allocation2 + $0x188] sm:$0xf]
      %v2371 = vld [vmem:[#allocation2 + $0x18c] sm:$0x3]
      %v2372 = vld [vmem:[#allocation2 + $0x194] sm:$0xf]
      %v2373 = vld [vmem:[#allocation2 + $0x198] sm:$0xf]
      %v2374 = vld [vmem:[#allocation2 + $0x19c] sm:$0xf]
      %v2375 = vld [vmem:[#allocation2 + $0x1a0] sm:$0x3]
      %v2376 = vld [vmem:[#allocation2 + $0x1a8] sm:$0xf]
      %v2377 = vld [vmem:[#allocation2 + $0x1ac] sm:$0xf]
      %v2378 = vld [vmem:[#allocation2 + $0x1b0] sm:$0xf]
      %v2379 = vld [vmem:[#allocation2 + $0x1b4] sm:$0x3]
      %vm2380 = vsmask.f32 5392
      %vm2381 = vmor %vm2138, %vm2380
      %v2383 = vshrl.u32 %v2292, 16
      %v2385 = vrot.slane %v2383, 6
      %v2386 = vshll.u32 %v2292, 16
      %v2388 = vrot.slane %v2386, 7
      %v2389 = vor.u32 %v2385, %v2388
      %v2390 = vrot.slane %v2389, 4
      %v2392 = vshrl.u32 %v2293, 16
      %v2394 = vrot.slane %v2392, 6
      %v2395 = vshll.u32 %v2293, 16
      %v2397 = vrot.slane %v2395, 7
      %v2398 = vor.u32 %v2394, %v2397
      %v2399 = vsel %vm2381, %v2390, %v2398
      %v2400 = vrot.slane %v2398, 4
      %v2402 = vshrl.u32 %v2294, 16
      %v2404 = vrot.slane %v2402, 6
      %v2405 = vshll.u32 %v2294, 16
      %v2407 = vrot.slane %v2405, 7
      %v2408 = vor.u32 %v2404, %v2407
      %v2409 = vsel %vm2381, %v2400, %v2408
      %v2411 = vshrl.u32 %v2296, 16
      %v2413 = vrot.slane %v2411, 6
      %v2414 = vshll.u32 %v2296, 16
      %v2416 = vrot.slane %v2414, 7
      %v2417 = vor.u32 %v2413, %v2416
      %v2418 = vrot.slane %v2417, 4
      %v2420 = vshrl.u32 %v2297, 16
      %v2422 = vrot.slane %v2420, 6
      %v2423 = vshll.u32 %v2297, 16
      %v2425 = vrot.slane %v2423, 7
      %v2426 = vor.u32 %v2422, %v2425
      %v2427 = vsel %vm2381, %v2418, %v2426
      %v2428 = vrot.slane %v2426, 4
      %v2430 = vshrl.u32 %v2298, 16
      %v2432 = vrot.slane %v2430, 6
      %v2433 = vshll.u32 %v2298, 16
      %v2435 = vrot.slane %v2433, 7
      %v2436 = vor.u32 %v2432, %v2435
      %v2437 = vsel %vm2381, %v2428, %v2436
      %v2439 = vshrl.u32 %v2300, 16
      %v2441 = vrot.slane %v2439, 6
      %v2442 = vshll.u32 %v2300, 16
      %v2444 = vrot.slane %v2442, 7
      %v2445 = vor.u32 %v2441, %v2444
      %v2446 = vrot.slane %v2445, 4
      %v2448 = vshrl.u32 %v2301, 16
      %v2450 = vrot.slane %v2448, 6
      %v2451 = vshll.u32 %v2301, 16
      %v2453 = vrot.slane %v2451, 7
      %v2454 = vor.u32 %v2450, %v2453
      %v2455 = vsel %vm2381, %v2446, %v2454
      %v2456 = vrot.slane %v2454, 4
      %v2458 = vshrl.u32 %v2302, 16
      %v2460 = vrot.slane %v2458, 6
      %v2461 = vshll.u32 %v2302, 16
      %v2463 = vrot.slane %v2461, 7
      %v2464 = vor.u32 %v2460, %v2463
      %v2465 = vsel %vm2381, %v2456, %v2464
      %v2467 = vshrl.u32 %v2304, 16
      %v2469 = vrot.slane %v2467, 6
      %v2470 = vshll.u32 %v2304, 16
      %v2472 = vrot.slane %v2470, 7
      %v2473 = vor.u32 %v2469, %v2472
      %v2474 = vrot.slane %v2473, 4
      %v2476 = vshrl.u32 %v2305, 16
      %v2478 = vrot.slane %v2476, 6
      %v2479 = vshll.u32 %v2305, 16
      %v2481 = vrot.slane %v2479, 7
      %v2482 = vor.u32 %v2478, %v2481
      %v2483 = vsel %vm2381, %v2474, %v2482
      %v2484 = vrot.slane %v2482, 4
      %v2486 = vshrl.u32 %v2306, 16
      %v2488 = vrot.slane %v2486, 6
      %v2489 = vshll.u32 %v2306, 16
      %v2491 = vrot.slane %v2489, 7
      %v2492 = vor.u32 %v2488, %v2491
      %v2493 = vsel %vm2381, %v2484, %v2492
      %v2495 = vshrl.u32 %v2308, 16
      %v2497 = vrot.slane %v2495, 6
      %v2498 = vshll.u32 %v2308, 16
      %v2500 = vrot.slane %v2498, 7
      %v2501 = vor.u32 %v2497, %v2500
      %v2502 = vrot.slane %v2501, 4
      %v2504 = vshrl.u32 %v2309, 16
      %v2506 = vrot.slane %v2504, 6
      %v2507 = vshll.u32 %v2309, 16
      %v2509 = vrot.slane %v2507, 7
      %v2510 = vor.u32 %v2506, %v2509
      %v2511 = vsel %vm2381, %v2502, %v2510
      %v2512 = vrot.slane %v2510, 4
      %v2514 = vshrl.u32 %v2310, 16
      %v2516 = vrot.slane %v2514, 6
      %v2517 = vshll.u32 %v2310, 16
      %v2519 = vrot.slane %v2517, 7
      %v2520 = vor.u32 %v2516, %v2519
      %v2521 = vsel %vm2381, %v2512, %v2520
      %v2523 = vshrl.u32 %v2312, 16
      %v2525 = vrot.slane %v2523, 6
      %v2526 = vshll.u32 %v2312, 16
      %v2528 = vrot.slane %v2526, 7
      %v2529 = vor.u32 %v2525, %v2528
      %v2530 = vrot.slane %v2529, 4
      %v2532 = vshrl.u32 %v2313, 16
      %v2534 = vrot.slane %v2532, 6
      %v2535 = vshll.u32 %v2313, 16
      %v2537 = vrot.slane %v2535, 7
      %v2538 = vor.u32 %v2534, %v2537
      %v2539 = vsel %vm2381, %v2530, %v2538
      %v2540 = vrot.slane %v2538, 4
      %v2542 = vshrl.u32 %v2314, 16
      %v2544 = vrot.slane %v2542, 6
      %v2545 = vshll.u32 %v2314, 16
      %v2547 = vrot.slane %v2545, 7
      %v2548 = vor.u32 %v2544, %v2547
      %v2549 = vsel %vm2381, %v2540, %v2548
      %v2551 = vshrl.u32 %v2316, 16
      %v2553 = vrot.slane %v2551, 6
      %v2554 = vshll.u32 %v2316, 16
      %v2556 = vrot.slane %v2554, 7
      %v2557 = vor.u32 %v2553, %v2556
      %v2558 = vrot.slane %v2557, 4
      %v2560 = vshrl.u32 %v2317, 16
      %v2562 = vrot.slane %v2560, 6
      %v2563 = vshll.u32 %v2317, 16
      %v2565 = vrot.slane %v2563, 7
      %v2566 = vor.u32 %v2562, %v2565
      %v2567 = vsel %vm2381, %v2558, %v2566
      %v2568 = vrot.slane %v2566, 4
      %v2570 = vshrl.u32 %v2318, 16
      %v2572 = vrot.slane %v2570, 6
      %v2573 = vshll.u32 %v2318, 16
      %v2575 = vrot.slane %v2573, 7
      %v2576 = vor.u32 %v2572, %v2575
      %v2577 = vsel %vm2381, %v2568, %v2576
      %v2579 = vshrl.u32 %v2320, 16
      %v2581 = vrot.slane %v2579, 6
      %v2582 = vshll.u32 %v2320, 16
      %v2584 = vrot.slane %v2582, 7
      %v2585 = vor.u32 %v2581, %v2584
      %v2586 = vrot.slane %v2585, 4
      %v2588 = vshrl.u32 %v2321, 16
      %v2590 = vrot.slane %v2588, 6
      %v2591 = vshll.u32 %v2321, 16
      %v2593 = vrot.slane %v2591, 7
      %v2594 = vor.u32 %v2590, %v2593
      %v2595 = vsel %vm2381, %v2586, %v2594
      %v2596 = vrot.slane %v2594, 4
      %v2598 = vshrl.u32 %v2322, 16
      %v2600 = vrot.slane %v2598, 6
      %v2601 = vshll.u32 %v2322, 16
      %v2603 = vrot.slane %v2601, 7
      %v2604 = vor.u32 %v2600, %v2603
      %v2605 = vsel %vm2381, %v2596, %v2604
      %v2607 = vshrl.u32 %v2324, 16
      %v2609 = vrot.slane %v2607, 6
      %v2610 = vshll.u32 %v2324, 16
      %v2612 = vrot.slane %v2610, 7
      %v2613 = vor.u32 %v2609, %v2612
      %v2614 = vrot.slane %v2613, 4
      %v2616 = vshrl.u32 %v2325, 16
      %v2618 = vrot.slane %v2616, 6
      %v2619 = vshll.u32 %v2325, 16
      %v2621 = vrot.slane %v2619, 7
      %v2622 = vor.u32 %v2618, %v2621
      %v2623 = vsel %vm2381, %v2614, %v2622
      %v2624 = vrot.slane %v2622, 4
      %v2626 = vshrl.u32 %v2326, 16
      %v2628 = vrot.slane %v2626, 6
      %v2629 = vshll.u32 %v2326, 16
      %v2631 = vrot.slane %v2629, 7
      %v2632 = vor.u32 %v2628, %v2631
      %v2633 = vsel %vm2381, %v2624, %v2632
      %v2635 = vshrl.u32 %v2328, 16
      %v2637 = vrot.slane %v2635, 6
      %v2638 = vshll.u32 %v2328, 16
      %v2640 = vrot.slane %v2638, 7
      %v2641 = vor.u32 %v2637, %v2640
      %v2642 = vrot.slane %v2641, 4
      %v2644 = vshrl.u32 %v2329, 16
      %v2646 = vrot.slane %v2644, 6
      %v2647 = vshll.u32 %v2329, 16
      %v2649 = vrot.slane %v2647, 7
      %v2650 = vor.u32 %v2646, %v2649
      %v2651 = vsel %vm2381, %v2642, %v2650
      %v2652 = vrot.slane %v2650, 4
      %v2654 = vshrl.u32 %v2330, 16
      %v2656 = vrot.slane %v2654, 6
      %v2657 = vshll.u32 %v2330, 16
      %v2659 = vrot.slane %v2657, 7
      %v2660 = vor.u32 %v2656, %v2659
      %v2661 = vsel %vm2381, %v2652, %v2660
      %v2663 = vshrl.u32 %v2332, 16
      %v2665 = vrot.slane %v2663, 6
      %v2666 = vshll.u32 %v2332, 16
      %v2668 = vrot.slane %v2666, 7
      %v2669 = vor.u32 %v2665, %v2668
      %v2670 = vrot.slane %v2669, 4
      %v2672 = vshrl.u32 %v2333, 16
      %v2674 = vrot.slane %v2672, 6
      %v2675 = vshll.u32 %v2333, 16
      %v2677 = vrot.slane %v2675, 7
      %v2678 = vor.u32 %v2674, %v2677
      %v2679 = vsel %vm2381, %v2670, %v2678
      %v2680 = vrot.slane %v2678, 4
      %v2682 = vshrl.u32 %v2334, 16
      %v2684 = vrot.slane %v2682, 6
      %v2685 = vshll.u32 %v2334, 16
      %v2687 = vrot.slane %v2685, 7
      %v2688 = vor.u32 %v2684, %v2687
      %v2689 = vsel %vm2381, %v2680, %v2688
      %v2691 = vshrl.u32 %v2336, 16
      %v2693 = vrot.slane %v2691, 6
      %v2694 = vshll.u32 %v2336, 16
      %v2696 = vrot.slane %v2694, 7
      %v2697 = vor.u32 %v2693, %v2696
      %v2698 = vrot.slane %v2697, 4
      %v2700 = vshrl.u32 %v2337, 16
      %v2702 = vrot.slane %v2700, 6
      %v2703 = vshll.u32 %v2337, 16
      %v2705 = vrot.slane %v2703, 7
      %v2706 = vor.u32 %v2702, %v2705
      %v2707 = vsel %vm2381, %v2698, %v2706
      %v2708 = vrot.slane %v2706, 4
      %v2710 = vshrl.u32 %v2338, 16
      %v2712 = vrot.slane %v2710, 6
      %v2713 = vshll.u32 %v2338, 16
      %v2715 = vrot.slane %v2713, 7
      %v2716 = vor.u32 %v2712, %v2715
      %v2717 = vsel %vm2381, %v2708, %v2716
      %v2719 = vshrl.u32 %v2340, 16
      %v2721 = vrot.slane %v2719, 6
      %v2722 = vshll.u32 %v2340, 16
      %v2724 = vrot.slane %v2722, 7
      %v2725 = vor.u32 %v2721, %v2724
      %v2726 = vrot.slane %v2725, 4
      %v2728 = vshrl.u32 %v2341, 16
      %v2730 = vrot.slane %v2728, 6
      %v2731 = vshll.u32 %v2341, 16
      %v2733 = vrot.slane %v2731, 7
      %v2734 = vor.u32 %v2730, %v2733
      %v2735 = vsel %vm2381, %v2726, %v2734
      %v2736 = vrot.slane %v2734, 4
      %v2738 = vshrl.u32 %v2342, 16
      %v2740 = vrot.slane %v2738, 6
      %v2741 = vshll.u32 %v2342, 16
      %v2743 = vrot.slane %v2741, 7
      %v2744 = vor.u32 %v2740, %v2743
      %v2745 = vsel %vm2381, %v2736, %v2744
      %v2747 = vshrl.u32 %v2344, 16
      %v2749 = vrot.slane %v2747, 6
      %v2750 = vshll.u32 %v2344, 16
      %v2752 = vrot.slane %v2750, 7
      %v2753 = vor.u32 %v2749, %v2752
      %v2754 = vrot.slane %v2753, 4
      %v2756 = vshrl.u32 %v2345, 16
      %v2758 = vrot.slane %v2756, 6
      %v2759 = vshll.u32 %v2345, 16
      %v2761 = vrot.slane %v2759, 7
      %v2762 = vor.u32 %v2758, %v2761
      %v2763 = vsel %vm2381, %v2754, %v2762
      %v2764 = vrot.slane %v2762, 4
      %v2766 = vshrl.u32 %v2346, 16
      %v2768 = vrot.slane %v2766, 6
      %v2769 = vshll.u32 %v2346, 16
      %v2771 = vrot.slane %v2769, 7
      %v2772 = vor.u32 %v2768, %v2771
      %v2773 = vsel %vm2381, %v2764, %v2772
      %v2775 = vshrl.u32 %v2348, 16
      %v2777 = vrot.slane %v2775, 6
      %v2778 = vshll.u32 %v2348, 16
      %v2780 = vrot.slane %v2778, 7
      %v2781 = vor.u32 %v2777, %v2780
      %v2782 = vrot.slane %v2781, 4
      %v2784 = vshrl.u32 %v2349, 16
      %v2786 = vrot.slane %v2784, 6
      %v2787 = vshll.u32 %v2349, 16
      %v2789 = vrot.slane %v2787, 7
      %v2790 = vor.u32 %v2786, %v2789
      %v2791 = vsel %vm2381, %v2782, %v2790
      %v2792 = vrot.slane %v2790, 4
      %v2794 = vshrl.u32 %v2350, 16
      %v2796 = vrot.slane %v2794, 6
      %v2797 = vshll.u32 %v2350, 16
      %v2799 = vrot.slane %v2797, 7
      %v2800 = vor.u32 %v2796, %v2799
      %v2801 = vsel %vm2381, %v2792, %v2800
      %v2803 = vshrl.u32 %v2352, 16
      %v2805 = vrot.slane %v2803, 6
      %v2806 = vshll.u32 %v2352, 16
      %v2808 = vrot.slane %v2806, 7
      %v2809 = vor.u32 %v2805, %v2808
      %v2810 = vrot.slane %v2809, 4
      %v2812 = vshrl.u32 %v2353, 16
      %v2814 = vrot.slane %v2812, 6
      %v2815 = vshll.u32 %v2353, 16
      %v2817 = vrot.slane %v2815, 7
      %v2818 = vor.u32 %v2814, %v2817
      %v2819 = vsel %vm2381, %v2810, %v2818
      %v2820 = vrot.slane %v2818, 4
      %v2822 = vshrl.u32 %v2354, 16
      %v2824 = vrot.slane %v2822, 6
      %v2825 = vshll.u32 %v2354, 16
      %v2827 = vrot.slane %v2825, 7
      %v2828 = vor.u32 %v2824, %v2827
      %v2829 = vsel %vm2381, %v2820, %v2828
      %vm2830 = vsmask.f32 2304
      %vm2831 = vsmask.f32 6416
      %vm2832 = vmor %vm2830, %vm2831
      %v2833 = vrot.slane %v2392, 5
      %v2834 = vrot.slane %v2395, 6
      %v2835 = vor.u32 %v2833, %v2834
      %v2836 = vrot.slane %v2835, 4
      %v2837 = vrot.slane %v2402, 5
      %v2838 = vrot.slane %v2405, 6
      %v2839 = vor.u32 %v2837, %v2838
      %v2840 = vsel %vm2832, %v2836, %v2839
      %v2841 = vrot.slane %v2839, 4
      %v2843 = vshrl.u32 %v2295, 16
      %v2845 = vrot.slane %v2843, 5
      %v2846 = vshll.u32 %v2295, 16
      %v2848 = vrot.slane %v2846, 6
      %v2849 = vor.u32 %v2845, %v2848
      %v2850 = vsel %vm2832, %v2841, %v2849
      %v2851 = vrot.slane %v2420, 5
      %v2852 = vrot.slane %v2423, 6
      %v2853 = vor.u32 %v2851, %v2852
      %v2854 = vrot.slane %v2853, 4
      %v2855 = vrot.slane %v2430, 5
      %v2856 = vrot.slane %v2433, 6
      %v2857 = vor.u32 %v2855, %v2856
      %v2858 = vsel %vm2832, %v2854, %v2857
      %v2859 = vrot.slane %v2857, 4
      %v2861 = vshrl.u32 %v2299, 16
      %v2863 = vrot.slane %v2861, 5
      %v2864 = vshll.u32 %v2299, 16
      %v2866 = vrot.slane %v2864, 6
      %v2867 = vor.u32 %v2863, %v2866
      %v2868 = vsel %vm2832, %v2859, %v2867
      %v2869 = vrot.slane %v2448, 5
      %v2870 = vrot.slane %v2451, 6
      %v2871 = vor.u32 %v2869, %v2870
      %v2872 = vrot.slane %v2871, 4
      %v2873 = vrot.slane %v2458, 5
      %v2874 = vrot.slane %v2461, 6
      %v2875 = vor.u32 %v2873, %v2874
      %v2876 = vsel %vm2832, %v2872, %v2875
      %v2877 = vrot.slane %v2875, 4
      %v2879 = vshrl.u32 %v2303, 16
      %v2881 = vrot.slane %v2879, 5
      %v2882 = vshll.u32 %v2303, 16
      %v2884 = vrot.slane %v2882, 6
      %v2885 = vor.u32 %v2881, %v2884
      %v2886 = vsel %vm2832, %v2877, %v2885
      %v2887 = vrot.slane %v2476, 5
      %v2888 = vrot.slane %v2479, 6
      %v2889 = vor.u32 %v2887, %v2888
      %v2890 = vrot.slane %v2889, 4
      %v2891 = vrot.slane %v2486, 5
      %v2892 = vrot.slane %v2489, 6
      %v2893 = vor.u32 %v2891, %v2892
      %v2894 = vsel %vm2832, %v2890, %v2893
      %v2895 = vrot.slane %v2893, 4
      %v2897 = vshrl.u32 %v2307, 16
      %v2899 = vrot.slane %v2897, 5
      %v2900 = vshll.u32 %v2307, 16
      %v2902 = vrot.slane %v2900, 6
      %v2903 = vor.u32 %v2899, %v2902
      %v2904 = vsel %vm2832, %v2895, %v2903
      %v2905 = vrot.slane %v2504, 5
      %v2906 = vrot.slane %v2507, 6
      %v2907 = vor.u32 %v2905, %v2906
      %v2908 = vrot.slane %v2907, 4
      %v2909 = vrot.slane %v2514, 5
      %v2910 = vrot.slane %v2517, 6
      %v2911 = vor.u32 %v2909, %v2910
      %v2912 = vsel %vm2832, %v2908, %v2911
      %v2913 = vrot.slane %v2911, 4
      %v2915 = vshrl.u32 %v2311, 16
      %v2917 = vrot.slane %v2915, 5
      %v2918 = vshll.u32 %v2311, 16
      %v2920 = vrot.slane %v2918, 6
      %v2921 = vor.u32 %v2917, %v2920
      %v2922 = vsel %vm2832, %v2913, %v2921
      %v2923 = vrot.slane %v2532, 5
      %v2924 = vrot.slane %v2535, 6
      %v2925 = vor.u32 %v2923, %v2924
      %v2926 = vrot.slane %v2925, 4
      %v2927 = vrot.slane %v2542, 5
      %v2928 = vrot.slane %v2545, 6
      %v2929 = vor.u32 %v2927, %v2928
      %v2930 = vsel %vm2832, %v2926, %v2929
      %v2931 = vrot.slane %v2929, 4
      %v2933 = vshrl.u32 %v2315, 16
      %v2935 = vrot.slane %v2933, 5
      %v2936 = vshll.u32 %v2315, 16
      %v2938 = vrot.slane %v2936, 6
      %v2939 = vor.u32 %v2935, %v2938
      %v2940 = vsel %vm2832, %v2931, %v2939
      %v2941 = vrot.slane %v2560, 5
      %v2942 = vrot.slane %v2563, 6
      %v2943 = vor.u32 %v2941, %v2942
      %v2944 = vrot.slane %v2943, 4
      %v2945 = vrot.slane %v2570, 5
      %v2946 = vrot.slane %v2573, 6
      %v2947 = vor.u32 %v2945, %v2946
      %v2948 = vsel %vm2832, %v2944, %v2947
      %v2949 = vrot.slane %v2947, 4
      %v2951 = vshrl.u32 %v2319, 16
      %v2953 = vrot.slane %v2951, 5
      %v2954 = vshll.u32 %v2319, 16
      %v2956 = vrot.slane %v2954, 6
      %v2957 = vor.u32 %v2953, %v2956
      %v2958 = vsel %vm2832, %v2949, %v2957
      %v2959 = vrot.slane %v2588, 5
      %v2960 = vrot.slane %v2591, 6
      %v2961 = vor.u32 %v2959, %v2960
      %v2962 = vrot.slane %v2961, 4
      %v2963 = vrot.slane %v2598, 5
      %v2964 = vrot.slane %v2601, 6
      %v2965 = vor.u32 %v2963, %v2964
      %v2966 = vsel %vm2832, %v2962, %v2965
      %v2967 = vrot.slane %v2965, 4
      %v2969 = vshrl.u32 %v2323, 16
      %v2971 = vrot.slane %v2969, 5
      %v2972 = vshll.u32 %v2323, 16
      %v2974 = vrot.slane %v2972, 6
      %v2975 = vor.u32 %v2971, %v2974
      %v2976 = vsel %vm2832, %v2967, %v2975
      %v2977 = vrot.slane %v2616, 5
      %v2978 = vrot.slane %v2619, 6
      %v2979 = vor.u32 %v2977, %v2978
      %v2980 = vrot.slane %v2979, 4
      %v2981 = vrot.slane %v2626, 5
      %v2982 = vrot.slane %v2629, 6
      %v2983 = vor.u32 %v2981, %v2982
      %v2984 = vsel %vm2832, %v2980, %v2983
      %v2985 = vrot.slane %v2983, 4
      %v2987 = vshrl.u32 %v2327, 16
      %v2989 = vrot.slane %v2987, 5
      %v2990 = vshll.u32 %v2327, 16
      %v2992 = vrot.slane %v2990, 6
      %v2993 = vor.u32 %v2989, %v2992
      %v2994 = vsel %vm2832, %v2985, %v2993
      %v2995 = vrot.slane %v2644, 5
      %v2996 = vrot.slane %v2647, 6
      %v2997 = vor.u32 %v2995, %v2996
      %v2998 = vrot.slane %v2997, 4
      %v2999 = vrot.slane %v2654, 5
      %v3000 = vrot.slane %v2657, 6
      %v3001 = vor.u32 %v2999, %v3000
      %v3002 = vsel %vm2832, %v2998, %v3001
      %v3003 = vrot.slane %v3001, 4
      %v3005 = vshrl.u32 %v2331, 16
      %v3007 = vrot.slane %v3005, 5
      %v3008 = vshll.u32 %v2331, 16
      %v3010 = vrot.slane %v3008, 6
      %v3011 = vor.u32 %v3007, %v3010
      %v3012 = vsel %vm2832, %v3003, %v3011
      %v3013 = vrot.slane %v2672, 5
      %v3014 = vrot.slane %v2675, 6
      %v3015 = vor.u32 %v3013, %v3014
      %v3016 = vrot.slane %v3015, 4
      %v3017 = vrot.slane %v2682, 5
      %v3018 = vrot.slane %v2685, 6
      %v3019 = vor.u32 %v3017, %v3018
      %v3020 = vsel %vm2832, %v3016, %v3019
      %v3021 = vrot.slane %v3019, 4
      %v3023 = vshrl.u32 %v2335, 16
      %v3025 = vrot.slane %v3023, 5
      %v3026 = vshll.u32 %v2335, 16
      %v3028 = vrot.slane %v3026, 6
      %v3029 = vor.u32 %v3025, %v3028
      %v3030 = vsel %vm2832, %v3021, %v3029
      %v3031 = vrot.slane %v2700, 5
      %v3032 = vrot.slane %v2703, 6
      %v3033 = vor.u32 %v3031, %v3032
      %v3034 = vrot.slane %v3033, 4
      %v3035 = vrot.slane %v2710, 5
      %v3036 = vrot.slane %v2713, 6
      %v3037 = vor.u32 %v3035, %v3036
      %v3038 = vsel %vm2832, %v3034, %v3037
      %v3039 = vrot.slane %v3037, 4
      %v3041 = vshrl.u32 %v2339, 16
      %v3043 = vrot.slane %v3041, 5
      %v3044 = vshll.u32 %v2339, 16
      %v3046 = vrot.slane %v3044, 6
      %v3047 = vor.u32 %v3043, %v3046
      %v3048 = vsel %vm2832, %v3039, %v3047
      %v3049 = vrot.slane %v2728, 5
      %v3050 = vrot.slane %v2731, 6
      %v3051 = vor.u32 %v3049, %v3050
      %v3052 = vrot.slane %v3051, 4
      %v3053 = vrot.slane %v2738, 5
      %v3054 = vrot.slane %v2741, 6
      %v3055 = vor.u32 %v3053, %v3054
      %v3056 = vsel %vm2832, %v3052, %v3055
      %v3057 = vrot.slane %v3055, 4
      %v3059 = vshrl.u32 %v2343, 16
      %v3061 = vrot.slane %v3059, 5
      %v3062 = vshll.u32 %v2343, 16
      %v3064 = vrot.slane %v3062, 6
      %v3065 = vor.u32 %v3061, %v3064
      %v3066 = vsel %vm2832, %v3057, %v3065
      %v3067 = vrot.slane %v2756, 5
      %v3068 = vrot.slane %v2759, 6
      %v3069 = vor.u32 %v3067, %v3068
      %v3070 = vrot.slane %v3069, 4
      %v3071 = vrot.slane %v2766, 5
      %v3072 = vrot.slane %v2769, 6
      %v3073 = vor.u32 %v3071, %v3072
      %v3074 = vsel %vm2832, %v3070, %v3073
      %v3075 = vrot.slane %v3073, 4
      %v3077 = vshrl.u32 %v2347, 16
      %v3079 = vrot.slane %v3077, 5
      %v3080 = vshll.u32 %v2347, 16
      %v3082 = vrot.slane %v3080, 6
      %v3083 = vor.u32 %v3079, %v3082
      %v3084 = vsel %vm2832, %v3075, %v3083
      %v3085 = vrot.slane %v2784, 5
      %v3086 = vrot.slane %v2787, 6
      %v3087 = vor.u32 %v3085, %v3086
      %v3088 = vrot.slane %v3087, 4
      %v3089 = vrot.slane %v2794, 5
      %v3090 = vrot.slane %v2797, 6
      %v3091 = vor.u32 %v3089, %v3090
      %v3092 = vsel %vm2832, %v3088, %v3091
      %v3093 = vrot.slane %v3091, 4
      %v3095 = vshrl.u32 %v2351, 16
      %v3097 = vrot.slane %v3095, 5
      %v3098 = vshll.u32 %v2351, 16
      %v3100 = vrot.slane %v3098, 6
      %v3101 = vor.u32 %v3097, %v3100
      %v3102 = vsel %vm2832, %v3093, %v3101
      %v3103 = vrot.slane %v2812, 5
      %v3104 = vrot.slane %v2815, 6
      %v3105 = vor.u32 %v3103, %v3104
      %v3106 = vrot.slane %v3105, 4
      %v3107 = vrot.slane %v2822, 5
      %v3108 = vrot.slane %v2825, 6
      %v3109 = vor.u32 %v3107, %v3108
      %v3110 = vsel %vm2832, %v3106, %v3109
      %v3111 = vrot.slane %v3109, 4
      %v3113 = vshrl.u32 %v2355, 16
      %v3115 = vrot.slane %v3113, 5
      %v3116 = vshll.u32 %v2355, 16
      %v3118 = vrot.slane %v3116, 6
      %v3119 = vor.u32 %v3115, %v3118
      %v3120 = vsel %vm2832, %v3111, %v3119
      %v3122 = vshrl.u32 %v2356, 16
      %v3124 = vrot.slane %v3122, 6
      %v3125 = vshll.u32 %v2356, 16
      %v3127 = vrot.slane %v3125, 7
      %v3128 = vor.u32 %v3124, %v3127
      %v3129 = vrot.slane %v3128, 4
      %v3131 = vshrl.u32 %v2357, 16
      %v3133 = vrot.slane %v3131, 6
      %v3134 = vshll.u32 %v2357, 16
      %v3136 = vrot.slane %v3134, 7
      %v3137 = vor.u32 %v3133, %v3136
      %v3138 = vsel %vm2381, %v3129, %v3137
      %v3139 = vrot.slane %v3137, 4
      %v3141 = vshrl.u32 %v2358, 16
      %v3143 = vrot.slane %v3141, 6
      %v3144 = vshll.u32 %v2358, 16
      %v3146 = vrot.slane %v3144, 7
      %v3147 = vor.u32 %v3143, %v3146
      %v3148 = vsel %vm2381, %v3139, %v3147
      %v3150 = vshrl.u32 %v2360, 16
      %v3152 = vrot.slane %v3150, 6
      %v3153 = vshll.u32 %v2360, 16
      %v3155 = vrot.slane %v3153, 7
      %v3156 = vor.u32 %v3152, %v3155
      %v3157 = vrot.slane %v3156, 4
      %v3159 = vshrl.u32 %v2361, 16
      %v3161 = vrot.slane %v3159, 6
      %v3162 = vshll.u32 %v2361, 16
      %v3164 = vrot.slane %v3162, 7
      %v3165 = vor.u32 %v3161, %v3164
      %v3166 = vsel %vm2381, %v3157, %v3165
      %v3167 = vrot.slane %v3165, 4
      %v3169 = vshrl.u32 %v2362, 16
      %v3171 = vrot.slane %v3169, 6
      %v3172 = vshll.u32 %v2362, 16
      %v3174 = vrot.slane %v3172, 7
      %v3175 = vor.u32 %v3171, %v3174
      %v3176 = vsel %vm2381, %v3167, %v3175
      %v3178 = vshrl.u32 %v2364, 16
      %v3180 = vrot.slane %v3178, 6
      %v3181 = vshll.u32 %v2364, 16
      %v3183 = vrot.slane %v3181, 7
      %v3184 = vor.u32 %v3180, %v3183
      %v3185 = vrot.slane %v3184, 4
      %v3187 = vshrl.u32 %v2365, 16
      %v3189 = vrot.slane %v3187, 6
      %v3190 = vshll.u32 %v2365, 16
      %v3192 = vrot.slane %v3190, 7
      %v3193 = vor.u32 %v3189, %v3192
      %v3194 = vsel %vm2381, %v3185, %v3193
      %v3195 = vrot.slane %v3193, 4
      %v3197 = vshrl.u32 %v2366, 16
      %v3199 = vrot.slane %v3197, 6
      %v3200 = vshll.u32 %v2366, 16
      %v3202 = vrot.slane %v3200, 7
      %v3203 = vor.u32 %v3199, %v3202
      %v3204 = vsel %vm2381, %v3195, %v3203
      %v3205 = vrot.slane %v3131, 5
      %v3206 = vrot.slane %v3134, 6
      %v3207 = vor.u32 %v3205, %v3206
      %v3208 = vrot.slane %v3207, 4
      %v3209 = vrot.slane %v3141, 5
      %v3210 = vrot.slane %v3144, 6
      %v3211 = vor.u32 %v3209, %v3210
      %v3212 = vsel %vm2832, %v3208, %v3211
      %v3213 = vrot.slane %v3211, 4
      %v3215 = vshrl.u32 %v2359, 16
      %v3217 = vrot.slane %v3215, 5
      %v3218 = vshll.u32 %v2359, 16
      %v3220 = vrot.slane %v3218, 6
      %v3221 = vor.u32 %v3217, %v3220
      %v3222 = vsel %vm2832, %v3213, %v3221
      %v3223 = vrot.slane %v3159, 5
      %v3224 = vrot.slane %v3162, 6
      %v3225 = vor.u32 %v3223, %v3224
      %v3226 = vrot.slane %v3225, 4
      %v3227 = vrot.slane %v3169, 5
      %v3228 = vrot.slane %v3172, 6
      %v3229 = vor.u32 %v3227, %v3228
      %v3230 = vsel %vm2832, %v3226, %v3229
      %v3231 = vrot.slane %v3229, 4
      %v3233 = vshrl.u32 %v2363, 16
      %v3235 = vrot.slane %v3233, 5
      %v3236 = vshll.u32 %v2363, 16
      %v3238 = vrot.slane %v3236, 6
      %v3239 = vor.u32 %v3235, %v3238
      %v3240 = vsel %vm2832, %v3231, %v3239
      %v3241 = vrot.slane %v3187, 5
      %v3242 = vrot.slane %v3190, 6
      %v3243 = vor.u32 %v3241, %v3242
      %v3244 = vrot.slane %v3243, 4
      %v3245 = vrot.slane %v3197, 5
      %v3246 = vrot.slane %v3200, 6
      %v3247 = vor.u32 %v3245, %v3246
      %v3248 = vsel %vm2832, %v3244, %v3247
      %v3249 = vrot.slane %v3247, 4
      %v3251 = vshrl.u32 %v2367, 16
      %v3253 = vrot.slane %v3251, 5
      %v3254 = vshll.u32 %v2367, 16
      %v3256 = vrot.slane %v3254, 6
      %v3257 = vor.u32 %v3253, %v3256
      %v3258 = vsel %vm2832, %v3249, %v3257
      %v3260 = vshrl.u32 %v2368, 16
      %v3262 = vrot.slane %v3260, 6
      %v3263 = vshll.u32 %v2368, 16
      %v3265 = vrot.slane %v3263, 7
      %v3266 = vor.u32 %v3262, %v3265
      %v3267 = vrot.slane %v3266, 4
      %v3269 = vshrl.u32 %v2369, 16
      %v3271 = vrot.slane %v3269, 6
      %v3272 = vshll.u32 %v2369, 16
      %v3274 = vrot.slane %v3272, 7
      %v3275 = vor.u32 %v3271, %v3274
      %v3276 = vsel %vm2381, %v3267, %v3275
      %v3277 = vrot.slane %v3275, 4
      %v3279 = vshrl.u32 %v2370, 16
      %v3281 = vrot.slane %v3279, 6
      %v3282 = vshll.u32 %v2370, 16
      %v3284 = vrot.slane %v3282, 7
      %v3285 = vor.u32 %v3281, %v3284
      %v3286 = vsel %vm2381, %v3277, %v3285
      %v3288 = vshrl.u32 %v2372, 16
      %v3290 = vrot.slane %v3288, 6
      %v3291 = vshll.u32 %v2372, 16
      %v3293 = vrot.slane %v3291, 7
      %v3294 = vor.u32 %v3290, %v3293
      %v3295 = vrot.slane %v3294, 4
      %v3297 = vshrl.u32 %v2373, 16
      %v3299 = vrot.slane %v3297, 6
      %v3300 = vshll.u32 %v2373, 16
      %v3302 = vrot.slane %v3300, 7
      %v3303 = vor.u32 %v3299, %v3302
      %v3304 = vsel %vm2381, %v3295, %v3303
      %v3305 = vrot.slane %v3303, 4
      %v3307 = vshrl.u32 %v2374, 16
      %v3309 = vrot.slane %v3307, 6
      %v3310 = vshll.u32 %v2374, 16
      %v3312 = vrot.slane %v3310, 7
      %v3313 = vor.u32 %v3309, %v3312
      %v3314 = vsel %vm2381, %v3305, %v3313
      %v3316 = vshrl.u32 %v2376, 16
      %v3318 = vrot.slane %v3316, 6
      %v3319 = vshll.u32 %v2376, 16
      %v3321 = vrot.slane %v3319, 7
      %v3322 = vor.u32 %v3318, %v3321
      %v3323 = vrot.slane %v3322, 4
      %v3325 = vshrl.u32 %v2377, 16
      %v3327 = vrot.slane %v3325, 6
      %v3328 = vshll.u32 %v2377, 16
      %v3330 = vrot.slane %v3328, 7
      %v3331 = vor.u32 %v3327, %v3330
      %v3332 = vsel %vm2381, %v3323, %v3331
      %v3333 = vrot.slane %v3331, 4
      %v3335 = vshrl.u32 %v2378, 16
      %v3337 = vrot.slane %v3335, 6
      %v3338 = vshll.u32 %v2378, 16
      %v3340 = vrot.slane %v3338, 7
      %v3341 = vor.u32 %v3337, %v3340
      %v3342 = vsel %vm2381, %v3333, %v3341
      %v3343 = vrot.slane %v3269, 5
      %v3344 = vrot.slane %v3272, 6
      %v3345 = vor.u32 %v3343, %v3344
      %v3346 = vrot.slane %v3345, 4
      %v3347 = vrot.slane %v3279, 5
      %v3348 = vrot.slane %v3282, 6
      %v3349 = vor.u32 %v3347, %v3348
      %v3350 = vsel %vm2832, %v3346, %v3349
      %v3351 = vrot.slane %v3349, 4
      %v3353 = vshrl.u32 %v2371, 16
      %v3355 = vrot.slane %v3353, 5
      %v3356 = vshll.u32 %v2371, 16
      %v3358 = vrot.slane %v3356, 6
      %v3359 = vor.u32 %v3355, %v3358
      %v3360 = vsel %vm2832, %v3351, %v3359
      %v3361 = vrot.slane %v3297, 5
      %v3362 = vrot.slane %v3300, 6
      %v3363 = vor.u32 %v3361, %v3362
      %v3364 = vrot.slane %v3363, 4
      %v3365 = vrot.slane %v3307, 5
      %v3366 = vrot.slane %v3310, 6
      %v3367 = vor.u32 %v3365, %v3366
      %v3368 = vsel %vm2832, %v3364, %v3367
      %v3369 = vrot.slane %v3367, 4
      %v3371 = vshrl.u32 %v2375, 16
      %v3373 = vrot.slane %v3371, 5
      %v3374 = vshll.u32 %v2375, 16
      %v3376 = vrot.slane %v3374, 6
      %v3377 = vor.u32 %v3373, %v3376
      %v3378 = vsel %vm2832, %v3369, %v3377
      %v3379 = vrot.slane %v3325, 5
      %v3380 = vrot.slane %v3328, 6
      %v3381 = vor.u32 %v3379, %v3380
      %v3382 = vrot.slane %v3381, 4
      %v3383 = vrot.slane %v3335, 5
      %v3384 = vrot.slane %v3338, 6
      %v3385 = vor.u32 %v3383, %v3384
      %v3386 = vsel %vm2832, %v3382, %v3385
      %v3387 = vrot.slane %v3385, 4
      %v3389 = vshrl.u32 %v2379, 16
      %v3391 = vrot.slane %v3389, 5
      %v3392 = vshll.u32 %v2379, 16
      %v3394 = vrot.slane %v3392, 6
      %v3395 = vor.u32 %v3391, %v3394
      %v3396 = vsel %vm2832, %v3387, %v3395
      %v3397 = vunpack.c.l.b16 %v2399
      %v3398 = vunpack.c.l.b16 %v2409
      %v3399 = vunpack.c.l.b16 %v2427
      %v3400 = vunpack.c.l.b16 %v2437
      %v3401 = vunpack.c.l.b16 %v2455
      %v3402 = vunpack.c.l.b16 %v2465
      %v3403 = vunpack.c.l.b16 %v2483
      %v3404 = vunpack.c.l.b16 %v2493
      %v3405 = vunpack.c.l.b16 %v2511
      %v3406 = vunpack.c.l.b16 %v2521
      %v3407 = vunpack.c.l.b16 %v2539
      %v3408 = vunpack.c.l.b16 %v2549
      %v3409 = vunpack.c.l.b16 %v2567
      %v3410 = vunpack.c.l.b16 %v2577
      %v3411 = vunpack.c.l.b16 %v2595
      %v3412 = vunpack.c.l.b16 %v2605
      %v3413 = vunpack.c.l.b16 %v2623
      %v3414 = vunpack.c.l.b16 %v2633
      %v3415 = vunpack.c.l.b16 %v2651
      %v3416 = vunpack.c.l.b16 %v2661
      %v3417 = vunpack.c.l.b16 %v2679
      %v3418 = vunpack.c.l.b16 %v2689
      %v3419 = vunpack.c.l.b16 %v2707
      %v3420 = vunpack.c.l.b16 %v2717
      %v3421 = vunpack.c.l.b16 %v2735
      %v3422 = vunpack.c.l.b16 %v2745
      %v3423 = vunpack.c.l.b16 %v2763
      %v3424 = vunpack.c.l.b16 %v2773
      %v3425 = vunpack.c.l.b16 %v2791
      %v3426 = vunpack.c.l.b16 %v2801
      %v3427 = vunpack.c.l.b16 %v2819
      %v3428 = vunpack.c.l.b16 %v2829
      %v3429 = vpack.c.b16 %v3398, %v3397
      %v3430 = vpack.c.b16 %v3400, %v3399
      %v3431 = vpack.c.b16 %v3402, %v3401
      %v3432 = vpack.c.b16 %v3404, %v3403
      %v3433 = vpack.c.b16 %v3406, %v3405
      %v3434 = vpack.c.b16 %v3408, %v3407
      %v3435 = vpack.c.b16 %v3410, %v3409
      %v3436 = vpack.c.b16 %v3412, %v3411
      %v3437 = vpack.c.b16 %v3414, %v3413
      %v3438 = vpack.c.b16 %v3416, %v3415
      %v3439 = vpack.c.b16 %v3418, %v3417
      %v3440 = vpack.c.b16 %v3420, %v3419
      %v3441 = vpack.c.b16 %v3422, %v3421
      %v3442 = vpack.c.b16 %v3424, %v3423
      %v3443 = vpack.c.b16 %v3426, %v3425
      %v3444 = vpack.c.b16 %v3428, %v3427
      %v3477 = vunpack.c.l.b16 %v2293
      %v3478 = vunpack.c.l.b16 %v2294
      %v3479 = vunpack.c.l.b16 %v2297
      %v3480 = vunpack.c.l.b16 %v2298
      %v3481 = vunpack.c.l.b16 %v2301
      %v3482 = vunpack.c.l.b16 %v2302
      %v3483 = vunpack.c.l.b16 %v2305
      %v3484 = vunpack.c.l.b16 %v2306
      %v3485 = vunpack.c.l.b16 %v2309
      %v3486 = vunpack.c.l.b16 %v2310
      %v3487 = vunpack.c.l.b16 %v2313
      %v3488 = vunpack.c.l.b16 %v2314
      %v3489 = vunpack.c.l.b16 %v2317
      %v3490 = vunpack.c.l.b16 %v2318
      %v3491 = vunpack.c.l.b16 %v2321
      %v3492 = vunpack.c.l.b16 %v2322
      %v3493 = vunpack.c.l.b16 %v2325
      %v3494 = vunpack.c.l.b16 %v2326
      %v3495 = vunpack.c.l.b16 %v2329
      %v3496 = vunpack.c.l.b16 %v2330
      %v3497 = vunpack.c.l.b16 %v2333
      %v3498 = vunpack.c.l.b16 %v2334
      %v3499 = vunpack.c.l.b16 %v2337
      %v3500 = vunpack.c.l.b16 %v2338
      %v3501 = vunpack.c.l.b16 %v2341
      %v3502 = vunpack.c.l.b16 %v2342
      %v3503 = vunpack.c.l.b16 %v2345
      %v3504 = vunpack.c.l.b16 %v2346
      %v3505 = vunpack.c.l.b16 %v2349
      %v3506 = vunpack.c.l.b16 %v2350
      %v3507 = vunpack.c.l.b16 %v2353
      %v3508 = vunpack.c.l.b16 %v2354
      %v3509 = vpack.c.b16 %v3478, %v3477
      %v3510 = vpack.c.b16 %v3480, %v3479
      %v3511 = vpack.c.b16 %v3482, %v3481
      %v3512 = vpack.c.b16 %v3484, %v3483
      %v3513 = vpack.c.b16 %v3486, %v3485
      %v3514 = vpack.c.b16 %v3488, %v3487
      %v3515 = vpack.c.b16 %v3490, %v3489
      %v3516 = vpack.c.b16 %v3492, %v3491
      %v3517 = vpack.c.b16 %v3494, %v3493
      %v3518 = vpack.c.b16 %v3496, %v3495
      %v3519 = vpack.c.b16 %v3498, %v3497
      %v3520 = vpack.c.b16 %v3500, %v3499
      %v3521 = vpack.c.b16 %v3502, %v3501
      %v3522 = vpack.c.b16 %v3504, %v3503
      %v3523 = vpack.c.b16 %v3506, %v3505
      %v3524 = vpack.c.b16 %v3508, %v3507
      %3525 = vrot.lane.b32.xlu0 %v3509, 8
      %v3526 = vpop.permute.xlu0 %3525
      %3527 = vrot.lane.b32.xlu0 %v3510, 8
      %v3528 = vpop.permute.xlu0 %3527
      %3529 = vrot.lane.b32.xlu0 %v3511, 8
      %v3530 = vpop.permute.xlu0 %3529
      %3531 = vrot.lane.b32.xlu0 %v3512, 8
      %v3532 = vpop.permute.xlu0 %3531
      %3533 = vrot.lane.b32.xlu0 %v3513, 8
      %v3534 = vpop.permute.xlu0 %3533
      %3535 = vrot.lane.b32.xlu0 %v3514, 8
      %v3536 = vpop.permute.xlu0 %3535
      %3537 = vrot.lane.b32.xlu0 %v3515, 8
      %v3538 = vpop.permute.xlu0 %3537
      %3539 = vrot.lane.b32.xlu0 %v3516, 8
      %v3540 = vpop.permute.xlu0 %3539
      %3541 = vrot.lane.b32.xlu0 %v3517, 8
      %v3542 = vpop.permute.xlu0 %3541
      %3543 = vrot.lane.b32.xlu0 %v3518, 8
      %v3544 = vpop.permute.xlu0 %3543
      %3545 = vrot.lane.b32.xlu0 %v3519, 8
      %v3546 = vpop.permute.xlu0 %3545
      %3547 = vrot.lane.b32.xlu0 %v3520, 8
      %v3548 = vpop.permute.xlu0 %3547
      %3549 = vrot.lane.b32.xlu0 %v3521, 8
      %v3550 = vpop.permute.xlu0 %3549
      %3551 = vrot.lane.b32.xlu0 %v3522, 8
      %v3552 = vpop.permute.xlu0 %3551
      %3553 = vrot.lane.b32.xlu0 %v3523, 8
      %v3554 = vpop.permute.xlu0 %3553
      %3555 = vrot.lane.b32.xlu0 %v3524, 8
      %v3556 = vpop.permute.xlu0 %3555
      %v3557 = vunpack.c.l.b16 %v2840
      %v3558 = vunpack.c.l.b16 %v2850
      %v3559 = vunpack.c.l.b16 %v2858
      %v3560 = vunpack.c.l.b16 %v2868
      %v3561 = vunpack.c.l.b16 %v2876
      %v3562 = vunpack.c.l.b16 %v2886
      %v3563 = vunpack.c.l.b16 %v2894
      %v3564 = vunpack.c.l.b16 %v2904
      %v3565 = vunpack.c.l.b16 %v2912
      %v3566 = vunpack.c.l.b16 %v2922
      %v3567 = vunpack.c.l.b16 %v2930
      %v3568 = vunpack.c.l.b16 %v2940
      %v3569 = vunpack.c.l.b16 %v2948
      %v3570 = vunpack.c.l.b16 %v2958
      %v3571 = vunpack.c.l.b16 %v2966
      %v3572 = vunpack.c.l.b16 %v2976
      %v3573 = vunpack.c.l.b16 %v2984
      %v3574 = vunpack.c.l.b16 %v2994
      %v3575 = vunpack.c.l.b16 %v3002
      %v3576 = vunpack.c.l.b16 %v3012
      %v3577 = vunpack.c.l.b16 %v3020
      %v3578 = vunpack.c.l.b16 %v3030
      %v3579 = vunpack.c.l.b16 %v3038
      %v3580 = vunpack.c.l.b16 %v3048
      %v3581 = vunpack.c.l.b16 %v3056
      %v3582 = vunpack.c.l.b16 %v3066
      %v3583 = vunpack.c.l.b16 %v3074
      %v3584 = vunpack.c.l.b16 %v3084
      %v3585 = vunpack.c.l.b16 %v3092
      %v3586 = vunpack.c.l.b16 %v3102
      %v3587 = vunpack.c.l.b16 %v3110
      %v3588 = vunpack.c.l.b16 %v3120
      %v3589 = vpack.c.b16 %v3558, %v3557
      %v3590 = vpack.c.b16 %v3560, %v3559
      %v3591 = vpack.c.b16 %v3562, %v3561
      %v3592 = vpack.c.b16 %v3564, %v3563
      %v3593 = vpack.c.b16 %v3566, %v3565
      %v3594 = vpack.c.b16 %v3568, %v3567
      %v3595 = vpack.c.b16 %v3570, %v3569
      %v3596 = vpack.c.b16 %v3572, %v3571
      %v3597 = vpack.c.b16 %v3574, %v3573
      %v3598 = vpack.c.b16 %v3576, %v3575
      %v3599 = vpack.c.b16 %v3578, %v3577
      %v3600 = vpack.c.b16 %v3580, %v3579
      %v3601 = vpack.c.b16 %v3582, %v3581
      %v3602 = vpack.c.b16 %v3584, %v3583
      %v3603 = vpack.c.b16 %v3586, %v3585
      %v3604 = vpack.c.b16 %v3588, %v3587
      %3605 = vrot.lane.b32.xlu0 %v3589, 16
      %v3606 = vpop.permute.xlu0 %3605
      %3607 = vrot.lane.b32.xlu0 %v3590, 16
      %v3608 = vpop.permute.xlu0 %3607
      %3609 = vrot.lane.b32.xlu0 %v3591, 16
      %v3610 = vpop.permute.xlu0 %3609
      %3611 = vrot.lane.b32.xlu0 %v3592, 16
      %v3612 = vpop.permute.xlu0 %3611
      %3613 = vrot.lane.b32.xlu0 %v3593, 16
      %v3614 = vpop.permute.xlu0 %3613
      %3615 = vrot.lane.b32.xlu0 %v3594, 16
      %v3616 = vpop.permute.xlu0 %3615
      %3617 = vrot.lane.b32.xlu0 %v3595, 16
      %v3618 = vpop.permute.xlu0 %3617
      %3619 = vrot.lane.b32.xlu0 %v3596, 16
      %v3620 = vpop.permute.xlu0 %3619
      %3621 = vrot.lane.b32.xlu0 %v3597, 16
      %v3622 = vpop.permute.xlu0 %3621
      %3623 = vrot.lane.b32.xlu0 %v3598, 16
      %v3624 = vpop.permute.xlu0 %3623
      %3625 = vrot.lane.b32.xlu0 %v3599, 16
      %v3626 = vpop.permute.xlu0 %3625
      %3627 = vrot.lane.b32.xlu0 %v3600, 16
      %v3628 = vpop.permute.xlu0 %3627
      %3629 = vrot.lane.b32.xlu0 %v3601, 16
      %v3630 = vpop.permute.xlu0 %3629
      %3631 = vrot.lane.b32.xlu0 %v3602, 16
      %v3632 = vpop.permute.xlu0 %3631
      %3633 = vrot.lane.b32.xlu0 %v3603, 16
      %v3634 = vpop.permute.xlu0 %3633
      %3635 = vrot.lane.b32.xlu0 %v3604, 16
      %v3636 = vpop.permute.xlu0 %3635
      %v3637 = vunpack.c.l.b16 %v3138
      %v3638 = vunpack.c.l.b16 %v3148
      %v3639 = vunpack.c.l.b16 %v3166
      %v3640 = vunpack.c.l.b16 %v3176
      %v3641 = vunpack.c.l.b16 %v3194
      %v3642 = vunpack.c.l.b16 %v3204
      %v3643 = vpack.c.b16 %v3638, %v3637
      %v3644 = vpack.c.b16 %v3640, %v3639
      %v3645 = vpack.c.b16 %v3642, %v3641
      %3646 = vrot.lane.b32.xlu0 %v3432, 24
      %v3647 = vpop.permute.xlu0 %3646
      %3648 = vrot.lane.b32.xlu0 %v3433, 24
      %v3649 = vpop.permute.xlu0 %3648
      %3650 = vrot.lane.b32.xlu0 %v3434, 24
      %v3651 = vpop.permute.xlu0 %3650
      %3652 = vrot.lane.b32.xlu0 %v3435, 24
      %v3653 = vpop.permute.xlu0 %3652
      %3654 = vrot.lane.b32.xlu0 %v3436, 24
      %v3655 = vpop.permute.xlu0 %3654
      %3656 = vrot.lane.b32.xlu0 %v3437, 24
      %v3657 = vpop.permute.xlu0 %3656
      %3658 = vrot.lane.b32.xlu0 %v3438, 24
      %v3659 = vpop.permute.xlu0 %3658
      %3660 = vrot.lane.b32.xlu0 %v3439, 24
      %v3661 = vpop.permute.xlu0 %3660
      %3662 = vrot.lane.b32.xlu0 %v3440, 24
      %v3663 = vpop.permute.xlu0 %3662
      %3664 = vrot.lane.b32.xlu0 %v3441, 24
      %v3665 = vpop.permute.xlu0 %3664
      %3666 = vrot.lane.b32.xlu0 %v3442, 24
      %v3667 = vpop.permute.xlu0 %3666
      %3668 = vrot.lane.b32.xlu0 %v3443, 24
      %v3669 = vpop.permute.xlu0 %3668
      %3670 = vrot.lane.b32.xlu0 %v3444, 24
      %v3671 = vpop.permute.xlu0 %3670
      %3672 = vrot.lane.b32.xlu0 %v3643, 24
      %v3673 = vpop.permute.xlu0 %3672
      %3674 = vrot.lane.b32.xlu0 %v3644, 24
      %v3675 = vpop.permute.xlu0 %3674
      %3676 = vrot.lane.b32.xlu0 %v3645, 24
      %v3677 = vpop.permute.xlu0 %3676
      %v3684 = vunpack.c.l.b16 %v2357
      %v3685 = vunpack.c.l.b16 %v2358
      %v3686 = vunpack.c.l.b16 %v2361
      %v3687 = vunpack.c.l.b16 %v2362
      %v3688 = vunpack.c.l.b16 %v2365
      %v3689 = vunpack.c.l.b16 %v2366
      %v3690 = vpack.c.b16 %v3685, %v3684
      %v3691 = vpack.c.b16 %v3687, %v3686
      %v3692 = vpack.c.b16 %v3689, %v3688
      %3693 = vrot.lane.b32.xlu0 %v3512, 32
      %v3694 = vpop.permute.xlu0 %3693
      %3695 = vrot.lane.b32.xlu0 %v3513, 32
      %v3696 = vpop.permute.xlu0 %3695
      %3697 = vrot.lane.b32.xlu0 %v3514, 32
      %v3698 = vpop.permute.xlu0 %3697
      %3699 = vrot.lane.b32.xlu0 %v3515, 32
      %v3700 = vpop.permute.xlu0 %3699
      %3701 = vrot.lane.b32.xlu0 %v3516, 32
      %v3702 = vpop.permute.xlu0 %3701
      %3703 = vrot.lane.b32.xlu0 %v3517, 32
      %v3704 = vpop.permute.xlu0 %3703
      %3705 = vrot.lane.b32.xlu0 %v3518, 32
      %v3706 = vpop.permute.xlu0 %3705
      %3707 = vrot.lane.b32.xlu0 %v3519, 32
      %v3708 = vpop.permute.xlu0 %3707
      %3709 = vrot.lane.b32.xlu0 %v3520, 32
      %v3710 = vpop.permute.xlu0 %3709
      %3711 = vrot.lane.b32.xlu0 %v3521, 32
      %v3712 = vpop.permute.xlu0 %3711
      %3713 = vrot.lane.b32.xlu0 %v3522, 32
      %v3714 = vpop.permute.xlu0 %3713
      %3715 = vrot.lane.b32.xlu0 %v3523, 32
      %v3716 = vpop.permute.xlu0 %3715
      %3717 = vrot.lane.b32.xlu0 %v3524, 32
      %v3718 = vpop.permute.xlu0 %3717
      %3719 = vrot.lane.b32.xlu0 %v3690, 32
      %v3720 = vpop.permute.xlu0 %3719
      %3721 = vrot.lane.b32.xlu0 %v3691, 32
      %v3722 = vpop.permute.xlu0 %3721
      %3723 = vrot.lane.b32.xlu0 %v3692, 32
      %v3724 = vpop.permute.xlu0 %3723
      %v3725 = vunpack.c.l.b16 %v3212
      %v3726 = vunpack.c.l.b16 %v3222
      %v3727 = vunpack.c.l.b16 %v3230
      %v3728 = vunpack.c.l.b16 %v3240
      %v3729 = vunpack.c.l.b16 %v3248
      %v3730 = vunpack.c.l.b16 %v3258
      %v3731 = vpack.c.b16 %v3726, %v3725
      %v3732 = vpack.c.b16 %v3728, %v3727
      %v3733 = vpack.c.b16 %v3730, %v3729
      %3734 = vrot.lane.b32.xlu0 %v3592, 40
      %v3735 = vpop.permute.xlu0 %3734
      %3736 = vrot.lane.b32.xlu0 %v3593, 40
      %v3737 = vpop.permute.xlu0 %3736
      %3738 = vrot.lane.b32.xlu0 %v3594, 40
      %v3739 = vpop.permute.xlu0 %3738
      %3740 = vrot.lane.b32.xlu0 %v3595, 40
      %v3741 = vpop.permute.xlu0 %3740
      %3742 = vrot.lane.b32.xlu0 %v3596, 40
      %v3743 = vpop.permute.xlu0 %3742
      %3744 = vrot.lane.b32.xlu0 %v3597, 40
      %v3745 = vpop.permute.xlu0 %3744
      %3746 = vrot.lane.b32.xlu0 %v3598, 40
      %v3747 = vpop.permute.xlu0 %3746
      %3748 = vrot.lane.b32.xlu0 %v3599, 40
      %v3749 = vpop.permute.xlu0 %3748
      %3750 = vrot.lane.b32.xlu0 %v3600, 40
      %v3751 = vpop.permute.xlu0 %3750
      %3752 = vrot.lane.b32.xlu0 %v3601, 40
      %v3753 = vpop.permute.xlu0 %3752
      %3754 = vrot.lane.b32.xlu0 %v3602, 40
      %v3755 = vpop.permute.xlu0 %3754
      %3756 = vrot.lane.b32.xlu0 %v3603, 40
      %v3757 = vpop.permute.xlu0 %3756
      %3758 = vrot.lane.b32.xlu0 %v3604, 40
      %v3759 = vpop.permute.xlu0 %3758
      %3760 = vrot.lane.b32.xlu0 %v3731, 40
      %v3761 = vpop.permute.xlu0 %3760
      %3762 = vrot.lane.b32.xlu0 %v3732, 40
      %v3763 = vpop.permute.xlu0 %3762
      %3764 = vrot.lane.b32.xlu0 %v3733, 40
      %v3765 = vpop.permute.xlu0 %3764
      %v3766 = vunpack.c.l.b16 %v3276
      %v3767 = vunpack.c.l.b16 %v3286
      %v3768 = vunpack.c.l.b16 %v3304
      %v3769 = vunpack.c.l.b16 %v3314
      %v3770 = vunpack.c.l.b16 %v3332
      %v3771 = vunpack.c.l.b16 %v3342
      %v3772 = vpack.c.b16 %v3767, %v3766
      %v3773 = vpack.c.b16 %v3769, %v3768
      %v3774 = vpack.c.b16 %v3771, %v3770
      %3775 = vrot.lane.b32.xlu0 %v3435, 48
      %v3776 = vpop.permute.xlu0 %3775
      %3777 = vrot.lane.b32.xlu0 %v3436, 48
      %v3778 = vpop.permute.xlu0 %3777
      %3779 = vrot.lane.b32.xlu0 %v3437, 48
      %v3780 = vpop.permute.xlu0 %3779
      %3781 = vrot.lane.b32.xlu0 %v3438, 48
      %v3782 = vpop.permute.xlu0 %3781
      %3783 = vrot.lane.b32.xlu0 %v3439, 48
      %v3784 = vpop.permute.xlu0 %3783
      %3785 = vrot.lane.b32.xlu0 %v3440, 48
      %v3786 = vpop.permute.xlu0 %3785
      %3787 = vrot.lane.b32.xlu0 %v3441, 48
      %v3788 = vpop.permute.xlu0 %3787
      %3789 = vrot.lane.b32.xlu0 %v3442, 48
      %v3790 = vpop.permute.xlu0 %3789
      %3791 = vrot.lane.b32.xlu0 %v3443, 48
      %v3792 = vpop.permute.xlu0 %3791
      %3793 = vrot.lane.b32.xlu0 %v3444, 48
      %v3794 = vpop.permute.xlu0 %3793
      %3795 = vrot.lane.b32.xlu0 %v3643, 48
      %v3796 = vpop.permute.xlu0 %3795
      %3797 = vrot.lane.b32.xlu0 %v3644, 48
      %v3798 = vpop.permute.xlu0 %3797
      %3799 = vrot.lane.b32.xlu0 %v3645, 48
      %v3800 = vpop.permute.xlu0 %3799
      %3801 = vrot.lane.b32.xlu0 %v3772, 48
      %v3802 = vpop.permute.xlu0 %3801
      %3803 = vrot.lane.b32.xlu0 %v3773, 48
      %v3804 = vpop.permute.xlu0 %3803
      %3805 = vrot.lane.b32.xlu0 %v3774, 48
      %v3806 = vpop.permute.xlu0 %3805
      %v3813 = vunpack.c.l.b16 %v2369
      %v3814 = vunpack.c.l.b16 %v2370
      %v3815 = vunpack.c.l.b16 %v2373
      %v3816 = vunpack.c.l.b16 %v2374
      %v3817 = vunpack.c.l.b16 %v2377
      %v3818 = vunpack.c.l.b16 %v2378
      %v3819 = vpack.c.b16 %v3814, %v3813
      %v3820 = vpack.c.b16 %v3816, %v3815
      %v3821 = vpack.c.b16 %v3818, %v3817
      %3822 = vrot.lane.b32.xlu0 %v3515, 56
      %v3823 = vpop.permute.xlu0 %3822
      %3824 = vrot.lane.b32.xlu0 %v3516, 56
      %v3825 = vpop.permute.xlu0 %3824
      %3826 = vrot.lane.b32.xlu0 %v3517, 56
      %v3827 = vpop.permute.xlu0 %3826
      %3828 = vrot.lane.b32.xlu0 %v3518, 56
      %v3829 = vpop.permute.xlu0 %3828
      %3830 = vrot.lane.b32.xlu0 %v3519, 56
      %v3831 = vpop.permute.xlu0 %3830
      %3832 = vrot.lane.b32.xlu0 %v3520, 56
      %v3833 = vpop.permute.xlu0 %3832
      %3834 = vrot.lane.b32.xlu0 %v3521, 56
      %v3835 = vpop.permute.xlu0 %3834
      %3836 = vrot.lane.b32.xlu0 %v3522, 56
      %v3837 = vpop.permute.xlu0 %3836
      %3838 = vrot.lane.b32.xlu0 %v3523, 56
      %v3839 = vpop.permute.xlu0 %3838
      %3840 = vrot.lane.b32.xlu0 %v3524, 56
      %v3841 = vpop.permute.xlu0 %3840
      %3842 = vrot.lane.b32.xlu0 %v3690, 56
      %v3843 = vpop.permute.xlu0 %3842
      %3844 = vrot.lane.b32.xlu0 %v3691, 56
      %v3845 = vpop.permute.xlu0 %3844
      %3846 = vrot.lane.b32.xlu0 %v3692, 56
      %v3847 = vpop.permute.xlu0 %3846
      %3848 = vrot.lane.b32.xlu0 %v3819, 56
      %v3849 = vpop.permute.xlu0 %3848
      %3850 = vrot.lane.b32.xlu0 %v3820, 56
      %v3851 = vpop.permute.xlu0 %3850
      %3852 = vrot.lane.b32.xlu0 %v3821, 56
      %v3853 = vpop.permute.xlu0 %3852
      %v3854 = vunpack.c.l.b16 %v3350
      %v3855 = vunpack.c.l.b16 %v3360
      %v3856 = vunpack.c.l.b16 %v3368
      %v3857 = vunpack.c.l.b16 %v3378
      %v3858 = vunpack.c.l.b16 %v3386
      %v3859 = vunpack.c.l.b16 %v3396
      %v3860 = vpack.c.b16 %v3855, %v3854
      %v3861 = vpack.c.b16 %v3857, %v3856
      %v3862 = vpack.c.b16 %v3859, %v3858
      %3863 = vrot.lane.b32.xlu0 %v3595, 64
      %v3864 = vpop.permute.xlu0 %3863
      %3865 = vrot.lane.b32.xlu0 %v3596, 64
      %v3866 = vpop.permute.xlu0 %3865
      %3867 = vrot.lane.b32.xlu0 %v3597, 64
      %v3868 = vpop.permute.xlu0 %3867
      %3869 = vrot.lane.b32.xlu0 %v3598, 64
      %v3870 = vpop.permute.xlu0 %3869
      %3871 = vrot.lane.b32.xlu0 %v3599, 64
      %v3872 = vpop.permute.xlu0 %3871
      %3873 = vrot.lane.b32.xlu0 %v3600, 64
      %v3874 = vpop.permute.xlu0 %3873
      %3875 = vrot.lane.b32.xlu0 %v3601, 64
      %v3876 = vpop.permute.xlu0 %3875
      %3877 = vrot.lane.b32.xlu0 %v3602, 64
      %v3878 = vpop.permute.xlu0 %3877
      %3879 = vrot.lane.b32.xlu0 %v3603, 64
      %v3880 = vpop.permute.xlu0 %3879
      %3881 = vrot.lane.b32.xlu0 %v3604, 64
      %v3882 = vpop.permute.xlu0 %3881
      %3883 = vrot.lane.b32.xlu0 %v3731, 64
      %v3884 = vpop.permute.xlu0 %3883
      %3885 = vrot.lane.b32.xlu0 %v3732, 64
      %v3886 = vpop.permute.xlu0 %3885
      %3887 = vrot.lane.b32.xlu0 %v3733, 64
      %v3888 = vpop.permute.xlu0 %3887
      %3889 = vrot.lane.b32.xlu0 %v3860, 64
      %v3890 = vpop.permute.xlu0 %3889
      %3891 = vrot.lane.b32.xlu0 %v3861, 64
      %v3892 = vpop.permute.xlu0 %3891
      %3893 = vrot.lane.b32.xlu0 %v3862, 64
      %v3894 = vpop.permute.xlu0 %3893
      %vm3895 = vcmask 64512
      %v3898 = vsel %vm3895, %v3429, %v3526
      %v3901 = vsel %vm3895, %v3430, %v3528
      %v3904 = vsel %vm3895, %v3431, %v3530
      %v3907 = vsel %vm3895, %v3432, %v3532
      %v3910 = vsel %vm3895, %v3433, %v3534
      %v3913 = vsel %vm3895, %v3434, %v3536
      %v3916 = vsel %vm3895, %v3435, %v3538
      %v3919 = vsel %vm3895, %v3436, %v3540
      %v3922 = vsel %vm3895, %v3437, %v3542
      %v3925 = vsel %vm3895, %v3438, %v3544
      %v3928 = vsel %vm3895, %v3439, %v3546
      %v3931 = vsel %vm3895, %v3440, %v3548
      %v3934 = vsel %vm3895, %v3441, %v3550
      %v3937 = vsel %vm3895, %v3442, %v3552
      %v3940 = vsel %vm3895, %v3443, %v3554
      %v3943 = vsel %vm3895, %v3444, %v3556
      %v3945 = vsel %vm1439, %v3898, %v3606
      %v3947 = vsel %vm1439, %v3901, %v3608
      %v3949 = vsel %vm1439, %v3904, %v3610
      %v3951 = vsel %vm1439, %v3907, %v3612
      %v3953 = vsel %vm1439, %v3910, %v3614
      %v3955 = vsel %vm1439, %v3913, %v3616
      %v3957 = vsel %vm1439, %v3916, %v3618
      %v3959 = vsel %vm1439, %v3919, %v3620
      %v3961 = vsel %vm1439, %v3922, %v3622
      %v3963 = vsel %vm1439, %v3925, %v3624
      %v3965 = vsel %vm1439, %v3928, %v3626
      %v3967 = vsel %vm1439, %v3931, %v3628
      %v3969 = vsel %vm1439, %v3934, %v3630
      %v3971 = vsel %vm1439, %v3937, %v3632
      %v3973 = vsel %vm1439, %v3940, %v3634
      %v3975 = vsel %vm1439, %v3943, %v3636
      %vm3976 = vcmask 195584
      %v3978 = vsel %vm3976, %v3945, %v3647
      %v3980 = vsel %vm3976, %v3947, %v3649
      %v3982 = vsel %vm3976, %v3949, %v3651
      %v3984 = vsel %vm3976, %v3951, %v3653
      %v3986 = vsel %vm3976, %v3953, %v3655
      %v3988 = vsel %vm3976, %v3955, %v3657
      %v3990 = vsel %vm3976, %v3957, %v3659
      %v3992 = vsel %vm3976, %v3959, %v3661
      %v3994 = vsel %vm3976, %v3961, %v3663
      %v3996 = vsel %vm3976, %v3963, %v3665
      %v3998 = vsel %vm3976, %v3965, %v3667
      %v4000 = vsel %vm3976, %v3967, %v3669
      %v4002 = vsel %vm3976, %v3969, %v3671
      %v4004 = vsel %vm3976, %v3971, %v3673
      %v4006 = vsel %vm3976, %v3973, %v3675
      %v4008 = vsel %vm3976, %v3975, %v3677
      %v4010 = vsel %vm1488, %v3978, %v3694
      %v4012 = vsel %vm1488, %v3980, %v3696
      %v4014 = vsel %vm1488, %v3982, %v3698
      %v4016 = vsel %vm1488, %v3984, %v3700
      %v4018 = vsel %vm1488, %v3986, %v3702
      %v4020 = vsel %vm1488, %v3988, %v3704
      %v4022 = vsel %vm1488, %v3990, %v3706
      %v4024 = vsel %vm1488, %v3992, %v3708
      %v4026 = vsel %vm1488, %v3994, %v3710
      %v4028 = vsel %vm1488, %v3996, %v3712
      %v4030 = vsel %vm1488, %v3998, %v3714
      %v4032 = vsel %vm1488, %v4000, %v3716
      %v4034 = vsel %vm1488, %v4002, %v3718
      %v4036 = vsel %vm1488, %v4004, %v3720
      %v4038 = vsel %vm1488, %v4006, %v3722
      %v4040 = vsel %vm1488, %v4008, %v3724
      %vm4041 = vcmask 326656
      %v4043 = vsel %vm4041, %v4010, %v3735
      %v4045 = vsel %vm4041, %v4012, %v3737
      %v4047 = vsel %vm4041, %v4014, %v3739
      %v4049 = vsel %vm4041, %v4016, %v3741
      %v4051 = vsel %vm4041, %v4018, %v3743
      %v4053 = vsel %vm4041, %v4020, %v3745
      %v4055 = vsel %vm4041, %v4022, %v3747
      %v4057 = vsel %vm4041, %v4024, %v3749
      %v4059 = vsel %vm4041, %v4026, %v3751
      %v4061 = vsel %vm4041, %v4028, %v3753
      %v4063 = vsel %vm4041, %v4030, %v3755
      %v4065 = vsel %vm4041, %v4032, %v3757
      %v4067 = vsel %vm4041, %v4034, %v3759
      %v4069 = vsel %vm4041, %v4036, %v3761
      %v4071 = vsel %vm4041, %v4038, %v3763
      %v4073 = vsel %vm4041, %v4040, %v3765
      %v4075 = vsel %vm1521, %v4043, %v3776
      %v4077 = vsel %vm1521, %v4045, %v3778
      %v4079 = vsel %vm1521, %v4047, %v3780
      %v4081 = vsel %vm1521, %v4049, %v3782
      %v4083 = vsel %vm1521, %v4051, %v3784
      %v4085 = vsel %vm1521, %v4053, %v3786
      %v4087 = vsel %vm1521, %v4055, %v3788
      %v4089 = vsel %vm1521, %v4057, %v3790
      %v4091 = vsel %vm1521, %v4059, %v3792
      %v4093 = vsel %vm1521, %v4061, %v3794
      %v4095 = vsel %vm1521, %v4063, %v3796
      %v4097 = vsel %vm1521, %v4065, %v3798
      %v4099 = vsel %vm1521, %v4067, %v3800
      %v4101 = vsel %vm1521, %v4069, %v3802
      %v4103 = vsel %vm1521, %v4071, %v3804
      %v4105 = vsel %vm1521, %v4073, %v3806
      %vm4106 = vcmask 457728
      %v4108 = vsel %vm4106, %v4075, %v3823
      %v4110 = vsel %vm4106, %v4077, %v3825
      %v4112 = vsel %vm4106, %v4079, %v3827
      %v4114 = vsel %vm4106, %v4081, %v3829
      %v4116 = vsel %vm4106, %v4083, %v3831
      %v4118 = vsel %vm4106, %v4085, %v3833
      %v4120 = vsel %vm4106, %v4087, %v3835
      %v4122 = vsel %vm4106, %v4089, %v3837
      %v4124 = vsel %vm4106, %v4091, %v3839
      %v4126 = vsel %vm4106, %v4093, %v3841
      %v4128 = vsel %vm4106, %v4095, %v3843
      %v4130 = vsel %vm4106, %v4097, %v3845
      %v4132 = vsel %vm4106, %v4099, %v3847
      %v4134 = vsel %vm4106, %v4101, %v3849
      %v4136 = vsel %vm4106, %v4103, %v3851
      %v4138 = vsel %vm4106, %v4105, %v3853
      %v4140 = vsel %vm1554, %v4108, %v3864
      %v4142 = vsel %vm1554, %v4110, %v3866
      %v4144 = vsel %vm1554, %v4112, %v3868
      %v4146 = vsel %vm1554, %v4114, %v3870
      %v4148 = vsel %vm1554, %v4116, %v3872
      %v4150 = vsel %vm1554, %v4118, %v3874
      %v4152 = vsel %vm1554, %v4120, %v3876
      %v4154 = vsel %vm1554, %v4122, %v3878
      %v4156 = vsel %vm1554, %v4124, %v3880
      %v4158 = vsel %vm1554, %v4126, %v3882
      %v4160 = vsel %vm1554, %v4128, %v3884
      %v4162 = vsel %vm1554, %v4130, %v3886
      %v4164 = vsel %vm1554, %v4132, %v3888
      %v4166 = vsel %vm1554, %v4134, %v3890
      %v4168 = vsel %vm1554, %v4136, %v3892
      %v4170 = vsel %vm1554, %v4138, %v3894
      %vm4187 = vcmask 1040384
      %vm4188 = vcmask 1044484
      %vm4189 = vmor %vm4187, %vm4188
      %v4190 = vrot.slane %v2296, 7
      %v4191 = vrot.slane %v4190, 4
      %v4192 = vrot.slane %v2297, 7
      %v4193 = vsel %vm4189, %v4191, %v4192
      %v4194 = vrot.slane %v4192, 4
      %v4195 = vrot.slane %v2298, 7
      %v4196 = vsel %vm4189, %v4194, %v4195
      %v4197 = vrot.slane %v2300, 7
      %v4198 = vrot.slane %v4197, 4
      %v4199 = vrot.slane %v2301, 7
      %v4200 = vsel %vm4189, %v4198, %v4199
      %v4201 = vrot.slane %v4199, 4
      %v4202 = vrot.slane %v2302, 7
      %v4203 = vsel %vm4189, %v4201, %v4202
      %v4204 = vrot.slane %v2304, 7
      %v4205 = vrot.slane %v4204, 4
      %v4206 = vrot.slane %v2305, 7
      %v4207 = vsel %vm4189, %v4205, %v4206
      %v4208 = vrot.slane %v4206, 4
      %v4209 = vrot.slane %v2306, 7
      %v4210 = vsel %vm4189, %v4208, %v4209
      %v4211 = vrot.slane %v2308, 7
      %v4212 = vrot.slane %v4211, 4
      %v4213 = vrot.slane %v2309, 7
      %v4214 = vsel %vm4189, %v4212, %v4213
      %v4215 = vrot.slane %v4213, 4
      %v4216 = vrot.slane %v2310, 7
      %v4217 = vsel %vm4189, %v4215, %v4216
      %v4218 = vrot.slane %v2312, 7
      %v4219 = vrot.slane %v4218, 4
      %v4220 = vrot.slane %v2313, 7
      %v4221 = vsel %vm4189, %v4219, %v4220
      %v4222 = vrot.slane %v4220, 4
      %v4223 = vrot.slane %v2314, 7
      %v4224 = vsel %vm4189, %v4222, %v4223
      %v4225 = vrot.slane %v2316, 7
      %v4226 = vrot.slane %v4225, 4
      %v4227 = vrot.slane %v2317, 7
      %v4228 = vsel %vm4189, %v4226, %v4227
      %v4229 = vrot.slane %v4227, 4
      %v4230 = vrot.slane %v2318, 7
      %v4231 = vsel %vm4189, %v4229, %v4230
      %v4232 = vrot.slane %v2320, 7
      %v4233 = vrot.slane %v4232, 4
      %v4234 = vrot.slane %v2321, 7
      %v4235 = vsel %vm4189, %v4233, %v4234
      %v4236 = vrot.slane %v4234, 4
      %v4237 = vrot.slane %v2322, 7
      %v4238 = vsel %vm4189, %v4236, %v4237
      %v4239 = vrot.slane %v2324, 7
      %v4240 = vrot.slane %v4239, 4
      %v4241 = vrot.slane %v2325, 7
      %v4242 = vsel %vm4189, %v4240, %v4241
      %v4243 = vrot.slane %v4241, 4
      %v4244 = vrot.slane %v2326, 7
      %v4245 = vsel %vm4189, %v4243, %v4244
      %v4246 = vrot.slane %v2328, 7
      %v4247 = vrot.slane %v4246, 4
      %v4248 = vrot.slane %v2329, 7
      %v4249 = vsel %vm4189, %v4247, %v4248
      %v4250 = vrot.slane %v4248, 4
      %v4251 = vrot.slane %v2330, 7
      %v4252 = vsel %vm4189, %v4250, %v4251
      %v4253 = vrot.slane %v2332, 7
      %v4254 = vrot.slane %v4253, 4
      %v4255 = vrot.slane %v2333, 7
      %v4256 = vsel %vm4189, %v4254, %v4255
      %v4257 = vrot.slane %v4255, 4
      %v4258 = vrot.slane %v2334, 7
      %v4259 = vsel %vm4189, %v4257, %v4258
      %v4260 = vrot.slane %v2336, 7
      %v4261 = vrot.slane %v4260, 4
      %v4262 = vrot.slane %v2337, 7
      %v4263 = vsel %vm4189, %v4261, %v4262
      %v4264 = vrot.slane %v4262, 4
      %v4265 = vrot.slane %v2338, 7
      %v4266 = vsel %vm4189, %v4264, %v4265
      %v4267 = vrot.slane %v2340, 7
      %v4268 = vrot.slane %v4267, 4
      %v4269 = vrot.slane %v2341, 7
      %v4270 = vsel %vm4189, %v4268, %v4269
      %v4271 = vrot.slane %v4269, 4
      %v4272 = vrot.slane %v2342, 7
      %v4273 = vsel %vm4189, %v4271, %v4272
      %v4274 = vrot.slane %v2344, 7
      %v4275 = vrot.slane %v4274, 4
      %v4276 = vrot.slane %v2345, 7
      %v4277 = vsel %vm4189, %v4275, %v4276
      %v4278 = vrot.slane %v4276, 4
      %v4279 = vrot.slane %v2346, 7
      %v4280 = vsel %vm4189, %v4278, %v4279
      %v4281 = vrot.slane %v2348, 7
      %v4282 = vrot.slane %v4281, 4
      %v4283 = vrot.slane %v2349, 7
      %v4284 = vsel %vm4189, %v4282, %v4283
      %v4285 = vrot.slane %v4283, 4
      %v4286 = vrot.slane %v2350, 7
      %v4287 = vsel %vm4189, %v4285, %v4286
      %v4288 = vrot.slane %v2352, 7
      %v4289 = vrot.slane %v4288, 4
      %v4290 = vrot.slane %v2353, 7
      %v4291 = vsel %vm4189, %v4289, %v4290
      %v4292 = vrot.slane %v4290, 4
      %v4293 = vrot.slane %v2354, 7
      %v4294 = vsel %vm4189, %v4292, %v4293
      %v4295 = vrot.slane %v2356, 7
      %v4296 = vrot.slane %v4295, 4
      %v4297 = vrot.slane %v2357, 7
      %v4298 = vsel %vm4189, %v4296, %v4297
      %v4299 = vrot.slane %v4297, 4
      %v4300 = vrot.slane %v2358, 7
      %v4301 = vsel %vm4189, %v4299, %v4300
      %v4318 = vrot.slane %v2297, 5
      %v4319 = vrot.slane %v4318, 4
      %v4320 = vrot.slane %v2298, 5
      %v4321 = vsel %vm872, %v4319, %v4320
      %v4322 = vrot.slane %v4320, 4
      %v4323 = vrot.slane %v2299, 5
      %v4324 = vsel %vm872, %v4322, %v4323
      %v4325 = vrot.slane %v2301, 5
      %v4326 = vrot.slane %v4325, 4
      %v4327 = vrot.slane %v2302, 5
      %v4328 = vsel %vm872, %v4326, %v4327
      %v4329 = vrot.slane %v4327, 4
      %v4330 = vrot.slane %v2303, 5
      %v4331 = vsel %vm872, %v4329, %v4330
      %v4332 = vrot.slane %v2305, 5
      %v4333 = vrot.slane %v4332, 4
      %v4334 = vrot.slane %v2306, 5
      %v4335 = vsel %vm872, %v4333, %v4334
      %v4336 = vrot.slane %v4334, 4
      %v4337 = vrot.slane %v2307, 5
      %v4338 = vsel %vm872, %v4336, %v4337
      %v4339 = vrot.slane %v2309, 5
      %v4340 = vrot.slane %v4339, 4
      %v4341 = vrot.slane %v2310, 5
      %v4342 = vsel %vm872, %v4340, %v4341
      %v4343 = vrot.slane %v4341, 4
      %v4344 = vrot.slane %v2311, 5
      %v4345 = vsel %vm872, %v4343, %v4344
      %v4346 = vrot.slane %v2313, 5
      %v4347 = vrot.slane %v4346, 4
      %v4348 = vrot.slane %v2314, 5
      %v4349 = vsel %vm872, %v4347, %v4348
      %v4350 = vrot.slane %v4348, 4
      %v4351 = vrot.slane %v2315, 5
      %v4352 = vsel %vm872, %v4350, %v4351
      %v4353 = vrot.slane %v2317, 5
      %v4354 = vrot.slane %v4353, 4
      %v4355 = vrot.slane %v2318, 5
      %v4356 = vsel %vm872, %v4354, %v4355
      %v4357 = vrot.slane %v4355, 4
      %v4358 = vrot.slane %v2319, 5
      %v4359 = vsel %vm872, %v4357, %v4358
      %v4360 = vrot.slane %v2321, 5
      %v4361 = vrot.slane %v4360, 4
      %v4362 = vrot.slane %v2322, 5
      %v4363 = vsel %vm872, %v4361, %v4362
      %v4364 = vrot.slane %v4362, 4
      %v4365 = vrot.slane %v2323, 5
      %v4366 = vsel %vm872, %v4364, %v4365
      %v4367 = vrot.slane %v2325, 5
      %v4368 = vrot.slane %v4367, 4
      %v4369 = vrot.slane %v2326, 5
      %v4370 = vsel %vm872, %v4368, %v4369
      %v4371 = vrot.slane %v4369, 4
      %v4372 = vrot.slane %v2327, 5
      %v4373 = vsel %vm872, %v4371, %v4372
      %v4374 = vrot.slane %v2329, 5
      %v4375 = vrot.slane %v4374, 4
      %v4376 = vrot.slane %v2330, 5
      %v4377 = vsel %vm872, %v4375, %v4376
      %v4378 = vrot.slane %v4376, 4
      %v4379 = vrot.slane %v2331, 5
      %v4380 = vsel %vm872, %v4378, %v4379
      %v4381 = vrot.slane %v2333, 5
      %v4382 = vrot.slane %v4381, 4
      %v4383 = vrot.slane %v2334, 5
      %v4384 = vsel %vm872, %v4382, %v4383
      %v4385 = vrot.slane %v4383, 4
      %v4386 = vrot.slane %v2335, 5
      %v4387 = vsel %vm872, %v4385, %v4386
      %v4388 = vrot.slane %v2337, 5
      %v4389 = vrot.slane %v4388, 4
      %v4390 = vrot.slane %v2338, 5
      %v4391 = vsel %vm872, %v4389, %v4390
      %v4392 = vrot.slane %v4390, 4
      %v4393 = vrot.slane %v2339, 5
      %v4394 = vsel %vm872, %v4392, %v4393
      %v4395 = vrot.slane %v2341, 5
      %v4396 = vrot.slane %v4395, 4
      %v4397 = vrot.slane %v2342, 5
      %v4398 = vsel %vm872, %v4396, %v4397
      %v4399 = vrot.slane %v4397, 4
      %v4400 = vrot.slane %v2343, 5
      %v4401 = vsel %vm872, %v4399, %v4400
      %v4402 = vrot.slane %v2345, 5
      %v4403 = vrot.slane %v4402, 4
      %v4404 = vrot.slane %v2346, 5
      %v4405 = vsel %vm872, %v4403, %v4404
      %v4406 = vrot.slane %v4404, 4
      %v4407 = vrot.slane %v2347, 5
      %v4408 = vsel %vm872, %v4406, %v4407
      %v4409 = vrot.slane %v2349, 5
      %v4410 = vrot.slane %v4409, 4
      %v4411 = vrot.slane %v2350, 5
      %v4412 = vsel %vm872, %v4410, %v4411
      %v4413 = vrot.slane %v4411, 4
      %v4414 = vrot.slane %v2351, 5
      %v4415 = vsel %vm872, %v4413, %v4414
      %v4416 = vrot.slane %v2353, 5
      %v4417 = vrot.slane %v4416, 4
      %v4418 = vrot.slane %v2354, 5
      %v4419 = vsel %vm872, %v4417, %v4418
      %v4420 = vrot.slane %v4418, 4
      %v4421 = vrot.slane %v2355, 5
      %v4422 = vsel %vm872, %v4420, %v4421
      %v4423 = vrot.slane %v2357, 5
      %v4424 = vrot.slane %v4423, 4
      %v4425 = vrot.slane %v2358, 5
      %v4426 = vsel %vm872, %v4424, %v4425
      %v4427 = vrot.slane %v4425, 4
      %v4428 = vrot.slane %v2359, 5
      %v4429 = vsel %vm872, %v4427, %v4428
      %v4432 = vrot.slane %v2360, 7
      %v4433 = vrot.slane %v4432, 4
      %v4434 = vrot.slane %v2361, 7
      %v4435 = vsel %vm4189, %v4433, %v4434
      %v4436 = vrot.slane %v4434, 4
      %v4437 = vrot.slane %v2362, 7
      %v4438 = vsel %vm4189, %v4436, %v4437
      %v4439 = vrot.slane %v2364, 7
      %v4440 = vrot.slane %v4439, 4
      %v4441 = vrot.slane %v2365, 7
      %v4442 = vsel %vm4189, %v4440, %v4441
      %v4443 = vrot.slane %v4441, 4
      %v4444 = vrot.slane %v2366, 7
      %v4445 = vsel %vm4189, %v4443, %v4444
      %v4448 = vrot.slane %v2361, 5
      %v4449 = vrot.slane %v4448, 4
      %v4450 = vrot.slane %v2362, 5
      %v4451 = vsel %vm872, %v4449, %v4450
      %v4452 = vrot.slane %v4450, 4
      %v4453 = vrot.slane %v2363, 5
      %v4454 = vsel %vm872, %v4452, %v4453
      %v4455 = vrot.slane %v2365, 5
      %v4456 = vrot.slane %v4455, 4
      %v4457 = vrot.slane %v2366, 5
      %v4458 = vsel %vm872, %v4456, %v4457
      %v4459 = vrot.slane %v4457, 4
      %v4460 = vrot.slane %v2367, 5
      %v4461 = vsel %vm872, %v4459, %v4460
      %v4464 = vrot.slane %v2368, 7
      %v4465 = vrot.slane %v4464, 4
      %v4466 = vrot.slane %v2369, 7
      %v4467 = vsel %vm4189, %v4465, %v4466
      %v4468 = vrot.slane %v4466, 4
      %v4469 = vrot.slane %v2370, 7
      %v4470 = vsel %vm4189, %v4468, %v4469
      %v4471 = vrot.slane %v2372, 7
      %v4472 = vrot.slane %v4471, 4
      %v4473 = vrot.slane %v2373, 7
      %v4474 = vsel %vm4189, %v4472, %v4473
      %v4475 = vrot.slane %v4473, 4
      %v4476 = vrot.slane %v2374, 7
      %v4477 = vsel %vm4189, %v4475, %v4476
      %v4480 = vrot.slane %v2369, 5
      %v4481 = vrot.slane %v4480, 4
      %v4482 = vrot.slane %v2370, 5
      %v4483 = vsel %vm872, %v4481, %v4482
      %v4484 = vrot.slane %v4482, 4
      %v4485 = vrot.slane %v2371, 5
      %v4486 = vsel %vm872, %v4484, %v4485
      %v4487 = vrot.slane %v2373, 5
      %v4488 = vrot.slane %v4487, 4
      %v4489 = vrot.slane %v2374, 5
      %v4490 = vsel %vm872, %v4488, %v4489
      %v4491 = vrot.slane %v4489, 4
      %v4492 = vrot.slane %v2375, 5
      %v4493 = vsel %vm872, %v4491, %v4492
      %v4494 = vunpack.c.l.b16 %v4193
      %v4495 = vunpack.c.l.b16 %v4196
      %v4496 = vunpack.c.l.b16 %v4200
      %v4497 = vunpack.c.l.b16 %v4203
      %v4498 = vunpack.c.l.b16 %v4207
      %v4499 = vunpack.c.l.b16 %v4210
      %v4500 = vunpack.c.l.b16 %v4214
      %v4501 = vunpack.c.l.b16 %v4217
      %v4502 = vunpack.c.l.b16 %v4221
      %v4503 = vunpack.c.l.b16 %v4224
      %v4504 = vunpack.c.l.b16 %v4228
      %v4505 = vunpack.c.l.b16 %v4231
      %v4506 = vunpack.c.l.b16 %v4235
      %v4507 = vunpack.c.l.b16 %v4238
      %v4508 = vunpack.c.l.b16 %v4242
      %v4509 = vunpack.c.l.b16 %v4245
      %v4510 = vunpack.c.l.b16 %v4249
      %v4511 = vunpack.c.l.b16 %v4252
      %v4512 = vunpack.c.l.b16 %v4256
      %v4513 = vunpack.c.l.b16 %v4259
      %v4514 = vunpack.c.l.b16 %v4263
      %v4515 = vunpack.c.l.b16 %v4266
      %v4516 = vunpack.c.l.b16 %v4270
      %v4517 = vunpack.c.l.b16 %v4273
      %v4518 = vunpack.c.l.b16 %v4277
      %v4519 = vunpack.c.l.b16 %v4280
      %v4520 = vunpack.c.l.b16 %v4284
      %v4521 = vunpack.c.l.b16 %v4287
      %v4522 = vunpack.c.l.b16 %v4291
      %v4523 = vunpack.c.l.b16 %v4294
      %v4524 = vunpack.c.l.b16 %v4298
      %v4525 = vunpack.c.l.b16 %v4301
      %v4526 = vpack.c.b16 %v4495, %v4494
      %v4527 = vpack.c.b16 %v4497, %v4496
      %v4528 = vpack.c.b16 %v4499, %v4498
      %v4529 = vpack.c.b16 %v4501, %v4500
      %v4530 = vpack.c.b16 %v4503, %v4502
      %v4531 = vpack.c.b16 %v4505, %v4504
      %v4532 = vpack.c.b16 %v4507, %v4506
      %v4533 = vpack.c.b16 %v4509, %v4508
      %v4534 = vpack.c.b16 %v4511, %v4510
      %v4535 = vpack.c.b16 %v4513, %v4512
      %v4536 = vpack.c.b16 %v4515, %v4514
      %v4537 = vpack.c.b16 %v4517, %v4516
      %v4538 = vpack.c.b16 %v4519, %v4518
      %v4539 = vpack.c.b16 %v4521, %v4520
      %v4540 = vpack.c.b16 %v4523, %v4522
      %v4541 = vpack.c.b16 %v4525, %v4524
      %4542 = vrot.lane.b32.xlu0 %v3690, 8
      %v4543 = vpop.permute.xlu0 %4542
      %v4544 = vunpack.c.l.b16 %v4321
      %v4545 = vunpack.c.l.b16 %v4324
      %v4546 = vunpack.c.l.b16 %v4328
      %v4547 = vunpack.c.l.b16 %v4331
      %v4548 = vunpack.c.l.b16 %v4335
      %v4549 = vunpack.c.l.b16 %v4338
      %v4550 = vunpack.c.l.b16 %v4342
      %v4551 = vunpack.c.l.b16 %v4345
      %v4552 = vunpack.c.l.b16 %v4349
      %v4553 = vunpack.c.l.b16 %v4352
      %v4554 = vunpack.c.l.b16 %v4356
      %v4555 = vunpack.c.l.b16 %v4359
      %v4556 = vunpack.c.l.b16 %v4363
      %v4557 = vunpack.c.l.b16 %v4366
      %v4558 = vunpack.c.l.b16 %v4370
      %v4559 = vunpack.c.l.b16 %v4373
      %v4560 = vunpack.c.l.b16 %v4377
      %v4561 = vunpack.c.l.b16 %v4380
      %v4562 = vunpack.c.l.b16 %v4384
      %v4563 = vunpack.c.l.b16 %v4387
      %v4564 = vunpack.c.l.b16 %v4391
      %v4565 = vunpack.c.l.b16 %v4394
      %v4566 = vunpack.c.l.b16 %v4398
      %v4567 = vunpack.c.l.b16 %v4401
      %v4568 = vunpack.c.l.b16 %v4405
      %v4569 = vunpack.c.l.b16 %v4408
      %v4570 = vunpack.c.l.b16 %v4412
      %v4571 = vunpack.c.l.b16 %v4415
      %v4572 = vunpack.c.l.b16 %v4419
      %v4573 = vunpack.c.l.b16 %v4422
      %v4574 = vunpack.c.l.b16 %v4426
      %v4575 = vunpack.c.l.b16 %v4429
      %v4576 = vpack.c.b16 %v4545, %v4544
      %v4577 = vpack.c.b16 %v4547, %v4546
      %v4578 = vpack.c.b16 %v4549, %v4548
      %v4579 = vpack.c.b16 %v4551, %v4550
      %v4580 = vpack.c.b16 %v4553, %v4552
      %v4581 = vpack.c.b16 %v4555, %v4554
      %v4582 = vpack.c.b16 %v4557, %v4556
      %v4583 = vpack.c.b16 %v4559, %v4558
      %v4584 = vpack.c.b16 %v4561, %v4560
      %v4585 = vpack.c.b16 %v4563, %v4562
      %v4586 = vpack.c.b16 %v4565, %v4564
      %v4587 = vpack.c.b16 %v4567, %v4566
      %v4588 = vpack.c.b16 %v4569, %v4568
      %v4589 = vpack.c.b16 %v4571, %v4570
      %v4590 = vpack.c.b16 %v4573, %v4572
      %v4591 = vpack.c.b16 %v4575, %v4574
      %4592 = vrot.lane.b32.xlu0 %v4576, 16
      %v4593 = vpop.permute.xlu0 %4592
      %4594 = vrot.lane.b32.xlu0 %v4577, 16
      %v4595 = vpop.permute.xlu0 %4594
      %4596 = vrot.lane.b32.xlu0 %v4578, 16
      %v4597 = vpop.permute.xlu0 %4596
      %4598 = vrot.lane.b32.xlu0 %v4579, 16
      %v4599 = vpop.permute.xlu0 %4598
      %4600 = vrot.lane.b32.xlu0 %v4580, 16
      %v4601 = vpop.permute.xlu0 %4600
      %4602 = vrot.lane.b32.xlu0 %v4581, 16
      %v4603 = vpop.permute.xlu0 %4602
      %4604 = vrot.lane.b32.xlu0 %v4582, 16
      %v4605 = vpop.permute.xlu0 %4604
      %4606 = vrot.lane.b32.xlu0 %v4583, 16
      %v4607 = vpop.permute.xlu0 %4606
      %4608 = vrot.lane.b32.xlu0 %v4584, 16
      %v4609 = vpop.permute.xlu0 %4608
      %4610 = vrot.lane.b32.xlu0 %v4585, 16
      %v4611 = vpop.permute.xlu0 %4610
      %4612 = vrot.lane.b32.xlu0 %v4586, 16
      %v4613 = vpop.permute.xlu0 %4612
      %4614 = vrot.lane.b32.xlu0 %v4587, 16
      %v4615 = vpop.permute.xlu0 %4614
      %4616 = vrot.lane.b32.xlu0 %v4588, 16
      %v4617 = vpop.permute.xlu0 %4616
      %4618 = vrot.lane.b32.xlu0 %v4589, 16
      %v4619 = vpop.permute.xlu0 %4618
      %4620 = vrot.lane.b32.xlu0 %v4590, 16
      %v4621 = vpop.permute.xlu0 %4620
      %4622 = vrot.lane.b32.xlu0 %v4591, 16
      %v4623 = vpop.permute.xlu0 %4622
      %v4624 = vunpack.c.l.b16 %v4435
      %v4625 = vunpack.c.l.b16 %v4438
      %v4626 = vunpack.c.l.b16 %v4442
      %v4627 = vunpack.c.l.b16 %v4445
      %v4628 = vpack.c.b16 %v4625, %v4624
      %v4629 = vpack.c.b16 %v4627, %v4626
      %4630 = vrot.lane.b32.xlu0 %v4528, 24
      %v4631 = vpop.permute.xlu0 %4630
      %4632 = vrot.lane.b32.xlu0 %v4529, 24
      %v4633 = vpop.permute.xlu0 %4632
      %4634 = vrot.lane.b32.xlu0 %v4530, 24
      %v4635 = vpop.permute.xlu0 %4634
      %4636 = vrot.lane.b32.xlu0 %v4531, 24
      %v4637 = vpop.permute.xlu0 %4636
      %4638 = vrot.lane.b32.xlu0 %v4532, 24
      %v4639 = vpop.permute.xlu0 %4638
      %4640 = vrot.lane.b32.xlu0 %v4533, 24
      %v4641 = vpop.permute.xlu0 %4640
      %4642 = vrot.lane.b32.xlu0 %v4534, 24
      %v4643 = vpop.permute.xlu0 %4642
      %4644 = vrot.lane.b32.xlu0 %v4535, 24
      %v4645 = vpop.permute.xlu0 %4644
      %4646 = vrot.lane.b32.xlu0 %v4536, 24
      %v4647 = vpop.permute.xlu0 %4646
      %4648 = vrot.lane.b32.xlu0 %v4537, 24
      %v4649 = vpop.permute.xlu0 %4648
      %4650 = vrot.lane.b32.xlu0 %v4538, 24
      %v4651 = vpop.permute.xlu0 %4650
      %4652 = vrot.lane.b32.xlu0 %v4539, 24
      %v4653 = vpop.permute.xlu0 %4652
      %4654 = vrot.lane.b32.xlu0 %v4540, 24
      %v4655 = vpop.permute.xlu0 %4654
      %4656 = vrot.lane.b32.xlu0 %v4541, 24
      %v4657 = vpop.permute.xlu0 %4656
      %4658 = vrot.lane.b32.xlu0 %v4628, 24
      %v4659 = vpop.permute.xlu0 %4658
      %4660 = vrot.lane.b32.xlu0 %v4629, 24
      %v4661 = vpop.permute.xlu0 %4660
      %v4662 = vunpack.c.l.b16 %v4451
      %v4663 = vunpack.c.l.b16 %v4454
      %v4664 = vunpack.c.l.b16 %v4458
      %v4665 = vunpack.c.l.b16 %v4461
      %v4666 = vpack.c.b16 %v4663, %v4662
      %v4667 = vpack.c.b16 %v4665, %v4664
      %4668 = vrot.lane.b32.xlu0 %v4578, 40
      %v4669 = vpop.permute.xlu0 %4668
      %4670 = vrot.lane.b32.xlu0 %v4579, 40
      %v4671 = vpop.permute.xlu0 %4670
      %4672 = vrot.lane.b32.xlu0 %v4580, 40
      %v4673 = vpop.permute.xlu0 %4672
      %4674 = vrot.lane.b32.xlu0 %v4581, 40
      %v4675 = vpop.permute.xlu0 %4674
      %4676 = vrot.lane.b32.xlu0 %v4582, 40
      %v4677 = vpop.permute.xlu0 %4676
      %4678 = vrot.lane.b32.xlu0 %v4583, 40
      %v4679 = vpop.permute.xlu0 %4678
      %4680 = vrot.lane.b32.xlu0 %v4584, 40
      %v4681 = vpop.permute.xlu0 %4680
      %4682 = vrot.lane.b32.xlu0 %v4585, 40
      %v4683 = vpop.permute.xlu0 %4682
      %4684 = vrot.lane.b32.xlu0 %v4586, 40
      %v4685 = vpop.permute.xlu0 %4684
      %4686 = vrot.lane.b32.xlu0 %v4587, 40
      %v4687 = vpop.permute.xlu0 %4686
      %4688 = vrot.lane.b32.xlu0 %v4588, 40
      %v4689 = vpop.permute.xlu0 %4688
      %4690 = vrot.lane.b32.xlu0 %v4589, 40
      %v4691 = vpop.permute.xlu0 %4690
      %4692 = vrot.lane.b32.xlu0 %v4590, 40
      %v4693 = vpop.permute.xlu0 %4692
      %4694 = vrot.lane.b32.xlu0 %v4591, 40
      %v4695 = vpop.permute.xlu0 %4694
      %4696 = vrot.lane.b32.xlu0 %v4666, 40
      %v4697 = vpop.permute.xlu0 %4696
      %4698 = vrot.lane.b32.xlu0 %v4667, 40
      %v4699 = vpop.permute.xlu0 %4698
      %v4700 = vunpack.c.l.b16 %v4467
      %v4701 = vunpack.c.l.b16 %v4470
      %v4702 = vunpack.c.l.b16 %v4474
      %v4703 = vunpack.c.l.b16 %v4477
      %v4704 = vpack.c.b16 %v4701, %v4700
      %v4705 = vpack.c.b16 %v4703, %v4702
      %4706 = vrot.lane.b32.xlu0 %v4530, 48
      %v4707 = vpop.permute.xlu0 %4706
      %4708 = vrot.lane.b32.xlu0 %v4531, 48
      %v4709 = vpop.permute.xlu0 %4708
      %4710 = vrot.lane.b32.xlu0 %v4532, 48
      %v4711 = vpop.permute.xlu0 %4710
      %4712 = vrot.lane.b32.xlu0 %v4533, 48
      %v4713 = vpop.permute.xlu0 %4712
      %4714 = vrot.lane.b32.xlu0 %v4534, 48
      %v4715 = vpop.permute.xlu0 %4714
      %4716 = vrot.lane.b32.xlu0 %v4535, 48
      %v4717 = vpop.permute.xlu0 %4716
      %4718 = vrot.lane.b32.xlu0 %v4536, 48
      %v4719 = vpop.permute.xlu0 %4718
      %4720 = vrot.lane.b32.xlu0 %v4537, 48
      %v4721 = vpop.permute.xlu0 %4720
      %4722 = vrot.lane.b32.xlu0 %v4538, 48
      %v4723 = vpop.permute.xlu0 %4722
      %4724 = vrot.lane.b32.xlu0 %v4539, 48
      %v4725 = vpop.permute.xlu0 %4724
      %4726 = vrot.lane.b32.xlu0 %v4540, 48
      %v4727 = vpop.permute.xlu0 %4726
      %4728 = vrot.lane.b32.xlu0 %v4541, 48
      %v4729 = vpop.permute.xlu0 %4728
      %4730 = vrot.lane.b32.xlu0 %v4628, 48
      %v4731 = vpop.permute.xlu0 %4730
      %4732 = vrot.lane.b32.xlu0 %v4629, 48
      %v4733 = vpop.permute.xlu0 %4732
      %4734 = vrot.lane.b32.xlu0 %v4704, 48
      %v4735 = vpop.permute.xlu0 %4734
      %4736 = vrot.lane.b32.xlu0 %v4705, 48
      %v4737 = vpop.permute.xlu0 %4736
      %4738 = vrot.lane.b32.xlu0 %v3514, 56
      %v4739 = vpop.permute.xlu0 %4738
      %v4740 = vunpack.c.l.b16 %v4483
      %v4741 = vunpack.c.l.b16 %v4486
      %v4742 = vunpack.c.l.b16 %v4490
      %v4743 = vunpack.c.l.b16 %v4493
      %v4744 = vpack.c.b16 %v4741, %v4740
      %v4745 = vpack.c.b16 %v4743, %v4742
      %4746 = vrot.lane.b32.xlu0 %v4580, 64
      %v4747 = vpop.permute.xlu0 %4746
      %4748 = vrot.lane.b32.xlu0 %v4581, 64
      %v4749 = vpop.permute.xlu0 %4748
      %4750 = vrot.lane.b32.xlu0 %v4582, 64
      %v4751 = vpop.permute.xlu0 %4750
      %4752 = vrot.lane.b32.xlu0 %v4583, 64
      %v4753 = vpop.permute.xlu0 %4752
      %4754 = vrot.lane.b32.xlu0 %v4584, 64
      %v4755 = vpop.permute.xlu0 %4754
      %4756 = vrot.lane.b32.xlu0 %v4585, 64
      %v4757 = vpop.permute.xlu0 %4756
      %4758 = vrot.lane.b32.xlu0 %v4586, 64
      %v4759 = vpop.permute.xlu0 %4758
      %4760 = vrot.lane.b32.xlu0 %v4587, 64
      %v4761 = vpop.permute.xlu0 %4760
      %4762 = vrot.lane.b32.xlu0 %v4588, 64
      %v4763 = vpop.permute.xlu0 %4762
      %4764 = vrot.lane.b32.xlu0 %v4589, 64
      %v4765 = vpop.permute.xlu0 %4764
      %4766 = vrot.lane.b32.xlu0 %v4590, 64
      %v4767 = vpop.permute.xlu0 %4766
      %4768 = vrot.lane.b32.xlu0 %v4591, 64
      %v4769 = vpop.permute.xlu0 %4768
      %4770 = vrot.lane.b32.xlu0 %v4666, 64
      %v4771 = vpop.permute.xlu0 %4770
      %4772 = vrot.lane.b32.xlu0 %v4667, 64
      %v4773 = vpop.permute.xlu0 %4772
      %4774 = vrot.lane.b32.xlu0 %v4744, 64
      %v4775 = vpop.permute.xlu0 %4774
      %4776 = vrot.lane.b32.xlu0 %v4745, 64
      %v4777 = vpop.permute.xlu0 %4776
      %v4779 = vsel %vm3895, %v4526, %v3528
      %v4781 = vsel %vm3895, %v4527, %v3530
      %v4783 = vsel %vm3895, %v4528, %v3532
      %v4785 = vsel %vm3895, %v4529, %v3534
      %v4787 = vsel %vm3895, %v4530, %v3536
      %v4789 = vsel %vm3895, %v4531, %v3538
      %v4791 = vsel %vm3895, %v4532, %v3540
      %v4793 = vsel %vm3895, %v4533, %v3542
      %v4795 = vsel %vm3895, %v4534, %v3544
      %v4797 = vsel %vm3895, %v4535, %v3546
      %v4799 = vsel %vm3895, %v4536, %v3548
      %v4801 = vsel %vm3895, %v4537, %v3550
      %v4803 = vsel %vm3895, %v4538, %v3552
      %v4805 = vsel %vm3895, %v4539, %v3554
      %v4807 = vsel %vm3895, %v4540, %v3556
      %v4810 = vsel %vm3895, %v4541, %v4543
      %v4812 = vsel %vm1439, %v4779, %v4593
      %v4814 = vsel %vm1439, %v4781, %v4595
      %v4816 = vsel %vm1439, %v4783, %v4597
      %v4818 = vsel %vm1439, %v4785, %v4599
      %v4820 = vsel %vm1439, %v4787, %v4601
      %v4822 = vsel %vm1439, %v4789, %v4603
      %v4824 = vsel %vm1439, %v4791, %v4605
      %v4826 = vsel %vm1439, %v4793, %v4607
      %v4828 = vsel %vm1439, %v4795, %v4609
      %v4830 = vsel %vm1439, %v4797, %v4611
      %v4832 = vsel %vm1439, %v4799, %v4613
      %v4834 = vsel %vm1439, %v4801, %v4615
      %v4836 = vsel %vm1439, %v4803, %v4617
      %v4838 = vsel %vm1439, %v4805, %v4619
      %v4840 = vsel %vm1439, %v4807, %v4621
      %v4842 = vsel %vm1439, %v4810, %v4623
      %v4844 = vsel %vm3976, %v4812, %v4631
      %v4846 = vsel %vm3976, %v4814, %v4633
      %v4848 = vsel %vm3976, %v4816, %v4635
      %v4850 = vsel %vm3976, %v4818, %v4637
      %v4852 = vsel %vm3976, %v4820, %v4639
      %v4854 = vsel %vm3976, %v4822, %v4641
      %v4856 = vsel %vm3976, %v4824, %v4643
      %v4858 = vsel %vm3976, %v4826, %v4645
      %v4860 = vsel %vm3976, %v4828, %v4647
      %v4862 = vsel %vm3976, %v4830, %v4649
      %v4864 = vsel %vm3976, %v4832, %v4651
      %v4866 = vsel %vm3976, %v4834, %v4653
      %v4868 = vsel %vm3976, %v4836, %v4655
      %v4870 = vsel %vm3976, %v4838, %v4657
      %v4872 = vsel %vm3976, %v4840, %v4659
      %v4874 = vsel %vm3976, %v4842, %v4661
      %v4875 = vsel %vm1488, %v4844, %v3694
      %v4876 = vsel %vm1488, %v4846, %v3696
      %v4877 = vsel %vm1488, %v4848, %v3698
      %v4878 = vsel %vm1488, %v4850, %v3700
      %v4879 = vsel %vm1488, %v4852, %v3702
      %v4880 = vsel %vm1488, %v4854, %v3704
      %v4881 = vsel %vm1488, %v4856, %v3706
      %v4882 = vsel %vm1488, %v4858, %v3708
      %v4883 = vsel %vm1488, %v4860, %v3710
      %v4884 = vsel %vm1488, %v4862, %v3712
      %v4885 = vsel %vm1488, %v4864, %v3714
      %v4886 = vsel %vm1488, %v4866, %v3716
      %v4887 = vsel %vm1488, %v4868, %v3718
      %v4888 = vsel %vm1488, %v4870, %v3720
      %v4889 = vsel %vm1488, %v4872, %v3722
      %v4890 = vsel %vm1488, %v4874, %v3724
      %v4892 = vsel %vm4041, %v4875, %v4669
      %v4894 = vsel %vm4041, %v4876, %v4671
      %v4896 = vsel %vm4041, %v4877, %v4673
      %v4898 = vsel %vm4041, %v4878, %v4675
      %v4900 = vsel %vm4041, %v4879, %v4677
      %v4902 = vsel %vm4041, %v4880, %v4679
      %v4904 = vsel %vm4041, %v4881, %v4681
      %v4906 = vsel %vm4041, %v4882, %v4683
      %v4908 = vsel %vm4041, %v4883, %v4685
      %v4910 = vsel %vm4041, %v4884, %v4687
      %v4912 = vsel %vm4041, %v4885, %v4689
      %v4914 = vsel %vm4041, %v4886, %v4691
      %v4916 = vsel %vm4041, %v4887, %v4693
      %v4918 = vsel %vm4041, %v4888, %v4695
      %v4920 = vsel %vm4041, %v4889, %v4697
      %v4922 = vsel %vm4041, %v4890, %v4699
      %v4924 = vsel %vm1521, %v4892, %v4707
      %v4926 = vsel %vm1521, %v4894, %v4709
      %v4928 = vsel %vm1521, %v4896, %v4711
      %v4930 = vsel %vm1521, %v4898, %v4713
      %v4932 = vsel %vm1521, %v4900, %v4715
      %v4934 = vsel %vm1521, %v4902, %v4717
      %v4936 = vsel %vm1521, %v4904, %v4719
      %v4938 = vsel %vm1521, %v4906, %v4721
      %v4940 = vsel %vm1521, %v4908, %v4723
      %v4942 = vsel %vm1521, %v4910, %v4725
      %v4944 = vsel %vm1521, %v4912, %v4727
      %v4946 = vsel %vm1521, %v4914, %v4729
      %v4948 = vsel %vm1521, %v4916, %v4731
      %v4950 = vsel %vm1521, %v4918, %v4733
      %v4952 = vsel %vm1521, %v4920, %v4735
      %v4954 = vsel %vm1521, %v4922, %v4737
      %v4956 = vsel %vm4106, %v4924, %v4739
      %v4957 = vsel %vm4106, %v4926, %v3823
      %v4958 = vsel %vm4106, %v4928, %v3825
      %v4959 = vsel %vm4106, %v4930, %v3827
      %v4960 = vsel %vm4106, %v4932, %v3829
      %v4961 = vsel %vm4106, %v4934, %v3831
      %v4962 = vsel %vm4106, %v4936, %v3833
      %v4963 = vsel %vm4106, %v4938, %v3835
      %v4964 = vsel %vm4106, %v4940, %v3837
      %v4965 = vsel %vm4106, %v4942, %v3839
      %v4966 = vsel %vm4106, %v4944, %v3841
      %v4967 = vsel %vm4106, %v4946, %v3843
      %v4968 = vsel %vm4106, %v4948, %v3845
      %v4969 = vsel %vm4106, %v4950, %v3847
      %v4970 = vsel %vm4106, %v4952, %v3849
      %v4971 = vsel %vm4106, %v4954, %v3851
      %v4973 = vsel %vm1554, %v4956, %v4747
      %v4975 = vsel %vm1554, %v4957, %v4749
      %v4977 = vsel %vm1554, %v4958, %v4751
      %v4979 = vsel %vm1554, %v4959, %v4753
      %v4981 = vsel %vm1554, %v4960, %v4755
      %v4983 = vsel %vm1554, %v4961, %v4757
      %v4985 = vsel %vm1554, %v4962, %v4759
      %v4987 = vsel %vm1554, %v4963, %v4761
      %v4989 = vsel %vm1554, %v4964, %v4763
      %v4991 = vsel %vm1554, %v4965, %v4765
      %v4993 = vsel %vm1554, %v4966, %v4767
      %v4995 = vsel %vm1554, %v4967, %v4769
      %v4997 = vsel %vm1554, %v4968, %v4771
      %v4999 = vsel %vm1554, %v4969, %v4773
      %v5001 = vsel %vm1554, %v4970, %v4775
      %v5003 = vsel %vm1554, %v4971, %v4777
      %vm5004 = vsmask.f32 256
      %vm5005 = vsmask.f32 4368
      %vm5006 = vmor %vm5004, %vm5005
      %v5007 = vrot.slane %v2439, 7
      %v5008 = vrot.slane %v5007, 4
      %v5009 = vrot.slane %v2448, 7
      %v5010 = vor.u32 %v5009, %v2451
      %v5011 = vsel %vm5006, %v5008, %v5010
      %v5012 = vrot.slane %v5009, 4
      %v5013 = vrot.slane %v2458, 7
      %v5014 = vor.u32 %v5013, %v2461
      %v5015 = vsel %vm5006, %v5012, %v5014
      %v5016 = vrot.slane %v2467, 7
      %v5017 = vrot.slane %v5016, 4
      %v5018 = vrot.slane %v2476, 7
      %v5019 = vor.u32 %v5018, %v2479
      %v5020 = vsel %vm5006, %v5017, %v5019
      %v5021 = vrot.slane %v5018, 4
      %v5022 = vrot.slane %v2486, 7
      %v5023 = vor.u32 %v5022, %v2489
      %v5024 = vsel %vm5006, %v5021, %v5023
      %v5025 = vrot.slane %v2495, 7
      %v5026 = vrot.slane %v5025, 4
      %v5027 = vrot.slane %v2504, 7
      %v5028 = vor.u32 %v5027, %v2507
      %v5029 = vsel %vm5006, %v5026, %v5028
      %v5030 = vrot.slane %v5027, 4
      %v5031 = vrot.slane %v2514, 7
      %v5032 = vor.u32 %v5031, %v2517
      %v5033 = vsel %vm5006, %v5030, %v5032
      %v5034 = vrot.slane %v2523, 7
      %v5035 = vrot.slane %v5034, 4
      %v5036 = vrot.slane %v2532, 7
      %v5037 = vor.u32 %v5036, %v2535
      %v5038 = vsel %vm5006, %v5035, %v5037
      %v5039 = vrot.slane %v5036, 4
      %v5040 = vrot.slane %v2542, 7
      %v5041 = vor.u32 %v5040, %v2545
      %v5042 = vsel %vm5006, %v5039, %v5041
      %v5043 = vrot.slane %v2551, 7
      %v5044 = vrot.slane %v5043, 4
      %v5045 = vrot.slane %v2560, 7
      %v5046 = vor.u32 %v5045, %v2563
      %v5047 = vsel %vm5006, %v5044, %v5046
      %v5048 = vrot.slane %v5045, 4
      %v5049 = vrot.slane %v2570, 7
      %v5050 = vor.u32 %v5049, %v2573
      %v5051 = vsel %vm5006, %v5048, %v5050
      %v5052 = vrot.slane %v2579, 7
      %v5053 = vrot.slane %v5052, 4
      %v5054 = vrot.slane %v2588, 7
      %v5055 = vor.u32 %v5054, %v2591
      %v5056 = vsel %vm5006, %v5053, %v5055
      %v5057 = vrot.slane %v5054, 4
      %v5058 = vrot.slane %v2598, 7
      %v5059 = vor.u32 %v5058, %v2601
      %v5060 = vsel %vm5006, %v5057, %v5059
      %v5061 = vrot.slane %v2607, 7
      %v5062 = vrot.slane %v5061, 4
      %v5063 = vrot.slane %v2616, 7
      %v5064 = vor.u32 %v5063, %v2619
      %v5065 = vsel %vm5006, %v5062, %v5064
      %v5066 = vrot.slane %v5063, 4
      %v5067 = vrot.slane %v2626, 7
      %v5068 = vor.u32 %v5067, %v2629
      %v5069 = vsel %vm5006, %v5066, %v5068
      %v5070 = vrot.slane %v2635, 7
      %v5071 = vrot.slane %v5070, 4
      %v5072 = vrot.slane %v2644, 7
      %v5073 = vor.u32 %v5072, %v2647
      %v5074 = vsel %vm5006, %v5071, %v5073
      %v5075 = vrot.slane %v5072, 4
      %v5076 = vrot.slane %v2654, 7
      %v5077 = vor.u32 %v5076, %v2657
      %v5078 = vsel %vm5006, %v5075, %v5077
      %v5079 = vrot.slane %v2663, 7
      %v5080 = vrot.slane %v5079, 4
      %v5081 = vrot.slane %v2672, 7
      %v5082 = vor.u32 %v5081, %v2675
      %v5083 = vsel %vm5006, %v5080, %v5082
      %v5084 = vrot.slane %v5081, 4
      %v5085 = vrot.slane %v2682, 7
      %v5086 = vor.u32 %v5085, %v2685
      %v5087 = vsel %vm5006, %v5084, %v5086
      %v5088 = vrot.slane %v2691, 7
      %v5089 = vrot.slane %v5088, 4
      %v5090 = vrot.slane %v2700, 7
      %v5091 = vor.u32 %v5090, %v2703
      %v5092 = vsel %vm5006, %v5089, %v5091
      %v5093 = vrot.slane %v5090, 4
      %v5094 = vrot.slane %v2710, 7
      %v5095 = vor.u32 %v5094, %v2713
      %v5096 = vsel %vm5006, %v5093, %v5095
      %v5097 = vrot.slane %v2719, 7
      %v5098 = vrot.slane %v5097, 4
      %v5099 = vrot.slane %v2728, 7
      %v5100 = vor.u32 %v5099, %v2731
      %v5101 = vsel %vm5006, %v5098, %v5100
      %v5102 = vrot.slane %v5099, 4
      %v5103 = vrot.slane %v2738, 7
      %v5104 = vor.u32 %v5103, %v2741
      %v5105 = vsel %vm5006, %v5102, %v5104
      %v5106 = vrot.slane %v2747, 7
      %v5107 = vrot.slane %v5106, 4
      %v5108 = vrot.slane %v2756, 7
      %v5109 = vor.u32 %v5108, %v2759
      %v5110 = vsel %vm5006, %v5107, %v5109
      %v5111 = vrot.slane %v5108, 4
      %v5112 = vrot.slane %v2766, 7
      %v5113 = vor.u32 %v5112, %v2769
      %v5114 = vsel %vm5006, %v5111, %v5113
      %v5115 = vrot.slane %v2775, 7
      %v5116 = vrot.slane %v5115, 4
      %v5117 = vrot.slane %v2784, 7
      %v5118 = vor.u32 %v5117, %v2787
      %v5119 = vsel %vm5006, %v5116, %v5118
      %v5120 = vrot.slane %v5117, 4
      %v5121 = vrot.slane %v2794, 7
      %v5122 = vor.u32 %v5121, %v2797
      %v5123 = vsel %vm5006, %v5120, %v5122
      %v5124 = vrot.slane %v2803, 7
      %v5125 = vrot.slane %v5124, 4
      %v5126 = vrot.slane %v2812, 7
      %v5127 = vor.u32 %v5126, %v2815
      %v5128 = vsel %vm5006, %v5125, %v5127
      %v5129 = vrot.slane %v5126, 4
      %v5130 = vrot.slane %v2822, 7
      %v5131 = vor.u32 %v5130, %v2825
      %v5132 = vsel %vm5006, %v5129, %v5131
      %v5133 = vrot.slane %v3122, 7
      %v5134 = vrot.slane %v5133, 4
      %v5135 = vrot.slane %v3131, 7
      %v5136 = vor.u32 %v5135, %v3134
      %v5137 = vsel %vm5006, %v5134, %v5136
      %v5138 = vrot.slane %v5135, 4
      %v5139 = vrot.slane %v3141, 7
      %v5140 = vor.u32 %v5139, %v3144
      %v5141 = vsel %vm5006, %v5138, %v5140
      %v5142 = vrot.slane %v3150, 7
      %v5143 = vrot.slane %v5142, 4
      %v5144 = vrot.slane %v3159, 7
      %v5145 = vor.u32 %v5144, %v3162
      %v5146 = vsel %vm5006, %v5143, %v5145
      %v5147 = vrot.slane %v5144, 4
      %v5148 = vrot.slane %v3169, 7
      %v5149 = vor.u32 %v5148, %v3172
      %v5150 = vsel %vm5006, %v5147, %v5149
      %v5151 = vrot.slane %v2448, 4
      %v5152 = vrot.slane %v2451, 5
      %v5153 = vor.u32 %v5151, %v5152
      %v5154 = vrot.slane %v5153, 4
      %v5155 = vrot.slane %v2461, 5
      %v5156 = vsel %vm437, %v5154, %v5155
      %v5157 = vrot.slane %v2458, 4
      %v5158 = vor.u32 %v5157, %v5155
      %v5159 = vrot.slane %v5158, 4
      %v5160 = vrot.slane %v2882, 5
      %v5161 = vsel %vm437, %v5159, %v5160
      %v5162 = vrot.slane %v2476, 4
      %v5163 = vrot.slane %v2479, 5
      %v5164 = vor.u32 %v5162, %v5163
      %v5165 = vrot.slane %v5164, 4
      %v5166 = vrot.slane %v2489, 5
      %v5167 = vsel %vm437, %v5165, %v5166
      %v5168 = vrot.slane %v2486, 4
      %v5169 = vor.u32 %v5168, %v5166
      %v5170 = vrot.slane %v5169, 4
      %v5171 = vrot.slane %v2900, 5
      %v5172 = vsel %vm437, %v5170, %v5171
      %v5173 = vrot.slane %v2504, 4
      %v5174 = vrot.slane %v2507, 5
      %v5175 = vor.u32 %v5173, %v5174
      %v5176 = vrot.slane %v5175, 4
      %v5177 = vrot.slane %v2517, 5
      %v5178 = vsel %vm437, %v5176, %v5177
      %v5179 = vrot.slane %v2514, 4
      %v5180 = vor.u32 %v5179, %v5177
      %v5181 = vrot.slane %v5180, 4
      %v5182 = vrot.slane %v2918, 5
      %v5183 = vsel %vm437, %v5181, %v5182
      %v5184 = vrot.slane %v2532, 4
      %v5185 = vrot.slane %v2535, 5
      %v5186 = vor.u32 %v5184, %v5185
      %v5187 = vrot.slane %v5186, 4
      %v5188 = vrot.slane %v2545, 5
      %v5189 = vsel %vm437, %v5187, %v5188
      %v5190 = vrot.slane %v2542, 4
      %v5191 = vor.u32 %v5190, %v5188
      %v5192 = vrot.slane %v5191, 4
      %v5193 = vrot.slane %v2936, 5
      %v5194 = vsel %vm437, %v5192, %v5193
      %v5195 = vrot.slane %v2560, 4
      %v5196 = vrot.slane %v2563, 5
      %v5197 = vor.u32 %v5195, %v5196
      %v5198 = vrot.slane %v5197, 4
      %v5199 = vrot.slane %v2573, 5
      %v5200 = vsel %vm437, %v5198, %v5199
      %v5201 = vrot.slane %v2570, 4
      %v5202 = vor.u32 %v5201, %v5199
      %v5203 = vrot.slane %v5202, 4
      %v5204 = vrot.slane %v2954, 5
      %v5205 = vsel %vm437, %v5203, %v5204
      %v5206 = vrot.slane %v2588, 4
      %v5207 = vrot.slane %v2591, 5
      %v5208 = vor.u32 %v5206, %v5207
      %v5209 = vrot.slane %v5208, 4
      %v5210 = vrot.slane %v2601, 5
      %v5211 = vsel %vm437, %v5209, %v5210
      %v5212 = vrot.slane %v2598, 4
      %v5213 = vor.u32 %v5212, %v5210
      %v5214 = vrot.slane %v5213, 4
      %v5215 = vrot.slane %v2972, 5
      %v5216 = vsel %vm437, %v5214, %v5215
      %v5217 = vrot.slane %v2616, 4
      %v5218 = vrot.slane %v2619, 5
      %v5219 = vor.u32 %v5217, %v5218
      %v5220 = vrot.slane %v5219, 4
      %v5221 = vrot.slane %v2629, 5
      %v5222 = vsel %vm437, %v5220, %v5221
      %v5223 = vrot.slane %v2626, 4
      %v5224 = vor.u32 %v5223, %v5221
      %v5225 = vrot.slane %v5224, 4
      %v5226 = vrot.slane %v2990, 5
      %v5227 = vsel %vm437, %v5225, %v5226
      %v5228 = vrot.slane %v2644, 4
      %v5229 = vrot.slane %v2647, 5
      %v5230 = vor.u32 %v5228, %v5229
      %v5231 = vrot.slane %v5230, 4
      %v5232 = vrot.slane %v2657, 5
      %v5233 = vsel %vm437, %v5231, %v5232
      %v5234 = vrot.slane %v2654, 4
      %v5235 = vor.u32 %v5234, %v5232
      %v5236 = vrot.slane %v5235, 4
      %v5237 = vrot.slane %v3008, 5
      %v5238 = vsel %vm437, %v5236, %v5237
      %v5239 = vrot.slane %v2672, 4
      %v5240 = vrot.slane %v2675, 5
      %v5241 = vor.u32 %v5239, %v5240
      %v5242 = vrot.slane %v5241, 4
      %v5243 = vrot.slane %v2685, 5
      %v5244 = vsel %vm437, %v5242, %v5243
      %v5245 = vrot.slane %v2682, 4
      %v5246 = vor.u32 %v5245, %v5243
      %v5247 = vrot.slane %v5246, 4
      %v5248 = vrot.slane %v3026, 5
      %v5249 = vsel %vm437, %v5247, %v5248
      %v5250 = vrot.slane %v2700, 4
      %v5251 = vrot.slane %v2703, 5
      %v5252 = vor.u32 %v5250, %v5251
      %v5253 = vrot.slane %v5252, 4
      %v5254 = vrot.slane %v2713, 5
      %v5255 = vsel %vm437, %v5253, %v5254
      %v5256 = vrot.slane %v2710, 4
      %v5257 = vor.u32 %v5256, %v5254
      %v5258 = vrot.slane %v5257, 4
      %v5259 = vrot.slane %v3044, 5
      %v5260 = vsel %vm437, %v5258, %v5259
      %v5261 = vrot.slane %v2728, 4
      %v5262 = vrot.slane %v2731, 5
      %v5263 = vor.u32 %v5261, %v5262
      %v5264 = vrot.slane %v5263, 4
      %v5265 = vrot.slane %v2741, 5
      %v5266 = vsel %vm437, %v5264, %v5265
      %v5267 = vrot.slane %v2738, 4
      %v5268 = vor.u32 %v5267, %v5265
      %v5269 = vrot.slane %v5268, 4
      %v5270 = vrot.slane %v3062, 5
      %v5271 = vsel %vm437, %v5269, %v5270
      %v5272 = vrot.slane %v2756, 4
      %v5273 = vrot.slane %v2759, 5
      %v5274 = vor.u32 %v5272, %v5273
      %v5275 = vrot.slane %v5274, 4
      %v5276 = vrot.slane %v2769, 5
      %v5277 = vsel %vm437, %v5275, %v5276
      %v5278 = vrot.slane %v2766, 4
      %v5279 = vor.u32 %v5278, %v5276
      %v5280 = vrot.slane %v5279, 4
      %v5281 = vrot.slane %v3080, 5
      %v5282 = vsel %vm437, %v5280, %v5281
      %v5283 = vrot.slane %v2784, 4
      %v5284 = vrot.slane %v2787, 5
      %v5285 = vor.u32 %v5283, %v5284
      %v5286 = vrot.slane %v5285, 4
      %v5287 = vrot.slane %v2797, 5
      %v5288 = vsel %vm437, %v5286, %v5287
      %v5289 = vrot.slane %v2794, 4
      %v5290 = vor.u32 %v5289, %v5287
      %v5291 = vrot.slane %v5290, 4
      %v5292 = vrot.slane %v3098, 5
      %v5293 = vsel %vm437, %v5291, %v5292
      %v5294 = vrot.slane %v2812, 4
      %v5295 = vrot.slane %v2815, 5
      %v5296 = vor.u32 %v5294, %v5295
      %v5297 = vrot.slane %v5296, 4
      %v5298 = vrot.slane %v2825, 5
      %v5299 = vsel %vm437, %v5297, %v5298
      %v5300 = vrot.slane %v2822, 4
      %v5301 = vor.u32 %v5300, %v5298
      %v5302 = vrot.slane %v5301, 4
      %v5303 = vrot.slane %v3116, 5
      %v5304 = vsel %vm437, %v5302, %v5303
      %v5305 = vrot.slane %v3131, 4
      %v5306 = vrot.slane %v3134, 5
      %v5307 = vor.u32 %v5305, %v5306
      %v5308 = vrot.slane %v5307, 4
      %v5309 = vrot.slane %v3144, 5
      %v5310 = vsel %vm437, %v5308, %v5309
      %v5311 = vrot.slane %v3141, 4
      %v5312 = vor.u32 %v5311, %v5309
      %v5313 = vrot.slane %v5312, 4
      %v5314 = vrot.slane %v3218, 5
      %v5315 = vsel %vm437, %v5313, %v5314
      %v5316 = vrot.slane %v3159, 4
      %v5317 = vrot.slane %v3162, 5
      %v5318 = vor.u32 %v5316, %v5317
      %v5319 = vrot.slane %v5318, 4
      %v5320 = vrot.slane %v3172, 5
      %v5321 = vsel %vm437, %v5319, %v5320
      %v5322 = vrot.slane %v3169, 4
      %v5323 = vor.u32 %v5322, %v5320
      %v5324 = vrot.slane %v5323, 4
      %v5325 = vrot.slane %v3236, 5
      %v5326 = vsel %vm437, %v5324, %v5325
      %v5327 = vrot.slane %v3178, 7
      %v5328 = vrot.slane %v5327, 4
      %v5329 = vrot.slane %v3187, 7
      %v5330 = vor.u32 %v5329, %v3190
      %v5331 = vsel %vm5006, %v5328, %v5330
      %v5332 = vrot.slane %v5329, 4
      %v5333 = vrot.slane %v3197, 7
      %v5334 = vor.u32 %v5333, %v3200
      %v5335 = vsel %vm5006, %v5332, %v5334
      %v5336 = vrot.slane %v3187, 4
      %v5337 = vrot.slane %v3190, 5
      %v5338 = vor.u32 %v5336, %v5337
      %v5339 = vrot.slane %v5338, 4
      %v5340 = vrot.slane %v3200, 5
      %v5341 = vsel %vm437, %v5339, %v5340
      %v5342 = vrot.slane %v3197, 4
      %v5343 = vor.u32 %v5342, %v5340
      %v5344 = vrot.slane %v5343, 4
      %v5345 = vrot.slane %v3254, 5
      %v5346 = vsel %vm437, %v5344, %v5345
      %v5347 = vrot.slane %v3260, 7
      %v5348 = vrot.slane %v5347, 4
      %v5349 = vrot.slane %v3269, 7
      %v5350 = vor.u32 %v5349, %v3272
      %v5351 = vsel %vm5006, %v5348, %v5350
      %v5352 = vrot.slane %v5349, 4
      %v5353 = vrot.slane %v3279, 7
      %v5354 = vor.u32 %v5353, %v3282
      %v5355 = vsel %vm5006, %v5352, %v5354
      %v5356 = vrot.slane %v3269, 4
      %v5357 = vrot.slane %v3272, 5
      %v5358 = vor.u32 %v5356, %v5357
      %v5359 = vrot.slane %v5358, 4
      %v5360 = vrot.slane %v3282, 5
      %v5361 = vsel %vm437, %v5359, %v5360
      %v5362 = vrot.slane %v3279, 4
      %v5363 = vor.u32 %v5362, %v5360
      %v5364 = vrot.slane %v5363, 4
      %v5365 = vrot.slane %v3356, 5
      %v5366 = vsel %vm437, %v5364, %v5365
      %v5367 = vunpack.c.l.b16 %v5011
      %v5368 = vunpack.c.l.b16 %v5015
      %v5369 = vunpack.c.l.b16 %v5020
      %v5370 = vunpack.c.l.b16 %v5024
      %v5371 = vunpack.c.l.b16 %v5029
      %v5372 = vunpack.c.l.b16 %v5033
      %v5373 = vunpack.c.l.b16 %v5038
      %v5374 = vunpack.c.l.b16 %v5042
      %v5375 = vunpack.c.l.b16 %v5047
      %v5376 = vunpack.c.l.b16 %v5051
      %v5377 = vunpack.c.l.b16 %v5056
      %v5378 = vunpack.c.l.b16 %v5060
      %v5379 = vunpack.c.l.b16 %v5065
      %v5380 = vunpack.c.l.b16 %v5069
      %v5381 = vunpack.c.l.b16 %v5074
      %v5382 = vunpack.c.l.b16 %v5078
      %v5383 = vunpack.c.l.b16 %v5083
      %v5384 = vunpack.c.l.b16 %v5087
      %v5385 = vunpack.c.l.b16 %v5092
      %v5386 = vunpack.c.l.b16 %v5096
      %v5387 = vunpack.c.l.b16 %v5101
      %v5388 = vunpack.c.l.b16 %v5105
      %v5389 = vunpack.c.l.b16 %v5110
      %v5390 = vunpack.c.l.b16 %v5114
      %v5391 = vunpack.c.l.b16 %v5119
      %v5392 = vunpack.c.l.b16 %v5123
      %v5393 = vunpack.c.l.b16 %v5128
      %v5394 = vunpack.c.l.b16 %v5132
      %v5395 = vunpack.c.l.b16 %v5137
      %v5396 = vunpack.c.l.b16 %v5141
      %v5397 = vunpack.c.l.b16 %v5146
      %v5398 = vunpack.c.l.b16 %v5150
      %v5399 = vpack.c.b16 %v5368, %v5367
      %v5400 = vpack.c.b16 %v5370, %v5369
      %v5401 = vpack.c.b16 %v5372, %v5371
      %v5402 = vpack.c.b16 %v5374, %v5373
      %v5403 = vpack.c.b16 %v5376, %v5375
      %v5404 = vpack.c.b16 %v5378, %v5377
      %v5405 = vpack.c.b16 %v5380, %v5379
      %v5406 = vpack.c.b16 %v5382, %v5381
      %v5407 = vpack.c.b16 %v5384, %v5383
      %v5408 = vpack.c.b16 %v5386, %v5385
      %v5409 = vpack.c.b16 %v5388, %v5387
      %v5410 = vpack.c.b16 %v5390, %v5389
      %v5411 = vpack.c.b16 %v5392, %v5391
      %v5412 = vpack.c.b16 %v5394, %v5393
      %v5413 = vpack.c.b16 %v5396, %v5395
      %v5414 = vpack.c.b16 %v5398, %v5397
      %5415 = vrot.lane.b32.xlu0 %v3691, 8
      %v5416 = vpop.permute.xlu0 %5415
      %v5417 = vunpack.c.l.b16 %v5156
      %v5418 = vunpack.c.l.b16 %v5161
      %v5419 = vunpack.c.l.b16 %v5167
      %v5420 = vunpack.c.l.b16 %v5172
      %v5421 = vunpack.c.l.b16 %v5178
      %v5422 = vunpack.c.l.b16 %v5183
      %v5423 = vunpack.c.l.b16 %v5189
      %v5424 = vunpack.c.l.b16 %v5194
      %v5425 = vunpack.c.l.b16 %v5200
      %v5426 = vunpack.c.l.b16 %v5205
      %v5427 = vunpack.c.l.b16 %v5211
      %v5428 = vunpack.c.l.b16 %v5216
      %v5429 = vunpack.c.l.b16 %v5222
      %v5430 = vunpack.c.l.b16 %v5227
      %v5431 = vunpack.c.l.b16 %v5233
      %v5432 = vunpack.c.l.b16 %v5238
      %v5433 = vunpack.c.l.b16 %v5244
      %v5434 = vunpack.c.l.b16 %v5249
      %v5435 = vunpack.c.l.b16 %v5255
      %v5436 = vunpack.c.l.b16 %v5260
      %v5437 = vunpack.c.l.b16 %v5266
      %v5438 = vunpack.c.l.b16 %v5271
      %v5439 = vunpack.c.l.b16 %v5277
      %v5440 = vunpack.c.l.b16 %v5282
      %v5441 = vunpack.c.l.b16 %v5288
      %v5442 = vunpack.c.l.b16 %v5293
      %v5443 = vunpack.c.l.b16 %v5299
      %v5444 = vunpack.c.l.b16 %v5304
      %v5445 = vunpack.c.l.b16 %v5310
      %v5446 = vunpack.c.l.b16 %v5315
      %v5447 = vunpack.c.l.b16 %v5321
      %v5448 = vunpack.c.l.b16 %v5326
      %v5449 = vpack.c.b16 %v5418, %v5417
      %v5450 = vpack.c.b16 %v5420, %v5419
      %v5451 = vpack.c.b16 %v5422, %v5421
      %v5452 = vpack.c.b16 %v5424, %v5423
      %v5453 = vpack.c.b16 %v5426, %v5425
      %v5454 = vpack.c.b16 %v5428, %v5427
      %v5455 = vpack.c.b16 %v5430, %v5429
      %v5456 = vpack.c.b16 %v5432, %v5431
      %v5457 = vpack.c.b16 %v5434, %v5433
      %v5458 = vpack.c.b16 %v5436, %v5435
      %v5459 = vpack.c.b16 %v5438, %v5437
      %v5460 = vpack.c.b16 %v5440, %v5439
      %v5461 = vpack.c.b16 %v5442, %v5441
      %v5462 = vpack.c.b16 %v5444, %v5443
      %v5463 = vpack.c.b16 %v5446, %v5445
      %v5464 = vpack.c.b16 %v5448, %v5447
      %5465 = vrot.lane.b32.xlu0 %v5449, 16
      %v5466 = vpop.permute.xlu0 %5465
      %5467 = vrot.lane.b32.xlu0 %v5450, 16
      %v5468 = vpop.permute.xlu0 %5467
      %5469 = vrot.lane.b32.xlu0 %v5451, 16
      %v5470 = vpop.permute.xlu0 %5469
      %5471 = vrot.lane.b32.xlu0 %v5452, 16
      %v5472 = vpop.permute.xlu0 %5471
      %5473 = vrot.lane.b32.xlu0 %v5453, 16
      %v5474 = vpop.permute.xlu0 %5473
      %5475 = vrot.lane.b32.xlu0 %v5454, 16
      %v5476 = vpop.permute.xlu0 %5475
      %5477 = vrot.lane.b32.xlu0 %v5455, 16
      %v5478 = vpop.permute.xlu0 %5477
      %5479 = vrot.lane.b32.xlu0 %v5456, 16
      %v5480 = vpop.permute.xlu0 %5479
      %5481 = vrot.lane.b32.xlu0 %v5457, 16
      %v5482 = vpop.permute.xlu0 %5481
      %5483 = vrot.lane.b32.xlu0 %v5458, 16
      %v5484 = vpop.permute.xlu0 %5483
      %5485 = vrot.lane.b32.xlu0 %v5459, 16
      %v5486 = vpop.permute.xlu0 %5485
      %5487 = vrot.lane.b32.xlu0 %v5460, 16
      %v5488 = vpop.permute.xlu0 %5487
      %5489 = vrot.lane.b32.xlu0 %v5461, 16
      %v5490 = vpop.permute.xlu0 %5489
      %5491 = vrot.lane.b32.xlu0 %v5462, 16
      %v5492 = vpop.permute.xlu0 %5491
      %5493 = vrot.lane.b32.xlu0 %v5463, 16
      %v5494 = vpop.permute.xlu0 %5493
      %5495 = vrot.lane.b32.xlu0 %v5464, 16
      %v5496 = vpop.permute.xlu0 %5495
      %v5497 = vunpack.c.l.b16 %v5331
      %v5498 = vunpack.c.l.b16 %v5335
      %v5499 = vpack.c.b16 %v5498, %v5497
      %5500 = vrot.lane.b32.xlu0 %v5400, 24
      %v5501 = vpop.permute.xlu0 %5500
      %5502 = vrot.lane.b32.xlu0 %v5401, 24
      %v5503 = vpop.permute.xlu0 %5502
      %5504 = vrot.lane.b32.xlu0 %v5402, 24
      %v5505 = vpop.permute.xlu0 %5504
      %5506 = vrot.lane.b32.xlu0 %v5403, 24
      %v5507 = vpop.permute.xlu0 %5506
      %5508 = vrot.lane.b32.xlu0 %v5404, 24
      %v5509 = vpop.permute.xlu0 %5508
      %5510 = vrot.lane.b32.xlu0 %v5405, 24
      %v5511 = vpop.permute.xlu0 %5510
      %5512 = vrot.lane.b32.xlu0 %v5406, 24
      %v5513 = vpop.permute.xlu0 %5512
      %5514 = vrot.lane.b32.xlu0 %v5407, 24
      %v5515 = vpop.permute.xlu0 %5514
      %5516 = vrot.lane.b32.xlu0 %v5408, 24
      %v5517 = vpop.permute.xlu0 %5516
      %5518 = vrot.lane.b32.xlu0 %v5409, 24
      %v5519 = vpop.permute.xlu0 %5518
      %5520 = vrot.lane.b32.xlu0 %v5410, 24
      %v5521 = vpop.permute.xlu0 %5520
      %5522 = vrot.lane.b32.xlu0 %v5411, 24
      %v5523 = vpop.permute.xlu0 %5522
      %5524 = vrot.lane.b32.xlu0 %v5412, 24
      %v5525 = vpop.permute.xlu0 %5524
      %5526 = vrot.lane.b32.xlu0 %v5413, 24
      %v5527 = vpop.permute.xlu0 %5526
      %5528 = vrot.lane.b32.xlu0 %v5414, 24
      %v5529 = vpop.permute.xlu0 %5528
      %5530 = vrot.lane.b32.xlu0 %v5499, 24
      %v5531 = vpop.permute.xlu0 %5530
      %v5532 = vunpack.c.l.b16 %v5341
      %v5533 = vunpack.c.l.b16 %v5346
      %v5534 = vpack.c.b16 %v5533, %v5532
      %5535 = vrot.lane.b32.xlu0 %v5450, 40
      %v5536 = vpop.permute.xlu0 %5535
      %5537 = vrot.lane.b32.xlu0 %v5451, 40
      %v5538 = vpop.permute.xlu0 %5537
      %5539 = vrot.lane.b32.xlu0 %v5452, 40
      %v5540 = vpop.permute.xlu0 %5539
      %5541 = vrot.lane.b32.xlu0 %v5453, 40
      %v5542 = vpop.permute.xlu0 %5541
      %5543 = vrot.lane.b32.xlu0 %v5454, 40
      %v5544 = vpop.permute.xlu0 %5543
      %5545 = vrot.lane.b32.xlu0 %v5455, 40
      %v5546 = vpop.permute.xlu0 %5545
      %5547 = vrot.lane.b32.xlu0 %v5456, 40
      %v5548 = vpop.permute.xlu0 %5547
      %5549 = vrot.lane.b32.xlu0 %v5457, 40
      %v5550 = vpop.permute.xlu0 %5549
      %5551 = vrot.lane.b32.xlu0 %v5458, 40
      %v5552 = vpop.permute.xlu0 %5551
      %5553 = vrot.lane.b32.xlu0 %v5459, 40
      %v5554 = vpop.permute.xlu0 %5553
      %5555 = vrot.lane.b32.xlu0 %v5460, 40
      %v5556 = vpop.permute.xlu0 %5555
      %5557 = vrot.lane.b32.xlu0 %v5461, 40
      %v5558 = vpop.permute.xlu0 %5557
      %5559 = vrot.lane.b32.xlu0 %v5462, 40
      %v5560 = vpop.permute.xlu0 %5559
      %5561 = vrot.lane.b32.xlu0 %v5463, 40
      %v5562 = vpop.permute.xlu0 %5561
      %5563 = vrot.lane.b32.xlu0 %v5464, 40
      %v5564 = vpop.permute.xlu0 %5563
      %5565 = vrot.lane.b32.xlu0 %v5534, 40
      %v5566 = vpop.permute.xlu0 %5565
      %v5567 = vunpack.c.l.b16 %v5351
      %v5568 = vunpack.c.l.b16 %v5355
      %v5569 = vpack.c.b16 %v5568, %v5567
      %5570 = vrot.lane.b32.xlu0 %v5401, 48
      %v5571 = vpop.permute.xlu0 %5570
      %5572 = vrot.lane.b32.xlu0 %v5402, 48
      %v5573 = vpop.permute.xlu0 %5572
      %5574 = vrot.lane.b32.xlu0 %v5403, 48
      %v5575 = vpop.permute.xlu0 %5574
      %5576 = vrot.lane.b32.xlu0 %v5404, 48
      %v5577 = vpop.permute.xlu0 %5576
      %5578 = vrot.lane.b32.xlu0 %v5405, 48
      %v5579 = vpop.permute.xlu0 %5578
      %5580 = vrot.lane.b32.xlu0 %v5406, 48
      %v5581 = vpop.permute.xlu0 %5580
      %5582 = vrot.lane.b32.xlu0 %v5407, 48
      %v5583 = vpop.permute.xlu0 %5582
      %5584 = vrot.lane.b32.xlu0 %v5408, 48
      %v5585 = vpop.permute.xlu0 %5584
      %5586 = vrot.lane.b32.xlu0 %v5409, 48
      %v5587 = vpop.permute.xlu0 %5586
      %5588 = vrot.lane.b32.xlu0 %v5410, 48
      %v5589 = vpop.permute.xlu0 %5588
      %5590 = vrot.lane.b32.xlu0 %v5411, 48
      %v5591 = vpop.permute.xlu0 %5590
      %5592 = vrot.lane.b32.xlu0 %v5412, 48
      %v5593 = vpop.permute.xlu0 %5592
      %5594 = vrot.lane.b32.xlu0 %v5413, 48
      %v5595 = vpop.permute.xlu0 %5594
      %5596 = vrot.lane.b32.xlu0 %v5414, 48
      %v5597 = vpop.permute.xlu0 %5596
      %5598 = vrot.lane.b32.xlu0 %v5499, 48
      %v5599 = vpop.permute.xlu0 %5598
      %5600 = vrot.lane.b32.xlu0 %v5569, 48
      %v5601 = vpop.permute.xlu0 %5600
      %5602 = vrot.lane.b32.xlu0 %v3513, 56
      %v5603 = vpop.permute.xlu0 %5602
      %v5604 = vunpack.c.l.b16 %v5361
      %v5605 = vunpack.c.l.b16 %v5366
      %v5606 = vpack.c.b16 %v5605, %v5604
      %5607 = vrot.lane.b32.xlu0 %v5451, 64
      %v5608 = vpop.permute.xlu0 %5607
      %5609 = vrot.lane.b32.xlu0 %v5452, 64
      %v5610 = vpop.permute.xlu0 %5609
      %5611 = vrot.lane.b32.xlu0 %v5453, 64
      %v5612 = vpop.permute.xlu0 %5611
      %5613 = vrot.lane.b32.xlu0 %v5454, 64
      %v5614 = vpop.permute.xlu0 %5613
      %5615 = vrot.lane.b32.xlu0 %v5455, 64
      %v5616 = vpop.permute.xlu0 %5615
      %5617 = vrot.lane.b32.xlu0 %v5456, 64
      %v5618 = vpop.permute.xlu0 %5617
      %5619 = vrot.lane.b32.xlu0 %v5457, 64
      %v5620 = vpop.permute.xlu0 %5619
      %5621 = vrot.lane.b32.xlu0 %v5458, 64
      %v5622 = vpop.permute.xlu0 %5621
      %5623 = vrot.lane.b32.xlu0 %v5459, 64
      %v5624 = vpop.permute.xlu0 %5623
      %5625 = vrot.lane.b32.xlu0 %v5460, 64
      %v5626 = vpop.permute.xlu0 %5625
      %5627 = vrot.lane.b32.xlu0 %v5461, 64
      %v5628 = vpop.permute.xlu0 %5627
      %5629 = vrot.lane.b32.xlu0 %v5462, 64
      %v5630 = vpop.permute.xlu0 %5629
      %5631 = vrot.lane.b32.xlu0 %v5463, 64
      %v5632 = vpop.permute.xlu0 %5631
      %5633 = vrot.lane.b32.xlu0 %v5464, 64
      %v5634 = vpop.permute.xlu0 %5633
      %5635 = vrot.lane.b32.xlu0 %v5534, 64
      %v5636 = vpop.permute.xlu0 %5635
      %5637 = vrot.lane.b32.xlu0 %v5606, 64
      %v5638 = vpop.permute.xlu0 %5637
      %v5640 = vsel %vm3895, %v5399, %v3530
      %v5642 = vsel %vm3895, %v5400, %v3532
      %v5644 = vsel %vm3895, %v5401, %v3534
      %v5646 = vsel %vm3895, %v5402, %v3536
      %v5648 = vsel %vm3895, %v5403, %v3538
      %v5650 = vsel %vm3895, %v5404, %v3540
      %v5652 = vsel %vm3895, %v5405, %v3542
      %v5654 = vsel %vm3895, %v5406, %v3544
      %v5656 = vsel %vm3895, %v5407, %v3546
      %v5658 = vsel %vm3895, %v5408, %v3548
      %v5660 = vsel %vm3895, %v5409, %v3550
      %v5662 = vsel %vm3895, %v5410, %v3552
      %v5664 = vsel %vm3895, %v5411, %v3554
      %v5666 = vsel %vm3895, %v5412, %v3556
      %v5668 = vsel %vm3895, %v5413, %v4543
      %v5671 = vsel %vm3895, %v5414, %v5416
      %v5673 = vsel %vm1439, %v5640, %v5466
      %v5675 = vsel %vm1439, %v5642, %v5468
      %v5677 = vsel %vm1439, %v5644, %v5470
      %v5679 = vsel %vm1439, %v5646, %v5472
      %v5681 = vsel %vm1439, %v5648, %v5474
      %v5683 = vsel %vm1439, %v5650, %v5476
      %v5685 = vsel %vm1439, %v5652, %v5478
      %v5687 = vsel %vm1439, %v5654, %v5480
      %v5689 = vsel %vm1439, %v5656, %v5482
      %v5691 = vsel %vm1439, %v5658, %v5484
      %v5693 = vsel %vm1439, %v5660, %v5486
      %v5695 = vsel %vm1439, %v5662, %v5488
      %v5697 = vsel %vm1439, %v5664, %v5490
      %v5699 = vsel %vm1439, %v5666, %v5492
      %v5701 = vsel %vm1439, %v5668, %v5494
      %v5703 = vsel %vm1439, %v5671, %v5496
      %v5705 = vsel %vm3976, %v5673, %v5501
      %v5707 = vsel %vm3976, %v5675, %v5503
      %v5709 = vsel %vm3976, %v5677, %v5505
      %v5711 = vsel %vm3976, %v5679, %v5507
      %v5713 = vsel %vm3976, %v5681, %v5509
      %v5715 = vsel %vm3976, %v5683, %v5511
      %v5717 = vsel %vm3976, %v5685, %v5513
      %v5719 = vsel %vm3976, %v5687, %v5515
      %v5721 = vsel %vm3976, %v5689, %v5517
      %v5723 = vsel %vm3976, %v5691, %v5519
      %v5725 = vsel %vm3976, %v5693, %v5521
      %v5727 = vsel %vm3976, %v5695, %v5523
      %v5729 = vsel %vm3976, %v5697, %v5525
      %v5731 = vsel %vm3976, %v5699, %v5527
      %v5733 = vsel %vm3976, %v5701, %v5529
      %v5735 = vsel %vm3976, %v5703, %v5531
      %v5736 = vsel %vm1488, %v5705, %v3694
      %v5737 = vsel %vm1488, %v5707, %v3696
      %v5738 = vsel %vm1488, %v5709, %v3698
      %v5739 = vsel %vm1488, %v5711, %v3700
      %v5740 = vsel %vm1488, %v5713, %v3702
      %v5741 = vsel %vm1488, %v5715, %v3704
      %v5742 = vsel %vm1488, %v5717, %v3706
      %v5743 = vsel %vm1488, %v5719, %v3708
      %v5744 = vsel %vm1488, %v5721, %v3710
      %v5745 = vsel %vm1488, %v5723, %v3712
      %v5746 = vsel %vm1488, %v5725, %v3714
      %v5747 = vsel %vm1488, %v5727, %v3716
      %v5748 = vsel %vm1488, %v5729, %v3718
      %v5749 = vsel %vm1488, %v5731, %v3720
      %v5750 = vsel %vm1488, %v5733, %v3722
      %v5751 = vsel %vm1488, %v5735, %v3724
      %v5753 = vsel %vm4041, %v5736, %v5536
      %v5755 = vsel %vm4041, %v5737, %v5538
      %v5757 = vsel %vm4041, %v5738, %v5540
      %v5759 = vsel %vm4041, %v5739, %v5542
      %v5761 = vsel %vm4041, %v5740, %v5544
      %v5763 = vsel %vm4041, %v5741, %v5546
      %v5765 = vsel %vm4041, %v5742, %v5548
      %v5767 = vsel %vm4041, %v5743, %v5550
      %v5769 = vsel %vm4041, %v5744, %v5552
      %v5771 = vsel %vm4041, %v5745, %v5554
      %v5773 = vsel %vm4041, %v5746, %v5556
      %v5775 = vsel %vm4041, %v5747, %v5558
      %v5777 = vsel %vm4041, %v5748, %v5560
      %v5779 = vsel %vm4041, %v5749, %v5562
      %v5781 = vsel %vm4041, %v5750, %v5564
      %v5783 = vsel %vm4041, %v5751, %v5566
      %v5785 = vsel %vm1521, %v5753, %v5571
      %v5787 = vsel %vm1521, %v5755, %v5573
      %v5789 = vsel %vm1521, %v5757, %v5575
      %v5791 = vsel %vm1521, %v5759, %v5577
      %v5793 = vsel %vm1521, %v5761, %v5579
      %v5795 = vsel %vm1521, %v5763, %v5581
      %v5797 = vsel %vm1521, %v5765, %v5583
      %v5799 = vsel %vm1521, %v5767, %v5585
      %v5801 = vsel %vm1521, %v5769, %v5587
      %v5803 = vsel %vm1521, %v5771, %v5589
      %v5805 = vsel %vm1521, %v5773, %v5591
      %v5807 = vsel %vm1521, %v5775, %v5593
      %v5809 = vsel %vm1521, %v5777, %v5595
      %v5811 = vsel %vm1521, %v5779, %v5597
      %v5813 = vsel %vm1521, %v5781, %v5599
      %v5815 = vsel %vm1521, %v5783, %v5601
      %v5817 = vsel %vm4106, %v5785, %v5603
      %v5818 = vsel %vm4106, %v5787, %v4739
      %v5819 = vsel %vm4106, %v5789, %v3823
      %v5820 = vsel %vm4106, %v5791, %v3825
      %v5821 = vsel %vm4106, %v5793, %v3827
      %v5822 = vsel %vm4106, %v5795, %v3829
      %v5823 = vsel %vm4106, %v5797, %v3831
      %v5824 = vsel %vm4106, %v5799, %v3833
      %v5825 = vsel %vm4106, %v5801, %v3835
      %v5826 = vsel %vm4106, %v5803, %v3837
      %v5827 = vsel %vm4106, %v5805, %v3839
      %v5828 = vsel %vm4106, %v5807, %v3841
      %v5829 = vsel %vm4106, %v5809, %v3843
      %v5830 = vsel %vm4106, %v5811, %v3845
      %v5831 = vsel %vm4106, %v5813, %v3847
      %v5832 = vsel %vm4106, %v5815, %v3849
      %v5834 = vsel %vm1554, %v5817, %v5608
      %v5836 = vsel %vm1554, %v5818, %v5610
      %v5838 = vsel %vm1554, %v5819, %v5612
      %v5840 = vsel %vm1554, %v5820, %v5614
      %v5842 = vsel %vm1554, %v5821, %v5616
      %v5844 = vsel %vm1554, %v5822, %v5618
      %v5846 = vsel %vm1554, %v5823, %v5620
      %v5848 = vsel %vm1554, %v5824, %v5622
      %v5850 = vsel %vm1554, %v5825, %v5624
      %v5852 = vsel %vm1554, %v5826, %v5626
      %v5854 = vsel %vm1554, %v5827, %v5628
      %v5856 = vsel %vm1554, %v5828, %v5630
      %v5858 = vsel %vm1554, %v5829, %v5632
      %v5860 = vsel %vm1554, %v5830, %v5634
      %v5862 = vsel %vm1554, %v5831, %v5636
      %v5864 = vsel %vm1554, %v5832, %v5638
      %5881 = vrot.lane.b32.xlu0 %v4973, 72
      %v5882 = vpop.permute.xlu0 %5881
      %5883 = vrot.lane.b32.xlu0 %v4975, 72
      %v5884 = vpop.permute.xlu0 %5883
      %5885 = vrot.lane.b32.xlu0 %v4977, 72
      %v5886 = vpop.permute.xlu0 %5885
      %5887 = vrot.lane.b32.xlu0 %v4979, 72
      %v5888 = vpop.permute.xlu0 %5887
      %5889 = vrot.lane.b32.xlu0 %v4981, 72
      %v5890 = vpop.permute.xlu0 %5889
      %5891 = vrot.lane.b32.xlu0 %v4983, 72
      %v5892 = vpop.permute.xlu0 %5891
      %5893 = vrot.lane.b32.xlu0 %v4985, 72
      %v5894 = vpop.permute.xlu0 %5893
      %5895 = vrot.lane.b32.xlu0 %v4987, 72
      %v5896 = vpop.permute.xlu0 %5895
      %5897 = vrot.lane.b32.xlu0 %v4989, 72
      %v5898 = vpop.permute.xlu0 %5897
      %5899 = vrot.lane.b32.xlu0 %v4991, 72
      %v5900 = vpop.permute.xlu0 %5899
      %5901 = vrot.lane.b32.xlu0 %v4993, 72
      %v5902 = vpop.permute.xlu0 %5901
      %5903 = vrot.lane.b32.xlu0 %v4995, 72
      %v5904 = vpop.permute.xlu0 %5903
      %5905 = vrot.lane.b32.xlu0 %v4997, 72
      %v5906 = vpop.permute.xlu0 %5905
      %5907 = vrot.lane.b32.xlu0 %v4999, 72
      %v5908 = vpop.permute.xlu0 %5907
      %5909 = vrot.lane.b32.xlu0 %v5001, 72
      %v5910 = vpop.permute.xlu0 %5909
      %5911 = vrot.lane.b32.xlu0 %v5003, 72
      %v5912 = vpop.permute.xlu0 %5911
      %5929 = vrot.lane.b32.xlu0 %v5834, 16
      %v5930 = vpop.permute.xlu0 %5929
      %5931 = vrot.lane.b32.xlu0 %v5836, 16
      %v5932 = vpop.permute.xlu0 %5931
      %5933 = vrot.lane.b32.xlu0 %v5838, 16
      %v5934 = vpop.permute.xlu0 %5933
      %5935 = vrot.lane.b32.xlu0 %v5840, 16
      %v5936 = vpop.permute.xlu0 %5935
      %5937 = vrot.lane.b32.xlu0 %v5842, 16
      %v5938 = vpop.permute.xlu0 %5937
      %5939 = vrot.lane.b32.xlu0 %v5844, 16
      %v5940 = vpop.permute.xlu0 %5939
      %5941 = vrot.lane.b32.xlu0 %v5846, 16
      %v5942 = vpop.permute.xlu0 %5941
      %5943 = vrot.lane.b32.xlu0 %v5848, 16
      %v5944 = vpop.permute.xlu0 %5943
      %5945 = vrot.lane.b32.xlu0 %v5850, 16
      %v5946 = vpop.permute.xlu0 %5945
      %5947 = vrot.lane.b32.xlu0 %v5852, 16
      %v5948 = vpop.permute.xlu0 %5947
      %5949 = vrot.lane.b32.xlu0 %v5854, 16
      %v5950 = vpop.permute.xlu0 %5949
      %5951 = vrot.lane.b32.xlu0 %v5856, 16
      %v5952 = vpop.permute.xlu0 %5951
      %5953 = vrot.lane.b32.xlu0 %v5858, 16
      %v5954 = vpop.permute.xlu0 %5953
      %5955 = vrot.lane.b32.xlu0 %v5860, 16
      %v5956 = vpop.permute.xlu0 %5955
      %5957 = vrot.lane.b32.xlu0 %v5862, 16
      %v5958 = vpop.permute.xlu0 %5957
      %5959 = vrot.lane.b32.xlu0 %v5864, 16
      %v5960 = vpop.permute.xlu0 %5959
      %v5993 = vunpack.c.l.b16 %v2100
      %v5994 = vunpack.c.l.b16 %v2101
      %v5995 = vunpack.c.l.b16 %v2102
      %v5996 = vunpack.c.l.b16 %v2103
      %v5997 = vunpack.c.l.b16 %v2104
      %v5998 = vunpack.c.l.b16 %v2105
      %v5999 = vunpack.c.l.b16 %v2106
      %v6000 = vunpack.c.l.b16 %v2107
      %v6001 = vunpack.c.l.b16 %v2108
      %v6002 = vunpack.c.l.b16 %v2109
      %v6003 = vunpack.c.l.b16 %v2110
      %v6004 = vunpack.c.l.b16 %v2111
      %v6005 = vunpack.c.l.b16 %v2112
      %v6006 = vunpack.c.l.b16 %v2113
      %v6007 = vunpack.c.l.b16 %v2114
      %v6008 = vunpack.c.l.b16 %v2115
      %v6009 = vunpack.c.l.b16 %v2116
      %v6010 = vunpack.c.l.b16 %v2117
      %v6011 = vunpack.c.l.b16 %v2118
      %v6012 = vunpack.c.l.b16 %v2119
      %v6013 = vunpack.c.l.b16 %v2120
      %v6014 = vunpack.c.l.b16 %v2121
      %v6015 = vunpack.c.l.b16 %v2122
      %v6016 = vunpack.c.l.b16 %v2123
      %v6017 = vunpack.c.l.b16 %v2124
      %v6018 = vunpack.c.l.b16 %v2125
      %v6019 = vunpack.c.l.b16 %v2126
      %v6020 = vunpack.c.l.b16 %v2127
      %v6021 = vunpack.c.l.b16 %v2128
      %v6022 = vunpack.c.l.b16 %v2129
      %v6023 = vunpack.c.l.b16 %v2130
      %v6024 = vunpack.c.l.b16 %v2131
      %v6025 = vpack.c.b16 %v5994, %v5993
      %v6026 = vpack.c.b16 %v5996, %v5995
      %v6027 = vpack.c.b16 %v5998, %v5997
      %v6028 = vpack.c.b16 %v6000, %v5999
      %v6029 = vpack.c.b16 %v6002, %v6001
      %v6030 = vpack.c.b16 %v6004, %v6003
      %v6031 = vpack.c.b16 %v6006, %v6005
      %v6032 = vpack.c.b16 %v6008, %v6007
      %v6033 = vpack.c.b16 %v6010, %v6009
      %v6034 = vpack.c.b16 %v6012, %v6011
      %v6035 = vpack.c.b16 %v6014, %v6013
      %v6036 = vpack.c.b16 %v6016, %v6015
      %v6037 = vpack.c.b16 %v6018, %v6017
      %v6038 = vpack.c.b16 %v6020, %v6019
      %v6039 = vpack.c.b16 %v6022, %v6021
      %v6040 = vpack.c.b16 %v6024, %v6023
      %6041 = vrot.lane.b32.xlu0 %v6025, 88
      %v6042 = vpop.permute.xlu0 %6041
      %6043 = vrot.lane.b32.xlu0 %v6026, 88
      %v6044 = vpop.permute.xlu0 %6043
      %6045 = vrot.lane.b32.xlu0 %v6027, 88
      %v6046 = vpop.permute.xlu0 %6045
      %6047 = vrot.lane.b32.xlu0 %v6028, 88
      %v6048 = vpop.permute.xlu0 %6047
      %6049 = vrot.lane.b32.xlu0 %v6029, 88
      %v6050 = vpop.permute.xlu0 %6049
      %6051 = vrot.lane.b32.xlu0 %v6030, 88
      %v6052 = vpop.permute.xlu0 %6051
      %6053 = vrot.lane.b32.xlu0 %v6031, 88
      %v6054 = vpop.permute.xlu0 %6053
      %6055 = vrot.lane.b32.xlu0 %v6032, 88
      %v6056 = vpop.permute.xlu0 %6055
      %6057 = vrot.lane.b32.xlu0 %v6033, 88
      %v6058 = vpop.permute.xlu0 %6057
      %6059 = vrot.lane.b32.xlu0 %v6034, 88
      %v6060 = vpop.permute.xlu0 %6059
      %6061 = vrot.lane.b32.xlu0 %v6035, 88
      %v6062 = vpop.permute.xlu0 %6061
      %6063 = vrot.lane.b32.xlu0 %v6036, 88
      %v6064 = vpop.permute.xlu0 %6063
      %6065 = vrot.lane.b32.xlu0 %v6037, 88
      %v6066 = vpop.permute.xlu0 %6065
      %6067 = vrot.lane.b32.xlu0 %v6038, 88
      %v6068 = vpop.permute.xlu0 %6067
      %6069 = vrot.lane.b32.xlu0 %v6039, 88
      %v6070 = vpop.permute.xlu0 %6069
      %6071 = vrot.lane.b32.xlu0 %v6040, 88
      %v6072 = vpop.permute.xlu0 %6071
      %vm6073 = vcmask 588800
      %v6075 = vsel %vm6073, %v4140, %v5882
      %v6078 = vsel %vm6073, %v4142, %v5884
      %v6081 = vsel %vm6073, %v4144, %v5886
      %v6084 = vsel %vm6073, %v4146, %v5888
      %v6087 = vsel %vm6073, %v4148, %v5890
      %v6090 = vsel %vm6073, %v4150, %v5892
      %v6093 = vsel %vm6073, %v4152, %v5894
      %v6096 = vsel %vm6073, %v4154, %v5896
      %v6099 = vsel %vm6073, %v4156, %v5898
      %v6102 = vsel %vm6073, %v4158, %v5900
      %v6105 = vsel %vm6073, %v4160, %v5902
      %v6108 = vsel %vm6073, %v4162, %v5904
      %v6111 = vsel %vm6073, %v4164, %v5906
      %v6114 = vsel %vm6073, %v4166, %v5908
      %v6117 = vsel %vm6073, %v4168, %v5910
      %v6120 = vsel %vm6073, %v4170, %v5912
      %v6123 = vsel %vm1439, %v5882, %v5930
      %v6125 = vsel %vm1439, %v5884, %v5932
      %v6127 = vsel %vm1439, %v5886, %v5934
      %v6129 = vsel %vm1439, %v5888, %v5936
      %v6131 = vsel %vm1439, %v5890, %v5938
      %v6133 = vsel %vm1439, %v5892, %v5940
      %v6135 = vsel %vm1439, %v5894, %v5942
      %v6137 = vsel %vm1439, %v5896, %v5944
      %v6139 = vsel %vm1439, %v5898, %v5946
      %v6141 = vsel %vm1439, %v5900, %v5948
      %v6143 = vsel %vm1439, %v5902, %v5950
      %v6145 = vsel %vm1439, %v5904, %v5952
      %v6147 = vsel %vm1439, %v5906, %v5954
      %v6149 = vsel %vm1439, %v5908, %v5956
      %v6151 = vsel %vm1439, %v5910, %v5958
      %v6153 = vsel %vm1439, %v5912, %v5960
      %vm6154 = vcmask 719872
      %v6156 = vsel %vm6154, %v6123, %v6042
      %v6158 = vsel %vm6154, %v6125, %v6044
      %v6160 = vsel %vm6154, %v6127, %v6046
      %v6162 = vsel %vm6154, %v6129, %v6048
      %v6164 = vsel %vm6154, %v6131, %v6050
      %v6166 = vsel %vm6154, %v6133, %v6052
      %v6168 = vsel %vm6154, %v6135, %v6054
      %v6170 = vsel %vm6154, %v6137, %v6056
      %v6172 = vsel %vm6154, %v6139, %v6058
      %v6174 = vsel %vm6154, %v6141, %v6060
      %v6176 = vsel %vm6154, %v6143, %v6062
      %v6178 = vsel %vm6154, %v6145, %v6064
      %v6180 = vsel %vm6154, %v6147, %v6066
      %v6182 = vsel %vm6154, %v6149, %v6068
      %v6184 = vsel %vm6154, %v6151, %v6070
      %v6186 = vsel %vm6154, %v6153, %v6072
      %v6187 = vld [vmem:[%s4] sm:$0xf]
      %v6188 = vld [vmem:[%s4 + $0x4] sm:$0xf]
      %v6189 = vld [vmem:[%s4 + $0x8] sm:$0xf]
      %v6190 = vld [vmem:[%s4 + $0xc] sm:$0xf]
      %v6191 = vld [vmem:[%s4 + $0x10] sm:$0xf]
      %v6192 = vld [vmem:[%s4 + $0x14] sm:$0xf]
      %v6193 = vld [vmem:[%s4 + $0x18] sm:$0xf]
      %v6194 = vld [vmem:[%s4 + $0x1c] sm:$0xf]
      %v6195 = vld [vmem:[%s4 + $0x20] sm:$0xf]
      %v6196 = vld [vmem:[%s4 + $0x24] sm:$0xf]
      %v6197 = vld [vmem:[%s4 + $0x28] sm:$0xf]
      %v6198 = vld [vmem:[%s4 + $0x2c] sm:$0xf]
      %v6199 = vld [vmem:[%s4 + $0x30] sm:$0xf]
      %v6200 = vld [vmem:[%s4 + $0x34] sm:$0xf]
      %v6201 = vld [vmem:[%s4 + $0x38] sm:$0xf]
      %v6202 = vld [vmem:[%s4 + $0x3c] sm:$0xf]
      %v6203 = vld [vmem:[%s4 + $0x40] sm:$0xf]
      %v6204 = vld [vmem:[%s4 + $0x44] sm:$0xf]
      %v6205 = vld [vmem:[%s4 + $0x48] sm:$0xf]
      %v6206 = vld [vmem:[%s4 + $0x4c] sm:$0xf]
      %v6207 = vld [vmem:[%s4 + $0x50] sm:$0xf]
      %v6208 = vld [vmem:[%s4 + $0x54] sm:$0xf]
      %v6209 = vld [vmem:[%s4 + $0x58] sm:$0xf]
      %v6210 = vld [vmem:[%s4 + $0x5c] sm:$0xf]
      %v6211 = vld [vmem:[%s4 + $0x60] sm:$0xf]
      %v6212 = vld [vmem:[%s4 + $0x64] sm:$0xf]
      %v6213 = vld [vmem:[%s4 + $0x68] sm:$0xf]
      %v6214 = vld [vmem:[%s4 + $0x6c] sm:$0xf]
      %v6215 = vld [vmem:[%s5] sm:$0x1]
      %v6217 = vperm.slane %v6215, 0
      %v6247 = vunpack.c.l.b16 %v6187
      %v6248 = vunpack.c.l.b16 %v6188
      %v6249 = vunpack.c.l.b16 %v6189
      %v6250 = vunpack.c.l.b16 %v6190
      %v6251 = vunpack.c.l.b16 %v6191
      %v6252 = vunpack.c.l.b16 %v6192
      %v6253 = vunpack.c.l.b16 %v6193
      %v6254 = vunpack.c.l.b16 %v6194
      %v6255 = vunpack.c.l.b16 %v6195
      %v6256 = vunpack.c.l.b16 %v6196
      %v6257 = vunpack.c.l.b16 %v6197
      %v6258 = vunpack.c.l.b16 %v6198
      %v6259 = vunpack.c.l.b16 %v6199
      %v6260 = vunpack.c.l.b16 %v6200
      %v6261 = vunpack.c.l.b16 %v6201
      %v6262 = vunpack.c.l.b16 %v6202
      %v6263 = vunpack.c.l.b16 %v6203
      %v6264 = vunpack.c.l.b16 %v6204
      %v6265 = vunpack.c.l.b16 %v6205
      %v6266 = vunpack.c.l.b16 %v6206
      %v6267 = vunpack.c.l.b16 %v6207
      %v6268 = vunpack.c.l.b16 %v6208
      %v6269 = vunpack.c.l.b16 %v6209
      %v6270 = vunpack.c.l.b16 %v6210
      %v6271 = vunpack.c.l.b16 %v6211
      %v6272 = vunpack.c.l.b16 %v6212
      %v6273 = vunpack.c.l.b16 %v6213
      %v6274 = vunpack.c.l.b16 %v6214
      %v6275 = vpack.c.b16 %v6248, %v6247
      %v6276 = vpack.c.b16 %v6250, %v6249
      %v6277 = vpack.c.b16 %v6252, %v6251
      %v6278 = vpack.c.b16 %v6254, %v6253
      %v6279 = vpack.c.b16 %v6256, %v6255
      %v6280 = vpack.c.b16 %v6258, %v6257
      %v6281 = vpack.c.b16 %v6260, %v6259
      %v6282 = vpack.c.b16 %v6262, %v6261
      %v6283 = vpack.c.b16 %v6264, %v6263
      %v6284 = vpack.c.b16 %v6266, %v6265
      %v6285 = vpack.c.b16 %v6268, %v6267
      %v6286 = vpack.c.b16 %v6270, %v6269
      %v6287 = vpack.c.b16 %v6272, %v6271
      %v6288 = vpack.c.b16 %v6274, %v6273
      %v6303 = vsel %vm1620, %v6156, 0
      %v6305 = vsel %vm1620, %v6158, 0
      %v6307 = vsel %vm1620, %v6160, 0
      %v6309 = vsel %vm1620, %v6162, 0
      %v6311 = vsel %vm1620, %v6164, 0
      %v6313 = vsel %vm1620, %v6166, 0
      %v6315 = vsel %vm1620, %v6168, 0
      %v6317 = vsel %vm1620, %v6170, 0
      %v6319 = vsel %vm1620, %v6172, 0
      %v6321 = vsel %vm1620, %v6174, 0
      %v6323 = vsel %vm1620, %v6176, 0
      %v6325 = vsel %vm1620, %v6178, 0
      %v6327 = vsel %vm1620, %v6180, 0
      %v6329 = vsel %vm1620, %v6182, 0
      %v6331 = vsel %vm1620, %v6184, 0
      %v6333 = vsel %vm1620, %v6186, 0
      %6335 = vmatpush.bf16.msra.mxu0 %v6282
      %6336 = vmatpush.bf16.msra.mxu0 %v6281
      %6337 = vmatpush.bf16.msra.mxu0 %v6280
      %6338 = vmatpush.bf16.msra.mxu0 %v6279
      %6339 = vmatpush.bf16.msra.mxu0 %v6278
      %6340 = vmatpush.bf16.msra.mxu0 %v6277
      %6341 = vmatpush.bf16.msra.mxu0 %v6276
      %6342 = vmatpush.bf16.msra.mxu0 %v6275
      %6343 = vmatmul.bf16.gmra.mxu0 %v6075
      %v6344 = vpop.f32.mrf.mxu0
      %v6345 = vadd.f32 %v6217, %v6344
      %v6346 = vpop.f32.mrf.mxu0
      %v6347 = vadd.f32 %v6217, %v6346
      %6348 = vmatmul.bf16.gmra.mxu0 %v6078
      %v6349 = vpop.f32.mrf.mxu0
      %v6350 = vadd.f32 %v6217, %v6349
      %v6351 = vpop.f32.mrf.mxu0
      %v6352 = vadd.f32 %v6217, %v6351
      %6353 = vmatmul.bf16.gmra.mxu0 %v6081
      %v6354 = vpop.f32.mrf.mxu0
      %v6355 = vadd.f32 %v6217, %v6354
      %v6356 = vpop.f32.mrf.mxu0
      %v6357 = vadd.f32 %v6217, %v6356
      %6358 = vmatmul.bf16.gmra.mxu0 %v6084
      %v6359 = vpop.f32.mrf.mxu0
      %v6360 = vadd.f32 %v6217, %v6359
      %v6361 = vpop.f32.mrf.mxu0
      %v6362 = vadd.f32 %v6217, %v6361
      %6363 = vmatmul.bf16.gmra.mxu0 %v6087
      %v6364 = vpop.f32.mrf.mxu0
      %v6365 = vadd.f32 %v6217, %v6364
      %v6366 = vpop.f32.mrf.mxu0
      %v6367 = vadd.f32 %v6217, %v6366
      %6368 = vmatmul.bf16.gmra.mxu0 %v6090
      %v6369 = vpop.f32.mrf.mxu0
      %v6370 = vadd.f32 %v6217, %v6369
      %v6371 = vpop.f32.mrf.mxu0
      %v6372 = vadd.f32 %v6217, %v6371
      %6373 = vmatmul.bf16.gmra.mxu0 %v6093
      %v6374 = vpop.f32.mrf.mxu0
      %v6375 = vadd.f32 %v6217, %v6374
      %v6376 = vpop.f32.mrf.mxu0
      %v6377 = vadd.f32 %v6217, %v6376
      %6378 = vmatmul.bf16.gmra.mxu0 %v6096
      %v6379 = vpop.f32.mrf.mxu0
      %v6380 = vadd.f32 %v6217, %v6379
      %v6381 = vpop.f32.mrf.mxu0
      %v6382 = vadd.f32 %v6217, %v6381
      %6383 = vmatmul.bf16.gmra.mxu0 %v6099
      %v6384 = vpop.f32.mrf.mxu0
      %v6385 = vadd.f32 %v6217, %v6384
      %v6386 = vpop.f32.mrf.mxu0
      %v6387 = vadd.f32 %v6217, %v6386
      %6388 = vmatmul.bf16.gmra.mxu0 %v6102
      %v6389 = vpop.f32.mrf.mxu0
      %v6390 = vadd.f32 %v6217, %v6389
      %v6391 = vpop.f32.mrf.mxu0
      %v6392 = vadd.f32 %v6217, %v6391
      %6393 = vmatmul.bf16.gmra.mxu0 %v6105
      %v6394 = vpop.f32.mrf.mxu0
      %v6395 = vadd.f32 %v6217, %v6394
      %v6396 = vpop.f32.mrf.mxu0
      %v6397 = vadd.f32 %v6217, %v6396
      %6398 = vmatmul.bf16.gmra.mxu0 %v6108
      %v6399 = vpop.f32.mrf.mxu0
      %v6400 = vadd.f32 %v6217, %v6399
      %v6401 = vpop.f32.mrf.mxu0
      %v6402 = vadd.f32 %v6217, %v6401
      %6403 = vmatmul.bf16.gmra.mxu0 %v6111
      %v6404 = vpop.f32.mrf.mxu0
      %v6405 = vadd.f32 %v6217, %v6404
      %v6406 = vpop.f32.mrf.mxu0
      %v6407 = vadd.f32 %v6217, %v6406
      %6408 = vmatmul.bf16.gmra.mxu0 %v6114
      %v6409 = vpop.f32.mrf.mxu0
      %v6410 = vadd.f32 %v6217, %v6409
      %v6411 = vpop.f32.mrf.mxu0
      %v6412 = vadd.f32 %v6217, %v6411
      %6413 = vmatmul.bf16.gmra.mxu0 %v6117
      %v6414 = vpop.f32.mrf.mxu0
      %v6415 = vadd.f32 %v6217, %v6414
      %v6416 = vpop.f32.mrf.mxu0
      %v6417 = vadd.f32 %v6217, %v6416
      %6418 = vmatmul.bf16.gmra.mxu0 %v6120
      %v6419 = vpop.f32.mrf.mxu0
      %v6420 = vadd.f32 %v6217, %v6419
      %v6421 = vpop.f32.mrf.mxu0
      %v6422 = vadd.f32 %v6217, %v6421
      %6423 = vdwg.mxu0
      %6424 = vmatpush.bf16.msra.mxu0 0
      %6425 = vmatpush.bf16.msra.mxu0 0
      %6426 = vmatpush.bf16.msra.mxu0 %v6288
      %6427 = vmatpush.bf16.msra.mxu0 %v6287
      %6428 = vmatpush.bf16.msra.mxu0 %v6286
      %6429 = vmatpush.bf16.msra.mxu0 %v6285
      %6430 = vmatpush.bf16.msra.mxu0 %v6284
      %6431 = vmatpush.bf16.msra.mxu0 %v6283
      %6432 = vmatmul.bf16.gmra.mxu0 %v6303
      %v6433 = vpop.f32.mrf.mxu0
      %v6434 = vadd.f32 %v6345, %v6433
      %v6435 = vpop.f32.mrf.mxu0
      %v6436 = vadd.f32 %v6347, %v6435
      %6437 = vmatmul.bf16.gmra.mxu0 %v6305
      %v6438 = vpop.f32.mrf.mxu0
      %v6439 = vadd.f32 %v6350, %v6438
      %v6440 = vpop.f32.mrf.mxu0
      %v6441 = vadd.f32 %v6352, %v6440
      %6442 = vmatmul.bf16.gmra.mxu0 %v6307
      %v6443 = vpop.f32.mrf.mxu0
      %v6444 = vadd.f32 %v6355, %v6443
      %v6445 = vpop.f32.mrf.mxu0
      %v6446 = vadd.f32 %v6357, %v6445
      %6447 = vmatmul.bf16.gmra.mxu0 %v6309
      %v6448 = vpop.f32.mrf.mxu0
      %v6449 = vadd.f32 %v6360, %v6448
      %v6450 = vpop.f32.mrf.mxu0
      %v6451 = vadd.f32 %v6362, %v6450
      %6452 = vmatmul.bf16.gmra.mxu0 %v6311
      %v6453 = vpop.f32.mrf.mxu0
      %v6454 = vadd.f32 %v6365, %v6453
      %v6455 = vpop.f32.mrf.mxu0
      %v6456 = vadd.f32 %v6367, %v6455
      %6457 = vmatmul.bf16.gmra.mxu0 %v6313
      %v6458 = vpop.f32.mrf.mxu0
      %v6459 = vadd.f32 %v6370, %v6458
      %v6460 = vpop.f32.mrf.mxu0
      %v6461 = vadd.f32 %v6372, %v6460
      %6462 = vmatmul.bf16.gmra.mxu0 %v6315
      %v6463 = vpop.f32.mrf.mxu0
      %v6464 = vadd.f32 %v6375, %v6463
      %v6465 = vpop.f32.mrf.mxu0
      %v6466 = vadd.f32 %v6377, %v6465
      %6467 = vmatmul.bf16.gmra.mxu0 %v6317
      %v6468 = vpop.f32.mrf.mxu0
      %v6469 = vadd.f32 %v6380, %v6468
      %v6470 = vpop.f32.mrf.mxu0
      %v6471 = vadd.f32 %v6382, %v6470
      %6472 = vmatmul.bf16.gmra.mxu0 %v6319
      %v6473 = vpop.f32.mrf.mxu0
      %v6474 = vadd.f32 %v6385, %v6473
      %v6475 = vpop.f32.mrf.mxu0
      %v6476 = vadd.f32 %v6387, %v6475
      %6477 = vmatmul.bf16.gmra.mxu0 %v6321
      %v6478 = vpop.f32.mrf.mxu0
      %v6479 = vadd.f32 %v6390, %v6478
      %v6480 = vpop.f32.mrf.mxu0
      %v6481 = vadd.f32 %v6392, %v6480
      %6482 = vmatmul.bf16.gmra.mxu0 %v6323
      %v6483 = vpop.f32.mrf.mxu0
      %v6484 = vadd.f32 %v6395, %v6483
      %v6485 = vpop.f32.mrf.mxu0
      %v6486 = vadd.f32 %v6397, %v6485
      %6487 = vmatmul.bf16.gmra.mxu0 %v6325
      %v6488 = vpop.f32.mrf.mxu0
      %v6489 = vadd.f32 %v6400, %v6488
      %v6490 = vpop.f32.mrf.mxu0
      %v6491 = vadd.f32 %v6402, %v6490
      %6492 = vmatmul.bf16.gmra.mxu0 %v6327
      %v6493 = vpop.f32.mrf.mxu0
      %v6494 = vadd.f32 %v6405, %v6493
      %v6495 = vpop.f32.mrf.mxu0
      %v6496 = vadd.f32 %v6407, %v6495
      %6497 = vmatmul.bf16.gmra.mxu0 %v6329
      %v6498 = vpop.f32.mrf.mxu0
      %v6499 = vadd.f32 %v6410, %v6498
      %v6500 = vpop.f32.mrf.mxu0
      %v6501 = vadd.f32 %v6412, %v6500
      %6502 = vmatmul.bf16.gmra.mxu0 %v6331
      %v6503 = vpop.f32.mrf.mxu0
      %v6504 = vadd.f32 %v6415, %v6503
      %v6505 = vpop.f32.mrf.mxu0
      %v6506 = vadd.f32 %v6417, %v6505
      %6507 = vmatmul.bf16.gmra.mxu0 %v6333
      %v6508 = vpop.f32.mrf.mxu0
      %v6509 = vadd.f32 %v6420, %v6508
      %v6510 = vpop.f32.mrf.mxu0
      %v6511 = vadd.f32 %v6422, %v6510
      %6512 = vdwg.mxu0
      %vm6513 = vcmp.ge.f32.partialorder %v6434, 0.0
      %vm6514 = vcmp.ge.f32.partialorder %v6436, 0.0
      %vm6515 = vcmp.ge.f32.partialorder %v6439, 0.0
      %vm6516 = vcmp.ge.f32.partialorder %v6441, 0.0
      %vm6517 = vcmp.ge.f32.partialorder %v6444, 0.0
      %vm6518 = vcmp.ge.f32.partialorder %v6446, 0.0
      %vm6519 = vcmp.ge.f32.partialorder %v6449, 0.0
      %vm6520 = vcmp.ge.f32.partialorder %v6451, 0.0
      %vm6521 = vcmp.ge.f32.partialorder %v6454, 0.0
      %vm6522 = vcmp.ge.f32.partialorder %v6456, 0.0
      %vm6523 = vcmp.ge.f32.partialorder %v6459, 0.0
      %vm6524 = vcmp.ge.f32.partialorder %v6461, 0.0
      %vm6525 = vcmp.ge.f32.partialorder %v6464, 0.0
      %vm6526 = vcmp.ge.f32.partialorder %v6466, 0.0
      %vm6527 = vcmp.ge.f32.partialorder %v6469, 0.0
      %vm6528 = vcmp.ge.f32.partialorder %v6471, 0.0
      %vm6529 = vcmp.ge.f32.partialorder %v6474, 0.0
      %vm6530 = vcmp.ge.f32.partialorder %v6476, 0.0
      %vm6531 = vcmp.ge.f32.partialorder %v6479, 0.0
      %vm6532 = vcmp.ge.f32.partialorder %v6481, 0.0
      %vm6533 = vcmp.ge.f32.partialorder %v6484, 0.0
      %vm6534 = vcmp.ge.f32.partialorder %v6486, 0.0
      %vm6535 = vcmp.ge.f32.partialorder %v6489, 0.0
      %vm6536 = vcmp.ge.f32.partialorder %v6491, 0.0
      %vm6537 = vcmp.ge.f32.partialorder %v6494, 0.0
      %vm6538 = vcmp.ge.f32.partialorder %v6496, 0.0
      %vm6539 = vcmp.ge.f32.partialorder %v6499, 0.0
      %vm6540 = vcmp.ge.f32.partialorder %v6501, 0.0
      %vm6541 = vcmp.ge.f32.partialorder %v6504, 0.0
      %vm6542 = vcmp.ge.f32.partialorder %v6506, 0.0
      %vm6543 = vcmp.ge.f32.partialorder %v6509, 0.0
      %vm6544 = vcmp.ge.f32.partialorder %v6511, 0.0
      %v6545 = vmul.f32 %v6434, 0.01
      %v6546 = vmul.f32 %v6436, 0.01
      %v6547 = vmul.f32 %v6439, 0.01
      %v6548 = vmul.f32 %v6441, 0.01
      %v6549 = vmul.f32 %v6444, 0.01
      %v6550 = vmul.f32 %v6446, 0.01
      %v6551 = vmul.f32 %v6449, 0.01
      %v6552 = vmul.f32 %v6451, 0.01
      %v6553 = vmul.f32 %v6454, 0.01
      %v6554 = vmul.f32 %v6456, 0.01
      %v6555 = vmul.f32 %v6459, 0.01
      %v6556 = vmul.f32 %v6461, 0.01
      %v6557 = vmul.f32 %v6464, 0.01
      %v6558 = vmul.f32 %v6466, 0.01
      %v6559 = vmul.f32 %v6469, 0.01
      %v6560 = vmul.f32 %v6471, 0.01
      %v6561 = vmul.f32 %v6474, 0.01
      %v6562 = vmul.f32 %v6476, 0.01
      %v6563 = vmul.f32 %v6479, 0.01
      %v6564 = vmul.f32 %v6481, 0.01
      %v6565 = vmul.f32 %v6484, 0.01
      %v6566 = vmul.f32 %v6486, 0.01
      %v6567 = vmul.f32 %v6489, 0.01
      %v6568 = vmul.f32 %v6491, 0.01
      %v6569 = vmul.f32 %v6494, 0.01
      %v6570 = vmul.f32 %v6496, 0.01
      %v6571 = vmul.f32 %v6499, 0.01
      %v6572 = vmul.f32 %v6501, 0.01
      %v6573 = vmul.f32 %v6504, 0.01
      %v6574 = vmul.f32 %v6506, 0.01
      %v6575 = vmul.f32 %v6509, 0.01
      %v6576 = vmul.f32 %v6511, 0.01
      %v6577 = vsel %vm6513, %v6434, %v6545
      %v6578 = vsel %vm6514, %v6436, %v6546
      %v6579 = vsel %vm6515, %v6439, %v6547
      %v6580 = vsel %vm6516, %v6441, %v6548
      %v6581 = vsel %vm6517, %v6444, %v6549
      %v6582 = vsel %vm6518, %v6446, %v6550
      %v6583 = vsel %vm6519, %v6449, %v6551
      %v6584 = vsel %vm6520, %v6451, %v6552
      %v6585 = vsel %vm6521, %v6454, %v6553
      %v6586 = vsel %vm6522, %v6456, %v6554
      %v6587 = vsel %vm6523, %v6459, %v6555
      %v6588 = vsel %vm6524, %v6461, %v6556
      %v6589 = vsel %vm6525, %v6464, %v6557
      %v6590 = vsel %vm6526, %v6466, %v6558
      %v6591 = vsel %vm6527, %v6469, %v6559
      %v6592 = vsel %vm6528, %v6471, %v6560
      %v6593 = vsel %vm6529, %v6474, %v6561
      %v6594 = vsel %vm6530, %v6476, %v6562
      %v6595 = vsel %vm6531, %v6479, %v6563
      %v6596 = vsel %vm6532, %v6481, %v6564
      %v6597 = vsel %vm6533, %v6484, %v6565
      %v6598 = vsel %vm6534, %v6486, %v6566
      %v6599 = vsel %vm6535, %v6489, %v6567
      %v6600 = vsel %vm6536, %v6491, %v6568
      %v6601 = vsel %vm6537, %v6494, %v6569
      %v6602 = vsel %vm6538, %v6496, %v6570
      %v6603 = vsel %vm6539, %v6499, %v6571
      %v6604 = vsel %vm6540, %v6501, %v6572
      %v6605 = vsel %vm6541, %v6504, %v6573
      %v6606 = vsel %vm6542, %v6506, %v6574
      %v6607 = vsel %vm6543, %v6509, %v6575
      %v6608 = vsel %vm6544, %v6511, %v6576
      %v6609 = vsel %vm1439, %v6577, 0.0
      %v6610 = vsel %vm1439, %v6578, 0.0
      %v6611 = vadd.f32 %v6609, %v6610
      %v6612 = vsel %vm1439, %v6579, 0.0
      %v6613 = vadd.f32 %v6611, %v6612
      %v6614 = vsel %vm1439, %v6580, 0.0
      %v6615 = vadd.f32 %v6613, %v6614
      %v6616 = vsel %vm1439, %v6581, 0.0
      %v6617 = vadd.f32 %v6615, %v6616
      %v6618 = vsel %vm1439, %v6582, 0.0
      %v6619 = vadd.f32 %v6617, %v6618
      %v6620 = vsel %vm1439, %v6583, 0.0
      %v6621 = vadd.f32 %v6619, %v6620
      %v6622 = vsel %vm1439, %v6584, 0.0
      %v6623 = vadd.f32 %v6621, %v6622
      %v6624 = vsel %vm1439, %v6585, 0.0
      %v6625 = vadd.f32 %v6623, %v6624
      %v6626 = vsel %vm1439, %v6586, 0.0
      %v6627 = vadd.f32 %v6625, %v6626
      %v6628 = vsel %vm1439, %v6587, 0.0
      %v6629 = vadd.f32 %v6627, %v6628
      %v6630 = vsel %vm1439, %v6588, 0.0
      %v6631 = vadd.f32 %v6629, %v6630
      %v6632 = vsel %vm1439, %v6589, 0.0
      %v6633 = vadd.f32 %v6631, %v6632
      %v6634 = vsel %vm1439, %v6590, 0.0
      %v6635 = vadd.f32 %v6633, %v6634
      %v6636 = vsel %vm1439, %v6591, 0.0
      %v6637 = vadd.f32 %v6635, %v6636
      %v6638 = vsel %vm1439, %v6592, 0.0
      %v6639 = vadd.f32 %v6637, %v6638
      %v6640 = vsel %vm1439, %v6593, 0.0
      %v6641 = vadd.f32 %v6639, %v6640
      %v6642 = vsel %vm1439, %v6594, 0.0
      %v6643 = vadd.f32 %v6641, %v6642
      %v6644 = vsel %vm1439, %v6595, 0.0
      %v6645 = vadd.f32 %v6643, %v6644
      %v6646 = vsel %vm1439, %v6596, 0.0
      %v6647 = vadd.f32 %v6645, %v6646
      %v6648 = vsel %vm1439, %v6597, 0.0
      %v6649 = vadd.f32 %v6647, %v6648
      %v6650 = vsel %vm1439, %v6598, 0.0
      %v6651 = vadd.f32 %v6649, %v6650
      %v6652 = vsel %vm1439, %v6599, 0.0
      %v6653 = vadd.f32 %v6651, %v6652
      %v6654 = vsel %vm1439, %v6600, 0.0
      %v6655 = vadd.f32 %v6653, %v6654
      %v6656 = vsel %vm1439, %v6601, 0.0
      %v6657 = vadd.f32 %v6655, %v6656
      %v6658 = vsel %vm1439, %v6602, 0.0
      %v6659 = vadd.f32 %v6657, %v6658
      %v6660 = vsel %vm1439, %v6603, 0.0
      %v6661 = vadd.f32 %v6659, %v6660
      %v6662 = vsel %vm1439, %v6604, 0.0
      %v6663 = vadd.f32 %v6661, %v6662
      %v6664 = vsel %vm1439, %v6605, 0.0
      %v6665 = vadd.f32 %v6663, %v6664
      %v6666 = vsel %vm1439, %v6606, 0.0
      %v6667 = vadd.f32 %v6665, %v6666
      %v6668 = vsel %vm1439, %v6607, 0.0
      %v6669 = vadd.f32 %v6667, %v6668
      %v6670 = vsel %vm1439, %v6608, 0.0
      %v6671 = vadd.f32 %v6669, %v6670
      %v6672 = vrot.slane %v6671, 4
      %v6673 = vadd.f32 %v6671, %v6672
      %v6674 = vrot.slane %v6673, 2
      %v6675 = vadd.f32 %v6673, %v6674
      %v6676 = vrot.slane %v6675, 1
      %v6677 = vadd.f32 %v6675, %v6676
      %v6678 = vmul.f32 %v6677, 0.00390625
      %v6679 = vld [vmem:[%s6] sm:$0xff]
      %v6680 = vld [vmem:[%s6 + $0x8] sm:$0xff]
      %v6682 = vsel %vm1439, %v6678, 0
      %6684 = vmatpush.msra.mxu0 0.0
      %6685 = vmatpush.msra.mxu0 0.0
      %6686 = vmatpush.msra.mxu0 0.0
      %6687 = vmatpush.msra.mxu0 0.0
      %6688 = vmatpush.msra.mxu0 0.0
      %6689 = vmatpush.msra.mxu0 0.0
      %6690 = vmatpush.msra.mxu0 0.0
      %6691 = vmatpush.msra.mxu0 0.0
      %6692 = vmatpush.msra.mxu0 0.0
      %6693 = vmatpush.msra.mxu0 0.0
      %6694 = vmatpush.msra.mxu0 0.0
      %6695 = vmatpush.msra.mxu0 0.0
      %6696 = vmatpush.msra.mxu0 0.0
      %6697 = vmatpush.msra.mxu0 0.0
      %6698 = vmatpush.msra.mxu0 %v6680
      %6699 = vmatpush.msra.mxu0 %v6679
      %6700 = vmatmul.f32.gmra.mxu0 %v6682
      %v6701 = vpop.f32.mrf.mxu0
      %v6702 = vadd.f32 0.0, %v6701
      %6703 = vdwg.mxu0
      %v6704 = vmax.f32 %v6702, 0.0
      %v6705 = vld [vmem:[%s7] sm:$0xf]
      %vm6706 = vcmask 31744
      %v6708 = vsel %vm6706, %v6704, 0
      %vm6710 = vcmask 1043456
      %v6712 = vsel %vm6710, %v6705, 0
      %6714 = vmatpush.msra.mxu0 0.0
      %6715 = vmatpush.msra.mxu0 0.0
      %6716 = vmatpush.msra.mxu0 0.0
      %6717 = vmatpush.msra.mxu0 0.0
      %6718 = vmatpush.msra.mxu0 0.0
      %6719 = vmatpush.msra.mxu0 0.0
      %6720 = vmatpush.msra.mxu0 0.0
      %6721 = vmatpush.msra.mxu0 0.0
      %6722 = vmatpush.msra.mxu0 0.0
      %6723 = vmatpush.msra.mxu0 0.0
      %6724 = vmatpush.msra.mxu0 0.0
      %6725 = vmatpush.msra.mxu0 0.0
      %6726 = vmatpush.msra.mxu0 0.0
      %6727 = vmatpush.msra.mxu0 0.0
      %6728 = vmatpush.msra.mxu0 0.0
      %6729 = vmatpush.msra.mxu0 %v6712
      %6730 = vmatmul.f32.gmra.mxu0 %v6708
      %v6731 = vpop.f32.mrf.mxu0
      %v6732 = vadd.f32 0.0, %v6731
      %6733 = vdwg.mxu0
      %v6734 = vxor.u32 %v6732, 2147483648
      %v6735 = vmul.f32 %v6734, 1.442695
      %v6736 = vpow.pop %v6735
      %v6737 = vadd.f32 %v6736, 1.0
      %v6738 = vrcp.pop %v6737
      %v6739 = vmul.f32 %v6737, %v6738
      %v6740 = vsub.f32 1.0, %v6739
      %v6741 = vmul.f32 %v6738, %v6740
      %v6742 = vadd.f32 %v6738, %v6741
      %vm6743 = vweird.f32 %v6737
      %vm6744 = vweird.f32 %v6738
      %vm6745 = vmor %vm6743, %vm6744
      %v6746 = vsel %vm6745, %v6738, %v6742
      %v6747 = vand.u32 2147483647, %v6737
      %vm6748 = vcmp.eq.f32.partialorder %v6747, 8.507059e+37
      %v6749 = vand.u32 %v6737, 2147483648
      %v6750 = vor.u32 1.1754944e-38, %v6749
      %v6751 = vsel %vm6748, %v6750, %v6746
      %v6752 = vmul.f32 1.0, %v6751
      %v6753 = vld [vmem:[%s374] sm:$0xff]
      %v6754 = vld [vmem:[%s374 + $0x8] sm:$0xff]
      %v6755 = vld [vmem:[%s374 + $0x10] sm:$0xff]
      %v6756 = vld [vmem:[%s374 + $0x18] sm:$0xff]
      %v6757 = vld [vmem:[%s374 + $0x20] sm:$0xff]
      %v6758 = vld [vmem:[%s374 + $0x28] sm:$0xff]
      %v6759 = vld [vmem:[%s374 + $0x30] sm:$0xff]
      %v6760 = vld [vmem:[%s374 + $0x38] sm:$0xff]
      %v6761 = vld [vmem:[%s374 + $0x40] sm:$0xff]
      %v6762 = vld [vmem:[%s374 + $0x48] sm:$0xff]
      %v6763 = vld [vmem:[%s374 + $0x50] sm:$0xff]
      %v6764 = vld [vmem:[%s374 + $0x58] sm:$0xff]
      %v6765 = vld [vmem:[%s374 + $0x60] sm:$0xff]
      %v6766 = vld [vmem:[%s374 + $0x68] sm:$0xff]
      %v6767 = vld [vmem:[%s374 + $0x70] sm:$0xff]
      %v6768 = vld [vmem:[%s374 + $0x78] sm:$0xff]
      %v6769 = vld [vmem:[%s374 + $0x80] sm:$0xff]
      %v6770 = vld [vmem:[%s374 + $0x88] sm:$0xff]
      %v6771 = vld [vmem:[%s374 + $0x90] sm:$0xff]
      %v6772 = vld [vmem:[%s374 + $0x98] sm:$0xff]
      %v6773 = vld [vmem:[%s374 + $0xa0] sm:$0xff]
      %v6774 = vld [vmem:[%s374 + $0xa8] sm:$0xff]
      %v6775 = vld [vmem:[%s374 + $0xb0] sm:$0xff]
      %v6776 = vld [vmem:[%s374 + $0xb8] sm:$0xff]
      %v6777 = vld [vmem:[%s374 + $0xc0] sm:$0xff]
      %v6778 = vld [vmem:[%s374 + $0xc8] sm:$0xff]
      %v6779 = vld [vmem:[%s374 + $0xd0] sm:$0xff]
      %v6780 = vld [vmem:[%s374 + $0xd8] sm:$0xff]
      %v6781 = vld [vmem:[%s374 + $0xe0] sm:$0xff]
      %v6782 = vld [vmem:[%s374 + $0xe8] sm:$0xff]
      %v6783 = vld [vmem:[%s374 + $0xf0] sm:$0xff]
      %v6784 = vld [vmem:[%s374 + $0xf8] sm:$0xff]
      %v6785 = vperm.slane %v6752, 0
      %v6786 = vmul.f32 %v6577, %v6785
      %v6787 = vmul.f32 %v6578, %v6785
      %v6788 = vmul.f32 %v6579, %v6785
      %v6789 = vmul.f32 %v6580, %v6785
      %v6790 = vmul.f32 %v6581, %v6785
      %v6791 = vmul.f32 %v6582, %v6785
      %v6792 = vmul.f32 %v6583, %v6785
      %v6793 = vmul.f32 %v6584, %v6785
      %v6794 = vmul.f32 %v6585, %v6785
      %v6795 = vmul.f32 %v6586, %v6785
      %v6796 = vmul.f32 %v6587, %v6785
      %v6797 = vmul.f32 %v6588, %v6785
      %v6798 = vmul.f32 %v6589, %v6785
      %v6799 = vmul.f32 %v6590, %v6785
      %v6800 = vmul.f32 %v6591, %v6785
      %v6801 = vmul.f32 %v6592, %v6785
      %v6802 = vmul.f32 %v6593, %v6785
      %v6803 = vmul.f32 %v6594, %v6785
      %v6804 = vmul.f32 %v6595, %v6785
      %v6805 = vmul.f32 %v6596, %v6785
      %v6806 = vmul.f32 %v6597, %v6785
      %v6807 = vmul.f32 %v6598, %v6785
      %v6808 = vmul.f32 %v6599, %v6785
      %v6809 = vmul.f32 %v6600, %v6785
      %v6810 = vmul.f32 %v6601, %v6785
      %v6811 = vmul.f32 %v6602, %v6785
      %v6812 = vmul.f32 %v6603, %v6785
      %v6813 = vmul.f32 %v6604, %v6785
      %v6814 = vmul.f32 %v6605, %v6785
      %v6815 = vmul.f32 %v6606, %v6785
      %v6816 = vmul.f32 %v6607, %v6785
      %v6817 = vmul.f32 %v6608, %v6785
      %v6818 = vadd.f32 %v6753, %v6786
      %v6819 = vadd.f32 %v6754, %v6787
      %v6820 = vadd.f32 %v6755, %v6788
      %v6821 = vadd.f32 %v6756, %v6789
      %v6822 = vadd.f32 %v6757, %v6790
      %v6823 = vadd.f32 %v6758, %v6791
      %v6824 = vadd.f32 %v6759, %v6792
      %v6825 = vadd.f32 %v6760, %v6793
      %v6826 = vadd.f32 %v6761, %v6794
      %v6827 = vadd.f32 %v6762, %v6795
      %v6828 = vadd.f32 %v6763, %v6796
      %v6829 = vadd.f32 %v6764, %v6797
      %v6830 = vadd.f32 %v6765, %v6798
      %v6831 = vadd.f32 %v6766, %v6799
      %v6832 = vadd.f32 %v6767, %v6800
      %v6833 = vadd.f32 %v6768, %v6801
      %v6834 = vadd.f32 %v6769, %v6802
      %v6835 = vadd.f32 %v6770, %v6803
      %v6836 = vadd.f32 %v6771, %v6804
      %v6837 = vadd.f32 %v6772, %v6805
      %v6838 = vadd.f32 %v6773, %v6806
      %v6839 = vadd.f32 %v6774, %v6807
      %v6840 = vadd.f32 %v6775, %v6808
      %v6841 = vadd.f32 %v6776, %v6809
      %v6842 = vadd.f32 %v6777, %v6810
      %v6843 = vadd.f32 %v6778, %v6811
      %v6844 = vadd.f32 %v6779, %v6812
      %v6845 = vadd.f32 %v6780, %v6813
      %v6846 = vadd.f32 %v6781, %v6814
      %v6847 = vadd.f32 %v6782, %v6815
      %v6848 = vadd.f32 %v6783, %v6816
      %v6849 = vadd.f32 %v6784, %v6817
      %v6850 = vpack.c.bf16 %v6819, %v6818
      %v6851 = vpack.c.bf16 %v6821, %v6820
      %v6852 = vpack.c.bf16 %v6823, %v6822
      %v6853 = vpack.c.bf16 %v6825, %v6824
      %v6854 = vpack.c.bf16 %v6827, %v6826
      %v6855 = vpack.c.bf16 %v6829, %v6828
      %v6856 = vpack.c.bf16 %v6831, %v6830
      %v6857 = vpack.c.bf16 %v6833, %v6832
      %v6858 = vpack.c.bf16 %v6835, %v6834
      %v6859 = vpack.c.bf16 %v6837, %v6836
      %v6860 = vpack.c.bf16 %v6839, %v6838
      %v6861 = vpack.c.bf16 %v6841, %v6840
      %v6862 = vpack.c.bf16 %v6843, %v6842
      %v6863 = vpack.c.bf16 %v6845, %v6844
      %v6864 = vpack.c.bf16 %v6847, %v6846
      %v6865 = vpack.c.bf16 %v6849, %v6848
      %v6866 = vld [vmem:[%s8] sm:$0xf]
      %v6867 = vld [vmem:[%s8 + $0x4] sm:$0xf]
      %v6868 = vld [vmem:[%s9] sm:$0x1]
      %v6870 = vperm.slane %v6868, 0
      %v6874 = vunpack.c.l.b16 %v6866
      %v6875 = vunpack.c.l.b16 %v6867
      %v6876 = vpack.c.b16 %v6875, %v6874
      %v6879 = vsel %vm1439, %v6850, 0
      %v6882 = vsel %vm1439, %v6851, 0
      %v6885 = vsel %vm1439, %v6852, 0
      %v6888 = vsel %vm1439, %v6853, 0
      %v6891 = vsel %vm1439, %v6854, 0
      %v6894 = vsel %vm1439, %v6855, 0
      %v6897 = vsel %vm1439, %v6856, 0
      %v6900 = vsel %vm1439, %v6857, 0
      %v6903 = vsel %vm1439, %v6858, 0
      %v6906 = vsel %vm1439, %v6859, 0
      %v6909 = vsel %vm1439, %v6860, 0
      %v6912 = vsel %vm1439, %v6861, 0
      %v6915 = vsel %vm1439, %v6862, 0
      %v6918 = vsel %vm1439, %v6863, 0
      %v6921 = vsel %vm1439, %v6864, 0
      %v6924 = vsel %vm1439, %v6865, 0
      %6926 = vmatpush.bf16.msra.mxu0 0
      %6927 = vmatpush.bf16.msra.mxu0 0
      %6928 = vmatpush.bf16.msra.mxu0 0
      %6929 = vmatpush.bf16.msra.mxu0 0
      %6930 = vmatpush.bf16.msra.mxu0 0
      %6931 = vmatpush.bf16.msra.mxu0 0
      %6932 = vmatpush.bf16.msra.mxu0 0
      %6933 = vmatpush.bf16.msra.mxu0 %v6876
      %6934 = vmatmul.bf16.gmra.mxu0 %v6879
      %v6935 = vpop.f32.mrf.mxu0
      %v6936 = vadd.f32 %v6870, %v6935
      %v6937 = vpop.f32.mrf.mxu0
      %v6938 = vadd.f32 %v6870, %v6937
      %6939 = vmatmul.bf16.gmra.mxu0 %v6882
      %v6940 = vpop.f32.mrf.mxu0
      %v6941 = vadd.f32 %v6870, %v6940
      %v6942 = vpop.f32.mrf.mxu0
      %v6943 = vadd.f32 %v6870, %v6942
      %6944 = vmatmul.bf16.gmra.mxu0 %v6885
      %v6945 = vpop.f32.mrf.mxu0
      %v6946 = vadd.f32 %v6870, %v6945
      %v6947 = vpop.f32.mrf.mxu0
      %v6948 = vadd.f32 %v6870, %v6947
      %6949 = vmatmul.bf16.gmra.mxu0 %v6888
      %v6950 = vpop.f32.mrf.mxu0
      %v6951 = vadd.f32 %v6870, %v6950
      %v6952 = vpop.f32.mrf.mxu0
      %v6953 = vadd.f32 %v6870, %v6952
      %6954 = vmatmul.bf16.gmra.mxu0 %v6891
      %v6955 = vpop.f32.mrf.mxu0
      %v6956 = vadd.f32 %v6870, %v6955
      %v6957 = vpop.f32.mrf.mxu0
      %v6958 = vadd.f32 %v6870, %v6957
      %6959 = vmatmul.bf16.gmra.mxu0 %v6894
      %v6960 = vpop.f32.mrf.mxu0
      %v6961 = vadd.f32 %v6870, %v6960
      %v6962 = vpop.f32.mrf.mxu0
      %v6963 = vadd.f32 %v6870, %v6962
      %6964 = vmatmul.bf16.gmra.mxu0 %v6897
      %v6965 = vpop.f32.mrf.mxu0
      %v6966 = vadd.f32 %v6870, %v6965
      %v6967 = vpop.f32.mrf.mxu0
      %v6968 = vadd.f32 %v6870, %v6967
      %6969 = vmatmul.bf16.gmra.mxu0 %v6900
      %v6970 = vpop.f32.mrf.mxu0
      %v6971 = vadd.f32 %v6870, %v6970
      %v6972 = vpop.f32.mrf.mxu0
      %v6973 = vadd.f32 %v6870, %v6972
      %6974 = vmatmul.bf16.gmra.mxu0 %v6903
      %v6975 = vpop.f32.mrf.mxu0
      %v6976 = vadd.f32 %v6870, %v6975
      %v6977 = vpop.f32.mrf.mxu0
      %v6978 = vadd.f32 %v6870, %v6977
      %6979 = vmatmul.bf16.gmra.mxu0 %v6906
      %v6980 = vpop.f32.mrf.mxu0
      %v6981 = vadd.f32 %v6870, %v6980
      %v6982 = vpop.f32.mrf.mxu0
      %v6983 = vadd.f32 %v6870, %v6982
      %6984 = vmatmul.bf16.gmra.mxu0 %v6909
      %v6985 = vpop.f32.mrf.mxu0
      %v6986 = vadd.f32 %v6870, %v6985
      %v6987 = vpop.f32.mrf.mxu0
      %v6988 = vadd.f32 %v6870, %v6987
      %6989 = vmatmul.bf16.gmra.mxu0 %v6912
      %v6990 = vpop.f32.mrf.mxu0
      %v6991 = vadd.f32 %v6870, %v6990
      %v6992 = vpop.f32.mrf.mxu0
      %v6993 = vadd.f32 %v6870, %v6992
      %6994 = vmatmul.bf16.gmra.mxu0 %v6915
      %v6995 = vpop.f32.mrf.mxu0
      %v6996 = vadd.f32 %v6870, %v6995
      %v6997 = vpop.f32.mrf.mxu0
      %v6998 = vadd.f32 %v6870, %v6997
      %6999 = vmatmul.bf16.gmra.mxu0 %v6918
      %v7000 = vpop.f32.mrf.mxu0
      %v7001 = vadd.f32 %v6870, %v7000
      %v7002 = vpop.f32.mrf.mxu0
      %v7003 = vadd.f32 %v6870, %v7002
      %7004 = vmatmul.bf16.gmra.mxu0 %v6921
      %v7005 = vpop.f32.mrf.mxu0
      %v7006 = vadd.f32 %v6870, %v7005
      %v7007 = vpop.f32.mrf.mxu0
      %v7008 = vadd.f32 %v6870, %v7007
      %7009 = vmatmul.bf16.gmra.mxu0 %v6924
      %v7010 = vpop.f32.mrf.mxu0
      %v7011 = vadd.f32 %v6870, %v7010
      %v7012 = vpop.f32.mrf.mxu0
      %v7013 = vadd.f32 %v6870, %v7012
      %7014 = vdwg.mxu0
      %7015 = vst [vmem:[%s379] sm:$0xff] %v6936
      %7016 = vst [vmem:[%s379 + $0x8] sm:$0xff] %v6938
      %7017 = vst [vmem:[%s379 + $0x10] sm:$0xff] %v6941
      %7018 = vst [vmem:[%s379 + $0x18] sm:$0xff] %v6943
      %7019 = vst [vmem:[%s379 + $0x20] sm:$0xff] %v6946
      %7020 = vst [vmem:[%s379 + $0x28] sm:$0xff] %v6948
      %7021 = vst [vmem:[%s379 + $0x30] sm:$0xff] %v6951
      %7022 = vst [vmem:[%s379 + $0x38] sm:$0xff] %v6953
      %7023 = vst [vmem:[%s379 + $0x40] sm:$0xff] %v6956
      %7024 = vst [vmem:[%s379 + $0x48] sm:$0xff] %v6958
      %7025 = vst [vmem:[%s379 + $0x50] sm:$0xff] %v6961
      %7026 = vst [vmem:[%s379 + $0x58] sm:$0xff] %v6963
      %7027 = vst [vmem:[%s379 + $0x60] sm:$0xff] %v6966
      %7028 = vst [vmem:[%s379 + $0x68] sm:$0xff] %v6968
      %7029 = vst [vmem:[%s379 + $0x70] sm:$0xff] %v6971
      %7030 = vst [vmem:[%s379 + $0x78] sm:$0xff] %v6973
      %7031 = vst [vmem:[%s379 + $0x80] sm:$0xff] %v6976
      %7032 = vst [vmem:[%s379 + $0x88] sm:$0xff] %v6978
      %7033 = vst [vmem:[%s379 + $0x90] sm:$0xff] %v6981
      %7034 = vst [vmem:[%s379 + $0x98] sm:$0xff] %v6983
      %7035 = vst [vmem:[%s379 + $0xa0] sm:$0xff] %v6986
      %7036 = vst [vmem:[%s379 + $0xa8] sm:$0xff] %v6988
      %7037 = vst [vmem:[%s379 + $0xb0] sm:$0xff] %v6991
      %7038 = vst [vmem:[%s379 + $0xb8] sm:$0xff] %v6993
      %7039 = vst [vmem:[%s379 + $0xc0] sm:$0xff] %v6996
      %7040 = vst [vmem:[%s379 + $0xc8] sm:$0xff] %v6998
      %7041 = vst [vmem:[%s379 + $0xd0] sm:$0xff] %v7001
      %7042 = vst [vmem:[%s379 + $0xd8] sm:$0xff] %v7003
      %7043 = vst [vmem:[%s379 + $0xe0] sm:$0xff] %v7006
      %7044 = vst [vmem:[%s379 + $0xe8] sm:$0xff] %v7008
      %7045 = vst [vmem:[%s379 + $0xf0] sm:$0xff] %v7011
      %7046 = vst [vmem:[%s379 + $0xf8] sm:$0xff] %v7013
      %p7047 = scmp.lt.s32.totalorder %s21, 1
      %s7048 = scalar_select %p7047, %s21, 1
      %s7049 = smul.addr %s7048, 32
      %s7050 = smul.addr %s7049, 8
      %s7051 = scalar_lea.vmem %s10, %s7050
      // Predicated region
      $region61: #{decoder_forward.1} parent=59 // pred_check
        %p7052 = pneg %p259
      $region62: #{decoder_forward.1} parent=59 // pred_check_branch
        %7054 = sbr.rel (%p7052) target = $region64
      $region63: #{decoder_forward.1} parent=59 // pred_region
        _
      $region64: #{decoder_forward.1} parent=59 // pred_fallthru
        _
    $region60: #{decoder_forward.1} parent=5 // pred_fallthru
      _
    %p7055 = scmp.le.s32.totalorder 2, %s16
    // Predicated region
    $region65: #{decoder_forward.1} parent=5 // pred_check
      %p7056 = pneg %p7055
    $region66: #{decoder_forward.1} parent=5 // pred_check_branch
      %7058 = sbr.rel (%p7056) target = $region68
    $region67: #{decoder_forward.1} parent=5 // pred_region
      %s7059 = ssub.s32 %s16, 2
      // Predicated region
      $region69: #{decoder_forward.1} parent=67 // pred_check
        %p7060 = pneg %p265
      $region70: #{decoder_forward.1} parent=67 // pred_check_branch
        %7062 = sbr.rel (%p7060) target = $region72
      $region71: #{decoder_forward.1} parent=67 // pred_region
        %p7063 = scmp.lt.s32.totalorder %s22, 1
        %s7064 = scalar_select %p7063, %s22, 1
        %s7065 = smul.addr %s7064, 32
        %s7066 = smul.addr %s7065, 8
        %s7067 = scalar_lea.vmem %s10, %s7066
      $region72: #{decoder_forward.1} parent=67 // pred_fallthru
        _
    $region68: #{decoder_forward.1} parent=5 // pred_fallthru
      _
  $region6: #{decoder_forward.1} parent=0 // loop_footer
    %s20 = sadd.s32 1, %s16
  $region7: #{decoder_forward.1} parent=0 // loop_footer_branch
    %15 = sbr.rel target = $region3
  $region8: #{decoder_forward.1} parent=0 // loop_exit
    _

</llo_original>
